<compile_context>
chip_gen: v7x
topology: tpu7x:2x2x1
jax: 0.10.0
libtpu: 0.0.40
codegen_flags: <defaults>
</compile_context>

<pallas_src>
import math

import jax
import jax.numpy as jnp
from jax.experimental import pallas as pl
from jax.experimental.pallas import tpu as pltpu

# ------------------------- config -------------------------
B, S = 2, 8
HD = 32          # hidden size
NH = 4           # attention heads
DH = HD // NH    # head dim
INTER = 64       # FFN intermediate size
NLAYER = 2
VOCAB = 100
MAX_POS = 40
PAD_ID = 1       # roberta padding_idx
LN_EPS = 1e-5
ATTN_SCALE = 1.0 / math.sqrt(DH)


# ------------------------- in-kernel helpers -------------------------
def _gelu_tanh(x):
    # TODO(synk): HF RoBERTa uses exact erf-GELU; tanh approximation is used here
    # since erf has no clean Mosaic lowering guarantee.
    c = math.sqrt(2.0 / math.pi)
    return 0.5 * x * (1.0 + jnp.tanh(c * (x + 0.044715 * x * x * x)))


def _layernorm(x, g, b):
    mu = jnp.mean(x, axis=-1, keepdims=True)
    var = jnp.mean((x - mu) ** 2, axis=-1, keepdims=True)
    return (x - mu) * jax.lax.rsqrt(var + LN_EPS) * g + b


# ------------------------- fused trunk kernel -------------------------
def _trunk_kernel(emb_ref, mask_ref, emb_g_ref, emb_b_ref,
                  wqkv_ref, bqkv_ref, wo_ref, bo_ref,
                  ln1_g_ref, ln1_b_ref,
                  wi_ref, bi_ref, wo2_ref, bo2_ref,
                  ln2_g_ref, ln2_b_ref,
                  cls_w_ref, cls_b_ref, y_ref,
                  logit_ref, loss_ref,
                  h_ref):
    layer = pl.program_id(0)

    # ---- prologue: embedding LayerNorm into the VMEM-resident hidden state ----
    @pl.when(layer == 0)
    def _():
        h_ref[...] = _layernorm(emb_ref[...], emb_g_ref[...], emb_b_ref[...])

    x = h_ref[...]                                                   # (B*S, HD)

    # ---- fused QKV projection: one MXU op, lane-dense 3*HD output ----
    qkv = (jnp.dot(x, wqkv_ref[...], preferred_element_type=jnp.float32)
           + bqkv_ref[...])                                          # (B*S, 3*HD)

    # ---- self-attention: heads sliced statically from the lane-dense slab ----
    ctx_rows = []
    for b in range(B):
        rows = slice(b * S, (b + 1) * S)
        q_b = qkv[rows, 0 * HD:1 * HD]                               # (S, HD)
        k_b = qkv[rows, 1 * HD:2 * HD]
        v_b = qkv[rows, 2 * HD:3 * HD]
        m_b = mask_ref[b:b + 1, :]                                   # (1, S) additive key mask
        heads = []
        for h in range(NH):
            cols = slice(h * DH, (h + 1) * DH)
            q_bh = q_b[:, cols]                                      # (S, DH)
            k_bh = k_b[:, cols]
            v_bh = v_b[:, cols]
            s = jax.lax.dot_general(q_bh, k_bh, (((1,), (1,)), ((), ())),
                                    preferred_element_type=jnp.float32) * ATTN_SCALE
            s = s + m_b                                              # broadcast over query rows
            s = s - jnp.max(s, axis=-1, keepdims=True)
            p = jnp.exp(s)
            p = p / jnp.sum(p, axis=-1, keepdims=True)
            heads.append(jnp.dot(p, v_bh, preferred_element_type=jnp.float32))
        ctx_rows.append(jnp.concatenate(heads, axis=1))              # (S, HD)
    ctx = jnp.concatenate(ctx_rows, axis=0)                          # (B*S, HD)

    # ---- attention output projection + residual + LN1 ----
    attn_out = (jnp.dot(ctx, wo_ref[...], preferred_element_type=jnp.float32)
                + bo_ref[...])
    h1 = _layernorm(attn_out + x, ln1_g_ref[...], ln1_b_ref[...])

    # ---- FFN (GELU) + residual + LN2 ----
    inter = _gelu_tanh(jnp.dot(h1, wi_ref[...], preferred_element_type=jnp.float32)
                       + bi_ref[...])
    ffn = (jnp.dot(inter, wo2_ref[...], preferred_element_type=jnp.float32)
           + bo2_ref[...])
    h2 = _layernorm(ffn + h1, ln2_g_ref[...], ln2_b_ref[...])
    h_ref[...] = h2

    # ---- epilogue: classifier head + BCEWithLogits (mean) on the last layer ----
    @pl.when(layer == pl.num_programs(0) - 1)
    def _():
        cls_h = jnp.concatenate([h2[b * S:b * S + 1, :] for b in range(B)],
                                axis=0)                              # (B, HD) == h[:, 0, :]
        z = (jnp.dot(cls_h, cls_w_ref[...], preferred_element_type=jnp.float32)
             + cls_b_ref[...])                                       # (B, 1)
        y = y_ref[...]
        # BCEWithLogits: max(z,0) - z*y + log(1 + exp(-|z|)), mean-reduced.
        per = jnp.maximum(z, 0.0) - z * y + jnp.log(1.0 + jnp.exp(-jnp.abs(z)))
        logit_ref[...] = z
        loss_ref[...] = jnp.mean(per, keepdims=True)


def _trunk_call(emb, ext_mask, params, labels2):
    const = lambda l: (0, 0)          # noqa: E731  (inputs not indexed by layer)
    per_layer3 = lambda l: (l, 0, 0)  # noqa: E731  (stacked per-layer weights)

    return pl.pallas_call(
        _trunk_kernel,
        out_shape=(jax.ShapeDtypeStruct((B, 1), jnp.float32),
                   jax.ShapeDtypeStruct((1, 1), jnp.float32)),
        grid_spec=pltpu.PrefetchScalarGridSpec(
            num_scalar_prefetch=0,
            grid=(NLAYER,),
            in_specs=[
                pl.BlockSpec((B * S, HD), const),                 # emb (post word+pos+type)
                pl.BlockSpec((B, S), const),                      # additive attention mask
                pl.BlockSpec((1, HD), const),                     # emb LN gamma
                pl.BlockSpec((1, HD), const),                     # emb LN beta
                pl.BlockSpec((None, HD, 3 * HD), per_layer3),     # wqkv
                pl.BlockSpec((None, 1, 3 * HD), per_layer3),      # bqkv
                pl.BlockSpec((None, HD, HD), per_layer3),         # wo
                pl.BlockSpec((None, 1, HD), per_layer3),          # bo
                pl.BlockSpec((None, 1, HD), per_layer3),          # ln1 gamma
                pl.BlockSpec((None, 1, HD), per_layer3),          # ln1 beta
                pl.BlockSpec((None, HD, INTER), per_layer3),      # wi
                pl.BlockSpec((None, 1, INTER), per_layer3),       # bi
                pl.BlockSpec((None, INTER, HD), per_layer3),      # wo2
                pl.BlockSpec((None, 1, HD), per_layer3),          # bo2
                pl.BlockSpec((None, 1, HD), per_layer3),          # ln2 gamma
                pl.BlockSpec((None, 1, HD), per_layer3),          # ln2 beta
                pl.BlockSpec((HD, 1), const),                     # classifier weight.T
                pl.BlockSpec((1, 1), const),                      # classifier bias
                pl.BlockSpec((B, 1), const),                      # labels
            ],
            out_specs=(pl.BlockSpec((B, 1), const),               # logits
                       pl.BlockSpec((1, 1), const)),              # loss
            scratch_shapes=[pltpu.VMEM((B * S, HD), jnp.float32)],  # resident hidden state
        ),
        compiler_params=pltpu.CompilerParams(
            dimension_semantics=("arbitrary",)),                  # layers are sequential
    )(emb, ext_mask, params["emb_ln_g"], params["emb_ln_b"],
      params["wqkv"], params["bqkv"], params["wo"], params["bo"],
      params["ln1_g"], params["ln1_b"],
      params["wi"], params["bi"], params["wo2"], params["bo2"],
      params["ln2_g"], params["ln2_b"],
      params["cls_w"], params["cls_b"], labels2)


# ------------------------- forward (plain-JAX glue: embedding gather only) -------------------------
def lmcls_forward(params, input_ids, attention_mask, labels):
    # RoBERTa embeddings (eval mode -> dropout is identity).  Gather stays in JAX.
    not_pad = (input_ids != PAD_ID).astype(jnp.int32)
    position_ids = jnp.cumsum(not_pad, axis=1) * not_pad + PAD_ID
    emb = (params["word_emb"][input_ids]
           + params["pos_emb"][position_ids]
           + params["type_emb"][0]).reshape(B * S, HD).astype(jnp.float32)

    # HF extended attention mask: (1 - mask) * finfo.min, broadcast over heads/queries.
    ext_mask = ((1.0 - attention_mask.astype(jnp.float32))
                * jnp.finfo(jnp.float32).min)                     # (B, S)

    labels2 = labels.astype(jnp.float32).reshape(B, 1)

    logits, loss = _trunk_call(emb, ext_mask, params, labels2)
    return dict(loss=loss[0, 0], logits=logits[:, 0])


# ------------------------- params -------------------------
def init_params(key):
    keys = iter(jax.random.split(key, 16))

    def nrm(shape):
        return 0.02 * jax.random.normal(next(keys), shape, dtype=jnp.float32)

    return {
        "word_emb": nrm((VOCAB, HD)),
        "pos_emb": nrm((MAX_POS, HD)),
        "type_emb": nrm((1, HD)),
        "emb_ln_g": jnp.ones((1, HD), jnp.float32),
        "emb_ln_b": jnp.zeros((1, HD), jnp.float32),
        # per-layer weights stacked on a leading NLAYER axis (torch Linear weight.T layout)
        "wqkv": nrm((NLAYER, HD, 3 * HD)),
        "bqkv": jnp.zeros((NLAYER, 1, 3 * HD), jnp.float32),
        "wo": nrm((NLAYER, HD, HD)),
        "bo": jnp.zeros((NLAYER, 1, HD), jnp.float32),
        "ln1_g": jnp.ones((NLAYER, 1, HD), jnp.float32),
        "ln1_b": jnp.zeros((NLAYER, 1, HD), jnp.float32),
        "wi": nrm((NLAYER, HD, INTER)),
        "bi": jnp.zeros((NLAYER, 1, INTER), jnp.float32),
        "wo2": nrm((NLAYER, INTER, HD)),
        "bo2": jnp.zeros((NLAYER, 1, HD), jnp.float32),
        "ln2_g": jnp.ones((NLAYER, 1, HD), jnp.float32),
        "ln2_b": jnp.zeros((NLAYER, 1, HD), jnp.float32),
        "cls_w": nrm((HD, 1)),
        "cls_b": jnp.zeros((1, 1), jnp.float32),
    }


if __name__ == "__main__":
    key = jax.random.PRNGKey(0)
    pkey, ikey = jax.random.split(key)
    params = init_params(pkey)

    input_ids = jax.random.randint(ikey, (B, S), 2, VOCAB, dtype=jnp.int32)
    attention_mask = jnp.ones((B, S), dtype=jnp.int32)
    # pad the last two tokens of the second example
    input_ids = input_ids.at[1, -2:].set(PAD_ID)
    attention_mask = attention_mask.at[1, -2:].set(0)
    labels = jnp.array([1.0, 0.0], dtype=jnp.float32)

    out = jax.jit(lmcls_forward)(params, input_ids, attention_mask, labels)
    out = jax.block_until_ready(out)
    assert out["logits"].shape == (B,) and out["loss"].shape == ()
    print("KERNEL_OK")
</pallas_src>

<mosaic_0001>
module attributes {stable_mosaic.version = 11 : i64} {
  func.func @_trunk_kernel(%arg0: i32, %arg1: memref<16x32xf32, #tpu.memory_space<vmem>>, %arg2: memref<2x8xf32, #tpu.memory_space<vmem>>, %arg3: memref<1x32xf32, #tpu.memory_space<vmem>>, %arg4: memref<1x32xf32, #tpu.memory_space<vmem>>, %arg5: memref<1x32x96xf32, #tpu.memory_space<vmem>>, %arg6: memref<1x1x96xf32, #tpu.memory_space<vmem>>, %arg7: memref<1x32x32xf32, #tpu.memory_space<vmem>>, %arg8: memref<1x1x32xf32, #tpu.memory_space<vmem>>, %arg9: memref<1x1x32xf32, #tpu.memory_space<vmem>>, %arg10: memref<1x1x32xf32, #tpu.memory_space<vmem>>, %arg11: memref<1x32x64xf32, #tpu.memory_space<vmem>>, %arg12: memref<1x1x64xf32, #tpu.memory_space<vmem>>, %arg13: memref<1x64x32xf32, #tpu.memory_space<vmem>>, %arg14: memref<1x1x32xf32, #tpu.memory_space<vmem>>, %arg15: memref<1x1x32xf32, #tpu.memory_space<vmem>>, %arg16: memref<1x1x32xf32, #tpu.memory_space<vmem>>, %arg17: memref<32x1xf32, #tpu.memory_space<vmem>>, %arg18: memref<1x1xf32, #tpu.memory_space<vmem>>, %arg19: memref<2x1xf32, #tpu.memory_space<vmem>>, %arg20: memref<2x1xf32, #tpu.memory_space<vmem>>, %arg21: memref<1x1xf32, #tpu.memory_space<vmem>>, %arg22: memref<16x32xf32, #tpu.memory_space<vmem>>) attributes {dimension_semantics = [#tpu.dimension_semantics<arbitrary>], iteration_bounds = array<i64: 2>, scalar_prefetch = 0 : i64, scratch_operands = 1 : i64, tpu.core_type = #tpu.core_type<tc>, window_params = [{pipeline_mode = #tpu.pipeline_mode<synchronous>, transform_indices = @transform_0, window_bounds = array<i64: 16, 32>}, {pipeline_mode = #tpu.pipeline_mode<synchronous>, transform_indices = @transform_1, window_bounds = array<i64: 2, 8>}, {pipeline_mode = #tpu.pipeline_mode<synchronous>, transform_indices = @transform_2, window_bounds = array<i64: 1, 32>}, {pipeline_mode = #tpu.pipeline_mode<synchronous>, transform_indices = @transform_3, window_bounds = array<i64: 1, 32>}, {transform_indices = @transform_4, window_bounds = array<i64: 1, 32, 96>}, {transform_indices = @transform_5, window_bounds = array<i64: 1, 1, 96>}, {transform_indices = @transform_6, window_bounds = array<i64: 1, 32, 32>}, {transform_indices = @transform_7, window_bounds = array<i64: 1, 1, 32>}, {transform_indices = @transform_8, window_bounds = array<i64: 1, 1, 32>}, {transform_indices = @transform_9, window_bounds = array<i64: 1, 1, 32>}, {transform_indices = @transform_10, window_bounds = array<i64: 1, 32, 64>}, {transform_indices = @transform_11, window_bounds = array<i64: 1, 1, 64>}, {transform_indices = @transform_12, window_bounds = array<i64: 1, 64, 32>}, {transform_indices = @transform_13, window_bounds = array<i64: 1, 1, 32>}, {transform_indices = @transform_14, window_bounds = array<i64: 1, 1, 32>}, {transform_indices = @transform_15, window_bounds = array<i64: 1, 1, 32>}, {pipeline_mode = #tpu.pipeline_mode<synchronous>, transform_indices = @transform_16, window_bounds = array<i64: 32, 1>}, {pipeline_mode = #tpu.pipeline_mode<synchronous>, transform_indices = @transform_17, window_bounds = array<i64: 1, 1>}, {pipeline_mode = #tpu.pipeline_mode<synchronous>, transform_indices = @transform_18, window_bounds = array<i64: 2, 1>}, {pipeline_mode = #tpu.pipeline_mode<synchronous>, transform_indices = @transform_19, window_bounds = array<i64: 2, 1>}, {pipeline_mode = #tpu.pipeline_mode<synchronous>, transform_indices = @transform_20, window_bounds = array<i64: 1, 1>}]} {
    %c0_i32 = arith.constant 0 : i32
    %0 = arith.cmpi eq, %arg0, %c0_i32 : i32
    %1 = arith.extui %0 : i1 to i32
    %c0_i32_0 = arith.constant 0 : i32
    %2 = arith.cmpi ne, %1, %c0_i32_0 : i32
    scf.if %2 {
      %c0_101 = arith.constant 0 : index
      %c0_102 = arith.constant 0 : index
      %258 = vector.load %arg1[%c0_101, %c0_102] : memref<16x32xf32, #tpu.memory_space<vmem>>, vector<16x32xf32>
      %c0_103 = arith.constant 0 : index
      %c0_104 = arith.constant 0 : index
      %259 = vector.load %arg3[%c0_103, %c0_104] : memref<1x32xf32, #tpu.memory_space<vmem>>, vector<1x32xf32>
      %c0_105 = arith.constant 0 : index
      %c0_106 = arith.constant 0 : index
      %260 = vector.load %arg4[%c0_105, %c0_106] : memref<1x32xf32, #tpu.memory_space<vmem>>, vector<1x32xf32>
      %cst_107 = arith.constant dense<0.000000e+00> : vector<16xf32>
      %261 = vector.multi_reduction <add>, %258, %cst_107 [1] : vector<16x32xf32> to vector<16xf32>
      %262 = vector.shape_cast %261 : vector<16xf32> to vector<16x1xf32>
      %cst_108 = arith.constant 3.200000e+01 : f32
      %263 = vector.broadcast %cst_108 : f32 to vector<16x1xf32>
      %264 = arith.divf %262, %263 : vector<16x1xf32>
      %265 = vector.broadcast %264 : vector<16x1xf32> to vector<16x32xf32>
      %266 = arith.subf %258, %265 : vector<16x32xf32>
      %267 = arith.mulf %266, %266 : vector<16x32xf32>
      %cst_109 = arith.constant dense<0.000000e+00> : vector<16xf32>
      %268 = vector.multi_reduction <add>, %267, %cst_109 [1] : vector<16x32xf32> to vector<16xf32>
      %269 = vector.shape_cast %268 : vector<16xf32> to vector<16x1xf32>
      %cst_110 = arith.constant 3.200000e+01 : f32
      %270 = vector.broadcast %cst_110 : f32 to vector<16x1xf32>
      %271 = arith.divf %269, %270 : vector<16x1xf32>
      %272 = vector.broadcast %264 : vector<16x1xf32> to vector<16x32xf32>
      %273 = arith.subf %258, %272 : vector<16x32xf32>
      %cst_111 = arith.constant 9.99999974E-6 : f32
      %274 = vector.broadcast %cst_111 : f32 to vector<16x1xf32>
      %275 = arith.addf %271, %274 : vector<16x1xf32>
      %276 = math.rsqrt %275 : vector<16x1xf32>
      %277 = vector.broadcast %276 : vector<16x1xf32> to vector<16x32xf32>
      %278 = arith.mulf %273, %277 : vector<16x32xf32>
      %279 = vector.broadcast %259 : vector<1x32xf32> to vector<16x32xf32>
      %280 = arith.mulf %278, %279 : vector<16x32xf32>
      %281 = vector.broadcast %260 : vector<1x32xf32> to vector<16x32xf32>
      %282 = arith.addf %280, %281 : vector<16x32xf32>
      %c0_112 = arith.constant 0 : index
      %c0_113 = arith.constant 0 : index
      %283 = vector.load %arg22[%c0_112, %c0_113] : memref<16x32xf32, #tpu.memory_space<vmem>>, vector<16x32xf32>
      tpu.vector_store %arg22[%c0_112, %c0_113], %282 {strides = array<i32>} : memref<16x32xf32, #tpu.memory_space<vmem>>, vector<16x32xf32>,
    } else {
    }
    %c0 = arith.constant 0 : index
    %c0_1 = arith.constant 0 : index
    %3 = vector.load %arg22[%c0, %c0_1] : memref<16x32xf32, #tpu.memory_space<vmem>>, vector<16x32xf32>
    %c0_2 = arith.constant 0 : index
    %c0_3 = arith.constant 0 : index
    %c0_4 = arith.constant 0 : index
    %4 = vector.load %arg5[%c0_2, %c0_3, %c0_4] : memref<1x32x96xf32, #tpu.memory_space<vmem>>, vector<1x32x96xf32>
    %5 = vector.shape_cast %4 : vector<1x32x96xf32> to vector<32x96xf32>
    %cst = arith.constant dense<0.000000e+00> : vector<16x96xf32>
    %6 = tpu.matmul %3, %5, %cst {dimension_numbers = #tpu.dot_dimension_numbers<[1], [0], [0], [1], [0, 0, 1, 1], [], []>} : vector<16x32xf32>, vector<32x96xf32>, vector<16x96xf32> -> vector<16x96xf32>
    %c0_5 = arith.constant 0 : index
    %c0_6 = arith.constant 0 : index
    %c0_7 = arith.constant 0 : index
    %7 = vector.load %arg6[%c0_5, %c0_6, %c0_7] : memref<1x1x96xf32, #tpu.memory_space<vmem>>, vector<1x1x96xf32>
    %8 = vector.shape_cast %7 : vector<1x1x96xf32> to vector<1x96xf32>
    %9 = vector.broadcast %8 : vector<1x96xf32> to vector<16x96xf32>
    %10 = arith.addf %6, %9 : vector<16x96xf32>
    %11 = vector.extract_strided_slice %10 {offsets = [0, 0], sizes = [8, 32], strides = [1, 1]} : vector<16x96xf32> to vector<8x32xf32>
    %12 = vector.extract_strided_slice %10 {offsets = [0, 32], sizes = [8, 32], strides = [1, 1]} : vector<16x96xf32> to vector<8x32xf32>
    %13 = vector.extract_strided_slice %10 {offsets = [0, 64], sizes = [8, 32], strides = [1, 1]} : vector<16x96xf32> to vector<8x32xf32>
    %c0_8 = arith.constant 0 : index
    %c0_9 = arith.constant 0 : index
    %14 = vector.load %arg2[%c0_8, %c0_9] : memref<2x8xf32, #tpu.memory_space<vmem>>, vector<1x8xf32>
    %15 = vector.extract_strided_slice %11 {offsets = [0, 0], sizes = [8, 8], strides = [1, 1]} : vector<8x32xf32> to vector<8x8xf32>
    %16 = vector.extract_strided_slice %12 {offsets = [0, 0], sizes = [8, 8], strides = [1, 1]} : vector<8x32xf32> to vector<8x8xf32>
    %17 = vector.extract_strided_slice %13 {offsets = [0, 0], sizes = [8, 8], strides = [1, 1]} : vector<8x32xf32> to vector<8x8xf32>
    %cst_10 = arith.constant dense<0.000000e+00> : vector<8x8xf32>
    %18 = tpu.matmul %15, %16, %cst_10 {dimension_numbers = #tpu.dot_dimension_numbers<[1], [1], [0], [0], [0, 0, 1, 0], [], []>} : vector<8x8xf32>, vector<8x8xf32>, vector<8x8xf32> -> vector<8x8xf32>
    %cst_11 = arith.constant 0.353553385 : f32
    %19 = vector.broadcast %cst_11 : f32 to vector<8x8xf32>
    %20 = arith.mulf %18, %19 : vector<8x8xf32>
    %21 = vector.broadcast %14 : vector<1x8xf32> to vector<8x8xf32>
    %22 = arith.addf %20, %21 : vector<8x8xf32>
    %cst_12 = arith.constant dense<0xFF800000> : vector<8xf32>
    %23 = vector.multi_reduction <maximumf>, %22, %cst_12 [1] : vector<8x8xf32> to vector<8xf32>
    %24 = vector.shape_cast %23 : vector<8xf32> to vector<8x1xf32>
    %25 = vector.broadcast %24 : vector<8x1xf32> to vector<8x8xf32>
    %26 = arith.subf %22, %25 : vector<8x8xf32>
    %27 = math.exp %26 : vector<8x8xf32>
    %cst_13 = arith.constant dense<0.000000e+00> : vector<8xf32>
    %28 = vector.multi_reduction <add>, %27, %cst_13 [1] : vector<8x8xf32> to vector<8xf32>
    %29 = vector.shape_cast %28 : vector<8xf32> to vector<8x1xf32>
    %30 = vector.broadcast %29 : vector<8x1xf32> to vector<8x8xf32>
    %31 = arith.divf %27, %30 : vector<8x8xf32>
    %cst_14 = arith.constant dense<0.000000e+00> : vector<8x8xf32>
    %32 = tpu.matmul %31, %17, %cst_14 {dimension_numbers = #tpu.dot_dimension_numbers<[1], [0], [0], [1], [0, 0, 1, 1], [], []>} : vector<8x8xf32>, vector<8x8xf32>, vector<8x8xf32> -> vector<8x8xf32>
    %33 = vector.extract_strided_slice %11 {offsets = [0, 8], sizes = [8, 8], strides = [1, 1]} : vector<8x32xf32> to vector<8x8xf32>
    %34 = vector.extract_strided_slice %12 {offsets = [0, 8], sizes = [8, 8], strides = [1, 1]} : vector<8x32xf32> to vector<8x8xf32>
    %35 = vector.extract_strided_slice %13 {offsets = [0, 8], sizes = [8, 8], strides = [1, 1]} : vector<8x32xf32> to vector<8x8xf32>
    %cst_15 = arith.constant dense<0.000000e+00> : vector<8x8xf32>
    %36 = tpu.matmul %33, %34, %cst_15 {dimension_numbers = #tpu.dot_dimension_numbers<[1], [1], [0], [0], [0, 0, 1, 0], [], []>} : vector<8x8xf32>, vector<8x8xf32>, vector<8x8xf32> -> vector<8x8xf32>
    %cst_16 = arith.constant 0.353553385 : f32
    %37 = vector.broadcast %cst_16 : f32 to vector<8x8xf32>
    %38 = arith.mulf %36, %37 : vector<8x8xf32>
    %39 = vector.broadcast %14 : vector<1x8xf32> to vector<8x8xf32>
    %40 = arith.addf %38, %39 : vector<8x8xf32>
    %cst_17 = arith.constant dense<0xFF800000> : vector<8xf32>
    %41 = vector.multi_reduction <maximumf>, %40, %cst_17 [1] : vector<8x8xf32> to vector<8xf32>
    %42 = vector.shape_cast %41 : vector<8xf32> to vector<8x1xf32>
    %43 = vector.broadcast %42 : vector<8x1xf32> to vector<8x8xf32>
    %44 = arith.subf %40, %43 : vector<8x8xf32>
    %45 = math.exp %44 : vector<8x8xf32>
    %cst_18 = arith.constant dense<0.000000e+00> : vector<8xf32>
    %46 = vector.multi_reduction <add>, %45, %cst_18 [1] : vector<8x8xf32> to vector<8xf32>
    %47 = vector.shape_cast %46 : vector<8xf32> to vector<8x1xf32>
    %48 = vector.broadcast %47 : vector<8x1xf32> to vector<8x8xf32>
    %49 = arith.divf %45, %48 : vector<8x8xf32>
    %cst_19 = arith.constant dense<0.000000e+00> : vector<8x8xf32>
    %50 = tpu.matmul %49, %35, %cst_19 {dimension_numbers = #tpu.dot_dimension_numbers<[1], [0], [0], [1], [0, 0, 1, 1], [], []>} : vector<8x8xf32>, vector<8x8xf32>, vector<8x8xf32> -> vector<8x8xf32>
    %51 = vector.extract_strided_slice %11 {offsets = [0, 16], sizes = [8, 8], strides = [1, 1]} : vector<8x32xf32> to vector<8x8xf32>
    %52 = vector.extract_strided_slice %12 {offsets = [0, 16], sizes = [8, 8], strides = [1, 1]} : vector<8x32xf32> to vector<8x8xf32>
    %53 = vector.extract_strided_slice %13 {offsets = [0, 16], sizes = [8, 8], strides = [1, 1]} : vector<8x32xf32> to vector<8x8xf32>
    %cst_20 = arith.constant dense<0.000000e+00> : vector<8x8xf32>
    %54 = tpu.matmul %51, %52, %cst_20 {dimension_numbers = #tpu.dot_dimension_numbers<[1], [1], [0], [0], [0, 0, 1, 0], [], []>} : vector<8x8xf32>, vector<8x8xf32>, vector<8x8xf32> -> vector<8x8xf32>
    %cst_21 = arith.constant 0.353553385 : f32
    %55 = vector.broadcast %cst_21 : f32 to vector<8x8xf32>
    %56 = arith.mulf %54, %55 : vector<8x8xf32>
    %57 = vector.broadcast %14 : vector<1x8xf32> to vector<8x8xf32>
    %58 = arith.addf %56, %57 : vector<8x8xf32>
    %cst_22 = arith.constant dense<0xFF800000> : vector<8xf32>
    %59 = vector.multi_reduction <maximumf>, %58, %cst_22 [1] : vector<8x8xf32> to vector<8xf32>
    %60 = vector.shape_cast %59 : vector<8xf32> to vector<8x1xf32>
    %61 = vector.broadcast %60 : vector<8x1xf32> to vector<8x8xf32>
    %62 = arith.subf %58, %61 : vector<8x8xf32>
    %63 = math.exp %62 : vector<8x8xf32>
    %cst_23 = arith.constant dense<0.000000e+00> : vector<8xf32>
    %64 = vector.multi_reduction <add>, %63, %cst_23 [1] : vector<8x8xf32> to vector<8xf32>
    %65 = vector.shape_cast %64 : vector<8xf32> to vector<8x1xf32>
    %66 = vector.broadcast %65 : vector<8x1xf32> to vector<8x8xf32>
    %67 = arith.divf %63, %66 : vector<8x8xf32>
    %cst_24 = arith.constant dense<0.000000e+00> : vector<8x8xf32>
    %68 = tpu.matmul %67, %53, %cst_24 {dimension_numbers = #tpu.dot_dimension_numbers<[1], [0], [0], [1], [0, 0, 1, 1], [], []>} : vector<8x8xf32>, vector<8x8xf32>, vector<8x8xf32> -> vector<8x8xf32>
    %69 = vector.extract_strided_slice %11 {offsets = [0, 24], sizes = [8, 8], strides = [1, 1]} : vector<8x32xf32> to vector<8x8xf32>
    %70 = vector.extract_strided_slice %12 {offsets = [0, 24], sizes = [8, 8], strides = [1, 1]} : vector<8x32xf32> to vector<8x8xf32>
    %71 = vector.extract_strided_slice %13 {offsets = [0, 24], sizes = [8, 8], strides = [1, 1]} : vector<8x32xf32> to vector<8x8xf32>
    %cst_25 = arith.constant dense<0.000000e+00> : vector<8x8xf32>
    %72 = tpu.matmul %69, %70, %cst_25 {dimension_numbers = #tpu.dot_dimension_numbers<[1], [1], [0], [0], [0, 0, 1, 0], [], []>} : vector<8x8xf32>, vector<8x8xf32>, vector<8x8xf32> -> vector<8x8xf32>
    %cst_26 = arith.constant 0.353553385 : f32
    %73 = vector.broadcast %cst_26 : f32 to vector<8x8xf32>
    %74 = arith.mulf %72, %73 : vector<8x8xf32>
    %75 = vector.broadcast %14 : vector<1x8xf32> to vector<8x8xf32>
    %76 = arith.addf %74, %75 : vector<8x8xf32>
    %cst_27 = arith.constant dense<0xFF800000> : vector<8xf32>
    %77 = vector.multi_reduction <maximumf>, %76, %cst_27 [1] : vector<8x8xf32> to vector<8xf32>
    %78 = vector.shape_cast %77 : vector<8xf32> to vector<8x1xf32>
    %79 = vector.broadcast %78 : vector<8x1xf32> to vector<8x8xf32>
    %80 = arith.subf %76, %79 : vector<8x8xf32>
    %81 = math.exp %80 : vector<8x8xf32>
    %cst_28 = arith.constant dense<0.000000e+00> : vector<8xf32>
    %82 = vector.multi_reduction <add>, %81, %cst_28 [1] : vector<8x8xf32> to vector<8xf32>
    %83 = vector.shape_cast %82 : vector<8xf32> to vector<8x1xf32>
    %84 = vector.broadcast %83 : vector<8x1xf32> to vector<8x8xf32>
    %85 = arith.divf %81, %84 : vector<8x8xf32>
    %cst_29 = arith.constant dense<0.000000e+00> : vector<8x8xf32>
    %86 = tpu.matmul %85, %71, %cst_29 {dimension_numbers = #tpu.dot_dimension_numbers<[1], [0], [0], [1], [0, 0, 1, 1], [], []>} : vector<8x8xf32>, vector<8x8xf32>, vector<8x8xf32> -> vector<8x8xf32>
    %87 = tpu.concatenate %32, %50, %68, %86 in 1 : vector<8x8xf32>, vector<8x8xf32>, vector<8x8xf32>, vector<8x8xf32> -> vector<8x32xf32>
    %88 = vector.extract_strided_slice %10 {offsets = [8, 0], sizes = [8, 32], strides = [1, 1]} : vector<16x96xf32> to vector<8x32xf32>
    %89 = vector.extract_strided_slice %10 {offsets = [8, 32], sizes = [8, 32], strides = [1, 1]} : vector<16x96xf32> to vector<8x32xf32>
    %90 = vector.extract_strided_slice %10 {offsets = [8, 64], sizes = [8, 32], strides = [1, 1]} : vector<16x96xf32> to vector<8x32xf32>
    %c1 = arith.constant 1 : index
    %c0_30 = arith.constant 0 : index
    %91 = vector.load %arg2[%c1, %c0_30] : memref<2x8xf32, #tpu.memory_space<vmem>>, vector<1x8xf32>
    %92 = vector.extract_strided_slice %88 {offsets = [0, 0], sizes = [8, 8], strides = [1, 1]} : vector<8x32xf32> to vector<8x8xf32>
    %93 = vector.extract_strided_slice %89 {offsets = [0, 0], sizes = [8, 8], strides = [1, 1]} : vector<8x32xf32> to vector<8x8xf32>
    %94 = vector.extract_strided_slice %90 {offsets = [0, 0], sizes = [8, 8], strides = [1, 1]} : vector<8x32xf32> to vector<8x8xf32>
    %cst_31 = arith.constant dense<0.000000e+00> : vector<8x8xf32>
    %95 = tpu.matmul %92, %93, %cst_31 {dimension_numbers = #tpu.dot_dimension_numbers<[1], [1], [0], [0], [0, 0, 1, 0], [], []>} : vector<8x8xf32>, vector<8x8xf32>, vector<8x8xf32> -> vector<8x8xf32>
    %cst_32 = arith.constant 0.353553385 : f32
    %96 = vector.broadcast %cst_32 : f32 to vector<8x8xf32>
    %97 = arith.mulf %95, %96 : vector<8x8xf32>
    %98 = vector.broadcast %91 : vector<1x8xf32> to vector<8x8xf32>
    %99 = arith.addf %97, %98 : vector<8x8xf32>
    %cst_33 = arith.constant dense<0xFF800000> : vector<8xf32>
    %100 = vector.multi_reduction <maximumf>, %99, %cst_33 [1] : vector<8x8xf32> to vector<8xf32>
    %101 = vector.shape_cast %100 : vector<8xf32> to vector<8x1xf32>
    %102 = vector.broadcast %101 : vector<8x1xf32> to vector<8x8xf32>
    %103 = arith.subf %99, %102 : vector<8x8xf32>
    %104 = math.exp %103 : vector<8x8xf32>
    %cst_34 = arith.constant dense<0.000000e+00> : vector<8xf32>
    %105 = vector.multi_reduction <add>, %104, %cst_34 [1] : vector<8x8xf32> to vector<8xf32>
    %106 = vector.shape_cast %105 : vector<8xf32> to vector<8x1xf32>
    %107 = vector.broadcast %106 : vector<8x1xf32> to vector<8x8xf32>
    %108 = arith.divf %104, %107 : vector<8x8xf32>
    %cst_35 = arith.constant dense<0.000000e+00> : vector<8x8xf32>
    %109 = tpu.matmul %108, %94, %cst_35 {dimension_numbers = #tpu.dot_dimension_numbers<[1], [0], [0], [1], [0, 0, 1, 1], [], []>} : vector<8x8xf32>, vector<8x8xf32>, vector<8x8xf32> -> vector<8x8xf32>
    %110 = vector.extract_strided_slice %88 {offsets = [0, 8], sizes = [8, 8], strides = [1, 1]} : vector<8x32xf32> to vector<8x8xf32>
    %111 = vector.extract_strided_slice %89 {offsets = [0, 8], sizes = [8, 8], strides = [1, 1]} : vector<8x32xf32> to vector<8x8xf32>
    %112 = vector.extract_strided_slice %90 {offsets = [0, 8], sizes = [8, 8], strides = [1, 1]} : vector<8x32xf32> to vector<8x8xf32>
    %cst_36 = arith.constant dense<0.000000e+00> : vector<8x8xf32>
    %113 = tpu.matmul %110, %111, %cst_36 {dimension_numbers = #tpu.dot_dimension_numbers<[1], [1], [0], [0], [0, 0, 1, 0], [], []>} : vector<8x8xf32>, vector<8x8xf32>, vector<8x8xf32> -> vector<8x8xf32>
    %cst_37 = arith.constant 0.353553385 : f32
    %114 = vector.broadcast %cst_37 : f32 to vector<8x8xf32>
    %115 = arith.mulf %113, %114 : vector<8x8xf32>
    %116 = vector.broadcast %91 : vector<1x8xf32> to vector<8x8xf32>
    %117 = arith.addf %115, %116 : vector<8x8xf32>
    %cst_38 = arith.constant dense<0xFF800000> : vector<8xf32>
    %118 = vector.multi_reduction <maximumf>, %117, %cst_38 [1] : vector<8x8xf32> to vector<8xf32>
    %119 = vector.shape_cast %118 : vector<8xf32> to vector<8x1xf32>
    %120 = vector.broadcast %119 : vector<8x1xf32> to vector<8x8xf32>
    %121 = arith.subf %117, %120 : vector<8x8xf32>
    %122 = math.exp %121 : vector<8x8xf32>
    %cst_39 = arith.constant dense<0.000000e+00> : vector<8xf32>
    %123 = vector.multi_reduction <add>, %122, %cst_39 [1] : vector<8x8xf32> to vector<8xf32>
    %124 = vector.shape_cast %123 : vector<8xf32> to vector<8x1xf32>
    %125 = vector.broadcast %124 : vector<8x1xf32> to vector<8x8xf32>
    %126 = arith.divf %122, %125 : vector<8x8xf32>
    %cst_40 = arith.constant dense<0.000000e+00> : vector<8x8xf32>
    %127 = tpu.matmul %126, %112, %cst_40 {dimension_numbers = #tpu.dot_dimension_numbers<[1], [0], [0], [1], [0, 0, 1, 1], [], []>} : vector<8x8xf32>, vector<8x8xf32>, vector<8x8xf32> -> vector<8x8xf32>
    %128 = vector.extract_strided_slice %88 {offsets = [0, 16], sizes = [8, 8], strides = [1, 1]} : vector<8x32xf32> to vector<8x8xf32>
    %129 = vector.extract_strided_slice %89 {offsets = [0, 16], sizes = [8, 8], strides = [1, 1]} : vector<8x32xf32> to vector<8x8xf32>
    %130 = vector.extract_strided_slice %90 {offsets = [0, 16], sizes = [8, 8], strides = [1, 1]} : vector<8x32xf32> to vector<8x8xf32>
    %cst_41 = arith.constant dense<0.000000e+00> : vector<8x8xf32>
    %131 = tpu.matmul %128, %129, %cst_41 {dimension_numbers = #tpu.dot_dimension_numbers<[1], [1], [0], [0], [0, 0, 1, 0], [], []>} : vector<8x8xf32>, vector<8x8xf32>, vector<8x8xf32> -> vector<8x8xf32>
    %cst_42 = arith.constant 0.353553385 : f32
    %132 = vector.broadcast %cst_42 : f32 to vector<8x8xf32>
    %133 = arith.mulf %131, %132 : vector<8x8xf32>
    %134 = vector.broadcast %91 : vector<1x8xf32> to vector<8x8xf32>
    %135 = arith.addf %133, %134 : vector<8x8xf32>
    %cst_43 = arith.constant dense<0xFF800000> : vector<8xf32>
    %136 = vector.multi_reduction <maximumf>, %135, %cst_43 [1] : vector<8x8xf32> to vector<8xf32>
    %137 = vector.shape_cast %136 : vector<8xf32> to vector<8x1xf32>
    %138 = vector.broadcast %137 : vector<8x1xf32> to vector<8x8xf32>
    %139 = arith.subf %135, %138 : vector<8x8xf32>
    %140 = math.exp %139 : vector<8x8xf32>
    %cst_44 = arith.constant dense<0.000000e+00> : vector<8xf32>
    %141 = vector.multi_reduction <add>, %140, %cst_44 [1] : vector<8x8xf32> to vector<8xf32>
    %142 = vector.shape_cast %141 : vector<8xf32> to vector<8x1xf32>
    %143 = vector.broadcast %142 : vector<8x1xf32> to vector<8x8xf32>
    %144 = arith.divf %140, %143 : vector<8x8xf32>
    %cst_45 = arith.constant dense<0.000000e+00> : vector<8x8xf32>
    %145 = tpu.matmul %144, %130, %cst_45 {dimension_numbers = #tpu.dot_dimension_numbers<[1], [0], [0], [1], [0, 0, 1, 1], [], []>} : vector<8x8xf32>, vector<8x8xf32>, vector<8x8xf32> -> vector<8x8xf32>
    %146 = vector.extract_strided_slice %88 {offsets = [0, 24], sizes = [8, 8], strides = [1, 1]} : vector<8x32xf32> to vector<8x8xf32>
    %147 = vector.extract_strided_slice %89 {offsets = [0, 24], sizes = [8, 8], strides = [1, 1]} : vector<8x32xf32> to vector<8x8xf32>
    %148 = vector.extract_strided_slice %90 {offsets = [0, 24], sizes = [8, 8], strides = [1, 1]} : vector<8x32xf32> to vector<8x8xf32>
    %cst_46 = arith.constant dense<0.000000e+00> : vector<8x8xf32>
    %149 = tpu.matmul %146, %147, %cst_46 {dimension_numbers = #tpu.dot_dimension_numbers<[1], [1], [0], [0], [0, 0, 1, 0], [], []>} : vector<8x8xf32>, vector<8x8xf32>, vector<8x8xf32> -> vector<8x8xf32>
    %cst_47 = arith.constant 0.353553385 : f32
    %150 = vector.broadcast %cst_47 : f32 to vector<8x8xf32>
    %151 = arith.mulf %149, %150 : vector<8x8xf32>
    %152 = vector.broadcast %91 : vector<1x8xf32> to vector<8x8xf32>
    %153 = arith.addf %151, %152 : vector<8x8xf32>
    %cst_48 = arith.constant dense<0xFF800000> : vector<8xf32>
    %154 = vector.multi_reduction <maximumf>, %153, %cst_48 [1] : vector<8x8xf32> to vector<8xf32>
    %155 = vector.shape_cast %154 : vector<8xf32> to vector<8x1xf32>
    %156 = vector.broadcast %155 : vector<8x1xf32> to vector<8x8xf32>
    %157 = arith.subf %153, %156 : vector<8x8xf32>
    %158 = math.exp %157 : vector<8x8xf32>
    %cst_49 = arith.constant dense<0.000000e+00> : vector<8xf32>
    %159 = vector.multi_reduction <add>, %158, %cst_49 [1] : vector<8x8xf32> to vector<8xf32>
    %160 = vector.shape_cast %159 : vector<8xf32> to vector<8x1xf32>
    %161 = vector.broadcast %160 : vector<8x1xf32> to vector<8x8xf32>
    %162 = arith.divf %158, %161 : vector<8x8xf32>
    %cst_50 = arith.constant dense<0.000000e+00> : vector<8x8xf32>
    %163 = tpu.matmul %162, %148, %cst_50 {dimension_numbers = #tpu.dot_dimension_numbers<[1], [0], [0], [1], [0, 0, 1, 1], [], []>} : vector<8x8xf32>, vector<8x8xf32>, vector<8x8xf32> -> vector<8x8xf32>
    %164 = tpu.concatenate %109, %127, %145, %163 in 1 : vector<8x8xf32>, vector<8x8xf32>, vector<8x8xf32>, vector<8x8xf32> -> vector<8x32xf32>
    %165 = tpu.concatenate %87, %164 in 0 : vector<8x32xf32>, vector<8x32xf32> -> vector<16x32xf32>
    %c0_51 = arith.constant 0 : index
    %c0_52 = arith.constant 0 : index
    %c0_53 = arith.constant 0 : index
    %166 = vector.load %arg7[%c0_51, %c0_52, %c0_53] : memref<1x32x32xf32, #tpu.memory_space<vmem>>, vector<1x32x32xf32>
    %167 = vector.shape_cast %166 : vector<1x32x32xf32> to vector<32x32xf32>
    %cst_54 = arith.constant dense<0.000000e+00> : vector<16x32xf32>
    %168 = tpu.matmul %165, %167, %cst_54 {dimension_numbers = #tpu.dot_dimension_numbers<[1], [0], [0], [1], [0, 0, 1, 1], [], []>} : vector<16x32xf32>, vector<32x32xf32>, vector<16x32xf32> -> vector<16x32xf32>
    %c0_55 = arith.constant 0 : index
    %c0_56 = arith.constant 0 : index
    %c0_57 = arith.constant 0 : index
    %169 = vector.load %arg8[%c0_55, %c0_56, %c0_57] : memref<1x1x32xf32, #tpu.memory_space<vmem>>, vector<1x1x32xf32>
    %170 = vector.shape_cast %169 : vector<1x1x32xf32> to vector<1x32xf32>
    %171 = vector.broadcast %170 : vector<1x32xf32> to vector<16x32xf32>
    %172 = arith.addf %168, %171 : vector<16x32xf32>
    %173 = arith.addf %172, %3 : vector<16x32xf32>
    %c0_58 = arith.constant 0 : index
    %c0_59 = arith.constant 0 : index
    %c0_60 = arith.constant 0 : index
    %174 = vector.load %arg9[%c0_58, %c0_59, %c0_60] : memref<1x1x32xf32, #tpu.memory_space<vmem>>, vector<1x1x32xf32>
    %175 = vector.shape_cast %174 : vector<1x1x32xf32> to vector<1x32xf32>
    %c0_61 = arith.constant 0 : index
    %c0_62 = arith.constant 0 : index
    %c0_63 = arith.constant 0 : index
    %176 = vector.load %arg10[%c0_61, %c0_62, %c0_63] : memref<1x1x32xf32, #tpu.memory_space<vmem>>, vector<1x1x32xf32>
    %177 = vector.shape_cast %176 : vector<1x1x32xf32> to vector<1x32xf32>
    %cst_64 = arith.constant dense<0.000000e+00> : vector<16xf32>
    %178 = vector.multi_reduction <add>, %173, %cst_64 [1] : vector<16x32xf32> to vector<16xf32>
    %179 = vector.shape_cast %178 : vector<16xf32> to vector<16x1xf32>
    %cst_65 = arith.constant 3.200000e+01 : f32
    %180 = vector.broadcast %cst_65 : f32 to vector<16x1xf32>
    %181 = arith.divf %179, %180 : vector<16x1xf32>
    %182 = vector.broadcast %181 : vector<16x1xf32> to vector<16x32xf32>
    %183 = arith.subf %173, %182 : vector<16x32xf32>
    %184 = arith.mulf %183, %183 : vector<16x32xf32>
    %cst_66 = arith.constant dense<0.000000e+00> : vector<16xf32>
    %185 = vector.multi_reduction <add>, %184, %cst_66 [1] : vector<16x32xf32> to vector<16xf32>
    %186 = vector.shape_cast %185 : vector<16xf32> to vector<16x1xf32>
    %cst_67 = arith.constant 3.200000e+01 : f32
    %187 = vector.broadcast %cst_67 : f32 to vector<16x1xf32>
    %188 = arith.divf %186, %187 : vector<16x1xf32>
    %189 = vector.broadcast %181 : vector<16x1xf32> to vector<16x32xf32>
    %190 = arith.subf %173, %189 : vector<16x32xf32>
    %cst_68 = arith.constant 9.99999974E-6 : f32
    %191 = vector.broadcast %cst_68 : f32 to vector<16x1xf32>
    %192 = arith.addf %188, %191 : vector<16x1xf32>
    %193 = math.rsqrt %192 : vector<16x1xf32>
    %194 = vector.broadcast %193 : vector<16x1xf32> to vector<16x32xf32>
    %195 = arith.mulf %190, %194 : vector<16x32xf32>
    %196 = vector.broadcast %175 : vector<1x32xf32> to vector<16x32xf32>
    %197 = arith.mulf %195, %196 : vector<16x32xf32>
    %198 = vector.broadcast %177 : vector<1x32xf32> to vector<16x32xf32>
    %199 = arith.addf %197, %198 : vector<16x32xf32>
    %c0_69 = arith.constant 0 : index
    %c0_70 = arith.constant 0 : index
    %c0_71 = arith.constant 0 : index
    %200 = vector.load %arg11[%c0_69, %c0_70, %c0_71] : memref<1x32x64xf32, #tpu.memory_space<vmem>>, vector<1x32x64xf32>
    %201 = vector.shape_cast %200 : vector<1x32x64xf32> to vector<32x64xf32>
    %cst_72 = arith.constant dense<0.000000e+00> : vector<16x64xf32>
    %202 = tpu.matmul %199, %201, %cst_72 {dimension_numbers = #tpu.dot_dimension_numbers<[1], [0], [0], [1], [0, 0, 1, 1], [], []>} : vector<16x32xf32>, vector<32x64xf32>, vector<16x64xf32> -> vector<16x64xf32>
    %c0_73 = arith.constant 0 : index
    %c0_74 = arith.constant 0 : index
    %c0_75 = arith.constant 0 : index
    %203 = vector.load %arg12[%c0_73, %c0_74, %c0_75] : memref<1x1x64xf32, #tpu.memory_space<vmem>>, vector<1x1x64xf32>
    %204 = vector.shape_cast %203 : vector<1x1x64xf32> to vector<1x64xf32>
    %205 = vector.broadcast %204 : vector<1x64xf32> to vector<16x64xf32>
    %206 = arith.addf %202, %205 : vector<16x64xf32>
    %cst_76 = arith.constant 5.000000e-01 : f32
    %207 = vector.broadcast %cst_76 : f32 to vector<16x64xf32>
    %208 = arith.mulf %207, %206 : vector<16x64xf32>
    %cst_77 = arith.constant 4.471500e-02 : f32
    %209 = vector.broadcast %cst_77 : f32 to vector<16x64xf32>
    %210 = arith.mulf %209, %206 : vector<16x64xf32>
    %211 = arith.mulf %210, %206 : vector<16x64xf32>
    %212 = arith.mulf %211, %206 : vector<16x64xf32>
    %213 = arith.addf %206, %212 : vector<16x64xf32>
    %cst_78 = arith.constant 0.797884583 : f32
    %214 = vector.broadcast %cst_78 : f32 to vector<16x64xf32>
    %215 = arith.mulf %214, %213 : vector<16x64xf32>
    %216 = math.tanh %215 : vector<16x64xf32>
    %cst_79 = arith.constant 1.000000e+00 : f32
    %217 = vector.broadcast %cst_79 : f32 to vector<16x64xf32>
    %218 = arith.addf %217, %216 : vector<16x64xf32>
    %219 = arith.mulf %208, %218 : vector<16x64xf32>
    %c0_80 = arith.constant 0 : index
    %c0_81 = arith.constant 0 : index
    %c0_82 = arith.constant 0 : index
    %220 = vector.load %arg13[%c0_80, %c0_81, %c0_82] : memref<1x64x32xf32, #tpu.memory_space<vmem>>, vector<1x64x32xf32>
    %221 = vector.shape_cast %220 : vector<1x64x32xf32> to vector<64x32xf32>
    %cst_83 = arith.constant dense<0.000000e+00> : vector<16x32xf32>
    %222 = tpu.matmul %219, %221, %cst_83 {dimension_numbers = #tpu.dot_dimension_numbers<[1], [0], [0], [1], [0, 0, 1, 1], [], []>} : vector<16x64xf32>, vector<64x32xf32>, vector<16x32xf32> -> vector<16x32xf32>
    %c0_84 = arith.constant 0 : index
    %c0_85 = arith.constant 0 : index
    %c0_86 = arith.constant 0 : index
    %223 = vector.load %arg14[%c0_84, %c0_85, %c0_86] : memref<1x1x32xf32, #tpu.memory_space<vmem>>, vector<1x1x32xf32>
    %224 = vector.shape_cast %223 : vector<1x1x32xf32> to vector<1x32xf32>
    %225 = vector.broadcast %224 : vector<1x32xf32> to vector<16x32xf32>
    %226 = arith.addf %222, %225 : vector<16x32xf32>
    %227 = arith.addf %226, %199 : vector<16x32xf32>
    %c0_87 = arith.constant 0 : index
    %c0_88 = arith.constant 0 : index
    %c0_89 = arith.constant 0 : index
    %228 = vector.load %arg15[%c0_87, %c0_88, %c0_89] : memref<1x1x32xf32, #tpu.memory_space<vmem>>, vector<1x1x32xf32>
    %229 = vector.shape_cast %228 : vector<1x1x32xf32> to vector<1x32xf32>
    %c0_90 = arith.constant 0 : index
    %c0_91 = arith.constant 0 : index
    %c0_92 = arith.constant 0 : index
    %230 = vector.load %arg16[%c0_90, %c0_91, %c0_92] : memref<1x1x32xf32, #tpu.memory_space<vmem>>, vector<1x1x32xf32>
    %231 = vector.shape_cast %230 : vector<1x1x32xf32> to vector<1x32xf32>
    %cst_93 = arith.constant dense<0.000000e+00> : vector<16xf32>
    %232 = vector.multi_reduction <add>, %227, %cst_93 [1] : vector<16x32xf32> to vector<16xf32>
    %233 = vector.shape_cast %232 : vector<16xf32> to vector<16x1xf32>
    %cst_94 = arith.constant 3.200000e+01 : f32
    %234 = vector.broadcast %cst_94 : f32 to vector<16x1xf32>
    %235 = arith.divf %233, %234 : vector<16x1xf32>
    %236 = vector.broadcast %235 : vector<16x1xf32> to vector<16x32xf32>
    %237 = arith.subf %227, %236 : vector<16x32xf32>
    %238 = arith.mulf %237, %237 : vector<16x32xf32>
    %cst_95 = arith.constant dense<0.000000e+00> : vector<16xf32>
    %239 = vector.multi_reduction <add>, %238, %cst_95 [1] : vector<16x32xf32> to vector<16xf32>
    %240 = vector.shape_cast %239 : vector<16xf32> to vector<16x1xf32>
    %cst_96 = arith.constant 3.200000e+01 : f32
    %241 = vector.broadcast %cst_96 : f32 to vector<16x1xf32>
    %242 = arith.divf %240, %241 : vector<16x1xf32>
    %243 = vector.broadcast %235 : vector<16x1xf32> to vector<16x32xf32>
    %244 = arith.subf %227, %243 : vector<16x32xf32>
    %cst_97 = arith.constant 9.99999974E-6 : f32
    %245 = vector.broadcast %cst_97 : f32 to vector<16x1xf32>
    %246 = arith.addf %242, %245 : vector<16x1xf32>
    %247 = math.rsqrt %246 : vector<16x1xf32>
    %248 = vector.broadcast %247 : vector<16x1xf32> to vector<16x32xf32>
    %249 = arith.mulf %244, %248 : vector<16x32xf32>
    %250 = vector.broadcast %229 : vector<1x32xf32> to vector<16x32xf32>
    %251 = arith.mulf %249, %250 : vector<16x32xf32>
    %252 = vector.broadcast %231 : vector<1x32xf32> to vector<16x32xf32>
    %253 = arith.addf %251, %252 : vector<16x32xf32>
    %c0_98 = arith.constant 0 : index
    %c0_99 = arith.constant 0 : index
    %254 = vector.load %arg22[%c0_98, %c0_99] : memref<16x32xf32, #tpu.memory_space<vmem>>, vector<16x32xf32>
    tpu.vector_store %arg22[%c0_98, %c0_99], %253 {strides = array<i32>} : memref<16x32xf32, #tpu.memory_space<vmem>>, vector<16x32xf32>,
    %c1_i32 = arith.constant 1 : i32
    %255 = arith.cmpi eq, %arg0, %c1_i32 : i32
    %256 = arith.extui %255 : i1 to i32
    %c0_i32_100 = arith.constant 0 : i32
    %257 = arith.cmpi ne, %256, %c0_i32_100 : i32
    scf.if %257 {
      %258 = vector.extract_strided_slice %253 {offsets = [0, 0], sizes = [1, 32], strides = [1, 1]} : vector<16x32xf32> to vector<1x32xf32>
      %259 = vector.extract_strided_slice %253 {offsets = [8, 0], sizes = [1, 32], strides = [1, 1]} : vector<16x32xf32> to vector<1x32xf32>
      %260 = tpu.concatenate %258, %259 in 0 : vector<1x32xf32>, vector<1x32xf32> -> vector<2x32xf32>
      %c0_101 = arith.constant 0 : index
      %c0_102 = arith.constant 0 : index
      %261 = vector.load %arg17[%c0_101, %c0_102] : memref<32x1xf32, #tpu.memory_space<vmem>>, vector<32x1xf32>
      %cst_103 = arith.constant dense<0.000000e+00> : vector<2x1xf32>
      %262 = tpu.matmul %260, %261, %cst_103 {dimension_numbers = #tpu.dot_dimension_numbers<[1], [0], [0], [1], [0, 0, 1, 1], [], []>} : vector<2x32xf32>, vector<32x1xf32>, vector<2x1xf32> -> vector<2x1xf32>
      %c0_104 = arith.constant 0 : index
      %c0_105 = arith.constant 0 : index
      %263 = vector.load %arg18[%c0_104, %c0_105] : memref<1x1xf32, #tpu.memory_space<vmem>>, vector<1x1xf32>
      %264 = vector.broadcast %263 : vector<1x1xf32> to vector<2x1xf32>
      %265 = arith.addf %262, %264 : vector<2x1xf32>
      %c0_106 = arith.constant 0 : index
      %c0_107 = arith.constant 0 : index
      %266 = vector.load %arg19[%c0_106, %c0_107] : memref<2x1xf32, #tpu.memory_space<vmem>>, vector<2x1xf32>
      %cst_108 = arith.constant 0.000000e+00 : f32
      %267 = vector.broadcast %cst_108 : f32 to vector<2x1xf32>
      %268 = arith.maximumf %265, %267 : vector<2x1xf32>
      %269 = arith.mulf %265, %266 : vector<2x1xf32>
      %270 = arith.subf %268, %269 : vector<2x1xf32>
      %271 = math.absf %265 : vector<2x1xf32>
      %cst_109 = arith.constant 0.000000e+00 : f32
      %272 = vector.broadcast %cst_109 : f32 to vector<2x1xf32>
      %273 = arith.subf %272, %271 : vector<2x1xf32>
      %274 = math.exp %273 : vector<2x1xf32>
      %cst_110 = arith.constant 1.000000e+00 : f32
      %275 = vector.broadcast %cst_110 : f32 to vector<2x1xf32>
      %276 = arith.addf %275, %274 : vector<2x1xf32>
      %277 = math.log %276 : vector<2x1xf32>
      %278 = arith.addf %270, %277 : vector<2x1xf32>
      %c0_111 = arith.constant 0 : index
      %c0_112 = arith.constant 0 : index
      %279 = vector.load %arg20[%c0_111, %c0_112] : memref<2x1xf32, #tpu.memory_space<vmem>>, vector<2x1xf32>
      tpu.vector_store %arg20[%c0_111, %c0_112], %265 {strides = array<i32>} : memref<2x1xf32, #tpu.memory_space<vmem>>, vector<2x1xf32>,
      %280 = vector.shape_cast %278 : vector<2x1xf32> to vector<1x2x1xf32>
      %cst_113 = arith.constant dense<0.000000e+00> : vector<1xf32>
      %281 = vector.multi_reduction <add>, %280, %cst_113 [1, 2] : vector<1x2x1xf32> to vector<1xf32>
      %282 = vector.shape_cast %281 : vector<1xf32> to vector<1x1x1xf32>
      %283 = vector.extract %282[0, 0, 0] : f32 from vector<1x1x1xf32>
      %284 = vector.broadcast %283 : f32 to vector<1x1xf32>
      %cst_114 = arith.constant 2.000000e+00 : f32
      %285 = vector.broadcast %cst_114 : f32 to vector<1x1xf32>
      %286 = arith.divf %284, %285 : vector<1x1xf32>
      %c0_115 = arith.constant 0 : index
      %c0_116 = arith.constant 0 : index
      %287 = vector.load %arg21[%c0_115, %c0_116] : memref<1x1xf32, #tpu.memory_space<vmem>>, vector<1x1xf32>
      tpu.vector_store %arg21[%c0_115, %c0_116], %286 {strides = array<i32>} : memref<1x1xf32, #tpu.memory_space<vmem>>, vector<1x1xf32>,
    } else {
    }
    return
  }
  func.func @transform_0(%arg0: i32) -> (i32, i32) {
    %c0_i32 = arith.constant 0 : i32
    %c0_i32_0 = arith.constant 0 : i32
    %c0_i32_1 = arith.constant 0 : i32
    return %c0_i32, %c0_i32_0 : i32, i32
  }
  func.func @transform_1(%arg0: i32) -> (i32, i32) {
    %c0_i32 = arith.constant 0 : i32
    %c0_i32_0 = arith.constant 0 : i32
    %c0_i32_1 = arith.constant 0 : i32
    return %c0_i32, %c0_i32_0 : i32, i32
  }
  func.func @transform_2(%arg0: i32) -> (i32, i32) {
    %c0_i32 = arith.constant 0 : i32
    %c0_i32_0 = arith.constant 0 : i32
    %c0_i32_1 = arith.constant 0 : i32
    return %c0_i32, %c0_i32_0 : i32, i32
  }
  func.func @transform_3(%arg0: i32) -> (i32, i32) {
    %c0_i32 = arith.constant 0 : i32
    %c0_i32_0 = arith.constant 0 : i32
    %c0_i32_1 = arith.constant 0 : i32
    return %c0_i32, %c0_i32_0 : i32, i32
  }
  func.func @transform_4(%arg0: i32) -> (i32, i32, i32) {
    %c0_i32 = arith.constant 0 : i32
    %c0_i32_0 = arith.constant 0 : i32
    %c0_i32_1 = arith.constant 0 : i32
    return %arg0, %c0_i32, %c0_i32_0 : i32, i32, i32
  }
  func.func @transform_5(%arg0: i32) -> (i32, i32, i32) {
    %c0_i32 = arith.constant 0 : i32
    %c0_i32_0 = arith.constant 0 : i32
    %c0_i32_1 = arith.constant 0 : i32
    return %arg0, %c0_i32, %c0_i32_0 : i32, i32, i32
  }
  func.func @transform_6(%arg0: i32) -> (i32, i32, i32) {
    %c0_i32 = arith.constant 0 : i32
    %c0_i32_0 = arith.constant 0 : i32
    %c0_i32_1 = arith.constant 0 : i32
    return %arg0, %c0_i32, %c0_i32_0 : i32, i32, i32
  }
  func.func @transform_7(%arg0: i32) -> (i32, i32, i32) {
    %c0_i32 = arith.constant 0 : i32
    %c0_i32_0 = arith.constant 0 : i32
    %c0_i32_1 = arith.constant 0 : i32
    return %arg0, %c0_i32, %c0_i32_0 : i32, i32, i32
  }
  func.func @transform_8(%arg0: i32) -> (i32, i32, i32) {
    %c0_i32 = arith.constant 0 : i32
    %c0_i32_0 = arith.constant 0 : i32
    %c0_i32_1 = arith.constant 0 : i32
    return %arg0, %c0_i32, %c0_i32_0 : i32, i32, i32
  }
  func.func @transform_9(%arg0: i32) -> (i32, i32, i32) {
    %c0_i32 = arith.constant 0 : i32
    %c0_i32_0 = arith.constant 0 : i32
    %c0_i32_1 = arith.constant 0 : i32
    return %arg0, %c0_i32, %c0_i32_0 : i32, i32, i32
  }
  func.func @transform_10(%arg0: i32) -> (i32, i32, i32) {
    %c0_i32 = arith.constant 0 : i32
    %c0_i32_0 = arith.constant 0 : i32
    %c0_i32_1 = arith.constant 0 : i32
    return %arg0, %c0_i32, %c0_i32_0 : i32, i32, i32
  }
  func.func @transform_11(%arg0: i32) -> (i32, i32, i32) {
    %c0_i32 = arith.constant 0 : i32
    %c0_i32_0 = arith.constant 0 : i32
    %c0_i32_1 = arith.constant 0 : i32
    return %arg0, %c0_i32, %c0_i32_0 : i32, i32, i32
  }
  func.func @transform_12(%arg0: i32) -> (i32, i32, i32) {
    %c0_i32 = arith.constant 0 : i32
    %c0_i32_0 = arith.constant 0 : i32
    %c0_i32_1 = arith.constant 0 : i32
    return %arg0, %c0_i32, %c0_i32_0 : i32, i32, i32
  }
  func.func @transform_13(%arg0: i32) -> (i32, i32, i32) {
    %c0_i32 = arith.constant 0 : i32
    %c0_i32_0 = arith.constant 0 : i32
    %c0_i32_1 = arith.constant 0 : i32
    return %arg0, %c0_i32, %c0_i32_0 : i32, i32, i32
  }
  func.func @transform_14(%arg0: i32) -> (i32, i32, i32) {
    %c0_i32 = arith.constant 0 : i32
    %c0_i32_0 = arith.constant 0 : i32
    %c0_i32_1 = arith.constant 0 : i32
    return %arg0, %c0_i32, %c0_i32_0 : i32, i32, i32
  }
  func.func @transform_15(%arg0: i32) -> (i32, i32, i32) {
    %c0_i32 = arith.constant 0 : i32
    %c0_i32_0 = arith.constant 0 : i32
    %c0_i32_1 = arith.constant 0 : i32
    return %arg0, %c0_i32, %c0_i32_0 : i32, i32, i32
  }
  func.func @transform_16(%arg0: i32) -> (i32, i32) {
    %c0_i32 = arith.constant 0 : i32
    %c0_i32_0 = arith.constant 0 : i32
    %c0_i32_1 = arith.constant 0 : i32
    return %c0_i32, %c0_i32_0 : i32, i32
  }
  func.func @transform_17(%arg0: i32) -> (i32, i32) {
    %c0_i32 = arith.constant 0 : i32
    %c0_i32_0 = arith.constant 0 : i32
    %c0_i32_1 = arith.constant 0 : i32
    return %c0_i32, %c0_i32_0 : i32, i32
  }
  func.func @transform_18(%arg0: i32) -> (i32, i32) {
    %c0_i32 = arith.constant 0 : i32
    %c0_i32_0 = arith.constant 0 : i32
    %c0_i32_1 = arith.constant 0 : i32
    return %c0_i32, %c0_i32_0 : i32, i32
  }
  func.func @transform_19(%arg0: i32) -> (i32, i32) {
    %c0_i32 = arith.constant 0 : i32
    %c0_i32_0 = arith.constant 0 : i32
    %c0_i32_1 = arith.constant 0 : i32
    return %c0_i32, %c0_i32_0 : i32, i32
  }
  func.func @transform_20(%arg0: i32) -> (i32, i32) {
    %c0_i32 = arith.constant 0 : i32
    %c0_i32_0 = arith.constant 0 : i32
    %c0_i32_1 = arith.constant 0 : i32
    return %c0_i32, %c0_i32_0 : i32, i32
  }
}

</mosaic_0001>

<llo_original>
// kernel: lmcls_forward.1
$region0: #{lmcls_forward.1}
  #allocation0 [shape = 'u32[]', space=smem, size = 0x4, offset = 0x4, fixed_abs, tag = 'smem constant byte address 0x4 - core index']
  #allocation1 [shape = 'u32[144,128]{1,0:T(1,128)}', space=vmem, size = 0x12000, scoped, tag = 'internal scratch']
  #allocation2 [shape = 'f32[16,32]{1,0:T(8,128)}', space=vmem, size = 0x2000, scoped, tag = 'scratch operand']
  #allocation3 [shape = 'f32[1,1]{1,0:T(1,128)S(1)}', space=vmem, size = 0x200, scoped, tag = 'scoped memory for lmcls_forward.1']
  %s0 = inlined_call_operand.vmem [shape: f32[16,32], index: 0, kind: input, shape index: {}]
  %s1 = inlined_call_operand.vmem [shape: f32[2,8], index: 1, kind: input, shape index: {}]
  %s2 = inlined_call_operand.vmem [shape: f32[1,32], index: 2, kind: input, shape index: {}]
  %s3 = inlined_call_operand.vmem [shape: f32[1,32], index: 3, kind: input, shape index: {}]
  %s4 = inlined_call_operand.vmem [shape: f32[2,32,96], index: 4, kind: input, shape index: {}]
  %s5 = inlined_call_operand.vmem [shape: f32[2,1,96], index: 5, kind: input, shape index: {}]
  %s6 = inlined_call_operand.vmem [shape: f32[2,32,32], index: 6, kind: input, shape index: {}]
  %s7 = inlined_call_operand.vmem [shape: f32[2,1,32], index: 7, kind: input, shape index: {}]
  %s8 = inlined_call_operand.vmem [shape: f32[2,1,32], index: 8, kind: input, shape index: {}]
  %s9 = inlined_call_operand.vmem [shape: f32[2,1,32], index: 9, kind: input, shape index: {}]
  %s10 = inlined_call_operand.vmem [shape: f32[2,32,64], index: 10, kind: input, shape index: {}]
  %s11 = inlined_call_operand.vmem [shape: f32[2,1,64], index: 11, kind: input, shape index: {}]
  %s12 = inlined_call_operand.vmem [shape: f32[2,64,32], index: 12, kind: input, shape index: {}]
  %s13 = inlined_call_operand.vmem [shape: f32[2,1,32], index: 13, kind: input, shape index: {}]
  %s14 = inlined_call_operand.vmem [shape: f32[2,1,32], index: 14, kind: input, shape index: {}]
  %s15 = inlined_call_operand.vmem [shape: f32[2,1,32], index: 15, kind: input, shape index: {}]
  %s16 = inlined_call_operand.vmem [shape: f32[32,1], index: 16, kind: input, shape index: {}]
  %s17 = inlined_call_operand.<no memory space> [shape: f32[1,1], index: 17, kind: input, shape index: {}]
  %s18 = inlined_call_operand.vmem [shape: f32[2,1], index: 18, kind: input, shape index: {}]
  %s19 = inlined_call_operand.vmem [shape: f32[2,1], index: 19, kind: output, shape index: {0}]
  %s20 = inlined_call_operand.hbm [shape: f32[1,1], index: 20, kind: output, shape index: {1}]
  %21 = xla_tuple %s19, %s20
  %s22 = sld [smem:[#allocation0]]
  $region125: #{lmcls_forward.1} parent=0
    _
  %s24 = ssub.s32 1, %s22
  %s25 = scalar_select 0, %s24, %s22
  %v26 = vstv %s17
  %27 = vst [vmem:[#allocation3] sm:$0x1] %v26
  $region1: #{lmcls_forward.1} parent=0
    #allocation4 [shape = 'u8[512]{0}', space=vmem, size = 0x400, scoped, tag = 'output window, operand 1, single buffered']
    #allocation5 [shape = 's32[2]{0}', space=sflag, size = 0x8, scoped, tag = 'scoped memory for lmcls_forward.1']
    %28 = vsyncpa [#allocation5], 0
    loop: start=0, step=1, limit=4
    $region2: #{lmcls_forward.1} parent=1 // loop_pre_header
      _
    $region3: #{lmcls_forward.1} parent=1 // loop_header
      %s30 = sphi 0, %s34
      %p31 = scmp.ge.s32.totalorder %s30, 4
      %s38 = sphi 0, %s38
      %s40 = sphi 0, %s38
      %s41 = sphi 0, %s40
      %s55 = sphi 0, %s41
      %s59 = sphi 0, %s59
      %s61 = sphi 0, %s59
      %s62 = sphi 0, %s61
      %s76 = sphi 0, %s62
      %s80 = sphi 0, %s80
      %s82 = sphi 0, %s80
      %s83 = sphi 0, %s82
      %s97 = sphi 0, %s83
      %s101 = sphi 0, %s101
      %s103 = sphi 0, %s101
      %s104 = sphi 0, %s103
      %s118 = sphi 0, %s104
      %s124 = sphi 0, %s126
      %s127 = sphi 0, %s124
      %s128 = sphi 0, %s127
      %s144 = sphi 0, %s128
      %s150 = sphi 0, %s152
      %s153 = sphi 0, %s150
      %s154 = sphi 0, %s153
      %s170 = sphi 0, %s154
      %s176 = sphi 0, %s178
      %s179 = sphi 0, %s176
      %s180 = sphi 0, %s179
      %s196 = sphi 0, %s180
      %s202 = sphi 0, %s204
      %s205 = sphi 0, %s202
      %s206 = sphi 0, %s205
      %s222 = sphi 0, %s206
      %s228 = sphi 0, %s230
      %s231 = sphi 0, %s228
      %s232 = sphi 0, %s231
      %s248 = sphi 0, %s232
      %s254 = sphi 0, %s256
      %s257 = sphi 0, %s254
      %s258 = sphi 0, %s257
      %s274 = sphi 0, %s258
      %s280 = sphi 0, %s282
      %s283 = sphi 0, %s280
      %s284 = sphi 0, %s283
      %s300 = sphi 0, %s284
      %s306 = sphi 0, %s308
      %s309 = sphi 0, %s306
      %s310 = sphi 0, %s309
      %s326 = sphi 0, %s310
      %s332 = sphi 0, %s334
      %s335 = sphi 0, %s332
      %s336 = sphi 0, %s335
      %s352 = sphi 0, %s336
      %s358 = sphi 0, %s360
      %s361 = sphi 0, %s358
      %s362 = sphi 0, %s361
      %s378 = sphi 0, %s362
      %s384 = sphi 0, %s386
      %s387 = sphi 0, %s384
      %s388 = sphi 0, %s387
      %s404 = sphi 0, %s388
      %s410 = sphi 0, %s412
      %s413 = sphi 0, %s410
      %s414 = sphi 0, %s413
      %s430 = sphi 0, %s414
      %s434 = sphi 0, %s434
      %s436 = sphi 0, %s434
      %s437 = sphi 0, %s436
      %s451 = sphi 0, %s437
      %s455 = sphi 0, %s455
      %s457 = sphi 0, %s455
      %s458 = sphi 0, %s457
      %s472 = sphi 0, %s458
      %s476 = sphi 0, %s476
      %s478 = sphi 0, %s476
      %s479 = sphi 0, %s478
      %s493 = sphi 0, %s479
      %s497 = sphi 0, %s497
      %s499 = sphi 0, %s497
      %s500 = sphi 0, %s499
      %s514 = sphi 0, %s500
      %s518 = sphi 0, %s518
      %s520 = sphi 0, %s518
      %s521 = sphi 0, %s520
      %s535 = sphi 0, %s521
    $region4: #{lmcls_forward.1} parent=1 // loop_header_branch
      %33 = sbr.rel (%p31) target = $region8
    $region5: #{lmcls_forward.1} parent=1 // loop_body
      %s35 = ssub.s32 %s30, 1
      %s36 = ssub.s32 %s30, 2
      %s37 = sadd.s32 %s30, 1
      %s39 = sadd.s32 %s38, 1
      %p42 = scmp.eq.s32.totalorder %s30, 1
      %p43 = scmp.ne.s32.totalorder %s38, %s40
      %p44 = scmp.eq.s32.totalorder %s30, 0
      %p45 = por %p43, %p44
      %p46 = scmp.ne.s32.totalorder %s38, %s40
      %p47 = scmp.eq.s32.totalorder %s35, 1
      %p48 = por %p46, %p47
      %p49 = scmp.ne.s32.totalorder %s40, %s41
      %p50 = scmp.eq.s32.totalorder %s35, 0
      %p51 = por %p49, %p50
      %p52 = scmp.ne.s32.totalorder %s40, %s41
      %p53 = scmp.eq.s32.totalorder %s36, 1
      %p54 = por %p52, %p53
      %p56 = scmp.ne.s32.totalorder %s41, %s55
      %p57 = scmp.eq.s32.totalorder %s36, 0
      %p58 = por %p56, %p57
      %s60 = sadd.s32 %s59, 1
      %p63 = scmp.eq.s32.totalorder %s30, 1
      %p64 = scmp.ne.s32.totalorder %s59, %s61
      %p65 = scmp.eq.s32.totalorder %s30, 0
      %p66 = por %p64, %p65
      %p67 = scmp.ne.s32.totalorder %s59, %s61
      %p68 = scmp.eq.s32.totalorder %s35, 1
      %p69 = por %p67, %p68
      %p70 = scmp.ne.s32.totalorder %s61, %s62
      %p71 = scmp.eq.s32.totalorder %s35, 0
      %p72 = por %p70, %p71
      %p73 = scmp.ne.s32.totalorder %s61, %s62
      %p74 = scmp.eq.s32.totalorder %s36, 1
      %p75 = por %p73, %p74
      %p77 = scmp.ne.s32.totalorder %s62, %s76
      %p78 = scmp.eq.s32.totalorder %s36, 0
      %p79 = por %p77, %p78
      %s81 = sadd.s32 %s80, 1
      %p84 = scmp.eq.s32.totalorder %s30, 1
      %p85 = scmp.ne.s32.totalorder %s80, %s82
      %p86 = scmp.eq.s32.totalorder %s30, 0
      %p87 = por %p85, %p86
      %p88 = scmp.ne.s32.totalorder %s80, %s82
      %p89 = scmp.eq.s32.totalorder %s35, 1
      %p90 = por %p88, %p89
      %p91 = scmp.ne.s32.totalorder %s82, %s83
      %p92 = scmp.eq.s32.totalorder %s35, 0
      %p93 = por %p91, %p92
      %p94 = scmp.ne.s32.totalorder %s82, %s83
      %p95 = scmp.eq.s32.totalorder %s36, 1
      %p96 = por %p94, %p95
      %p98 = scmp.ne.s32.totalorder %s83, %s97
      %p99 = scmp.eq.s32.totalorder %s36, 0
      %p100 = por %p98, %p99
      %s102 = sadd.s32 %s101, 1
      %p105 = scmp.eq.s32.totalorder %s30, 1
      %p106 = scmp.ne.s32.totalorder %s101, %s103
      %p107 = scmp.eq.s32.totalorder %s30, 0
      %p108 = por %p106, %p107
      %p109 = scmp.ne.s32.totalorder %s101, %s103
      %p110 = scmp.eq.s32.totalorder %s35, 1
      %p111 = por %p109, %p110
      %p112 = scmp.ne.s32.totalorder %s103, %s104
      %p113 = scmp.eq.s32.totalorder %s35, 0
      %p114 = por %p112, %p113
      %p115 = scmp.ne.s32.totalorder %s103, %s104
      %p116 = scmp.eq.s32.totalorder %s36, 1
      %p117 = por %p115, %p116
      %p119 = scmp.ne.s32.totalorder %s104, %s118
      %p120 = scmp.eq.s32.totalorder %s36, 0
      %p121 = por %p119, %p120
      %s122 = ssub.s32 %s30, %s37
      %p123 = scmp.eq.s32.totalorder %s122, 0
      %s125 = sadd.s32 %s124, 1
      %s126 = scalar_select %p123, %s124, %s125
      %p129 = pneg %p123
      %p130 = scmp.eq.s32.totalorder %s30, 1
      %p131 = por %p129, %p130
      %p132 = scmp.ne.s32.totalorder %s124, %s127
      %p133 = scmp.eq.s32.totalorder %s30, 0
      %p134 = por %p132, %p133
      %p135 = scmp.ne.s32.totalorder %s124, %s127
      %p136 = scmp.eq.s32.totalorder %s35, 1
      %p137 = por %p135, %p136
      %p138 = scmp.ne.s32.totalorder %s127, %s128
      %p139 = scmp.eq.s32.totalorder %s35, 0
      %p140 = por %p138, %p139
      %p141 = scmp.ne.s32.totalorder %s127, %s128
      %p142 = scmp.eq.s32.totalorder %s36, 1
      %p143 = por %p141, %p142
      %p145 = scmp.ne.s32.totalorder %s128, %s144
      %p146 = scmp.eq.s32.totalorder %s36, 0
      %p147 = por %p145, %p146
      %s148 = ssub.s32 %s30, %s37
      %p149 = scmp.eq.s32.totalorder %s148, 0
      %s151 = sadd.s32 %s150, 1
      %s152 = scalar_select %p149, %s150, %s151
      %p155 = pneg %p149
      %p156 = scmp.eq.s32.totalorder %s30, 1
      %p157 = por %p155, %p156
      %p158 = scmp.ne.s32.totalorder %s150, %s153
      %p159 = scmp.eq.s32.totalorder %s30, 0
      %p160 = por %p158, %p159
      %p161 = scmp.ne.s32.totalorder %s150, %s153
      %p162 = scmp.eq.s32.totalorder %s35, 1
      %p163 = por %p161, %p162
      %p164 = scmp.ne.s32.totalorder %s153, %s154
      %p165 = scmp.eq.s32.totalorder %s35, 0
      %p166 = por %p164, %p165
      %p167 = scmp.ne.s32.totalorder %s153, %s154
      %p168 = scmp.eq.s32.totalorder %s36, 1
      %p169 = por %p167, %p168
      %p171 = scmp.ne.s32.totalorder %s154, %s170
      %p172 = scmp.eq.s32.totalorder %s36, 0
      %p173 = por %p171, %p172
      %s174 = ssub.s32 %s30, %s37
      %p175 = scmp.eq.s32.totalorder %s174, 0
      %s177 = sadd.s32 %s176, 1
      %s178 = scalar_select %p175, %s176, %s177
      %p181 = pneg %p175
      %p182 = scmp.eq.s32.totalorder %s30, 1
      %p183 = por %p181, %p182
      %p184 = scmp.ne.s32.totalorder %s176, %s179
      %p185 = scmp.eq.s32.totalorder %s30, 0
      %p186 = por %p184, %p185
      %p187 = scmp.ne.s32.totalorder %s176, %s179
      %p188 = scmp.eq.s32.totalorder %s35, 1
      %p189 = por %p187, %p188
      %p190 = scmp.ne.s32.totalorder %s179, %s180
      %p191 = scmp.eq.s32.totalorder %s35, 0
      %p192 = por %p190, %p191
      %p193 = scmp.ne.s32.totalorder %s179, %s180
      %p194 = scmp.eq.s32.totalorder %s36, 1
      %p195 = por %p193, %p194
      %p197 = scmp.ne.s32.totalorder %s180, %s196
      %p198 = scmp.eq.s32.totalorder %s36, 0
      %p199 = por %p197, %p198
      %s200 = ssub.s32 %s30, %s37
      %p201 = scmp.eq.s32.totalorder %s200, 0
      %s203 = sadd.s32 %s202, 1
      %s204 = scalar_select %p201, %s202, %s203
      %p207 = pneg %p201
      %p208 = scmp.eq.s32.totalorder %s30, 1
      %p209 = por %p207, %p208
      %p210 = scmp.ne.s32.totalorder %s202, %s205
      %p211 = scmp.eq.s32.totalorder %s30, 0
      %p212 = por %p210, %p211
      %p213 = scmp.ne.s32.totalorder %s202, %s205
      %p214 = scmp.eq.s32.totalorder %s35, 1
      %p215 = por %p213, %p214
      %p216 = scmp.ne.s32.totalorder %s205, %s206
      %p217 = scmp.eq.s32.totalorder %s35, 0
      %p218 = por %p216, %p217
      %p219 = scmp.ne.s32.totalorder %s205, %s206
      %p220 = scmp.eq.s32.totalorder %s36, 1
      %p221 = por %p219, %p220
      %p223 = scmp.ne.s32.totalorder %s206, %s222
      %p224 = scmp.eq.s32.totalorder %s36, 0
      %p225 = por %p223, %p224
      %s226 = ssub.s32 %s30, %s37
      %p227 = scmp.eq.s32.totalorder %s226, 0
      %s229 = sadd.s32 %s228, 1
      %s230 = scalar_select %p227, %s228, %s229
      %p233 = pneg %p227
      %p234 = scmp.eq.s32.totalorder %s30, 1
      %p235 = por %p233, %p234
      %p236 = scmp.ne.s32.totalorder %s228, %s231
      %p237 = scmp.eq.s32.totalorder %s30, 0
      %p238 = por %p236, %p237
      %p239 = scmp.ne.s32.totalorder %s228, %s231
      %p240 = scmp.eq.s32.totalorder %s35, 1
      %p241 = por %p239, %p240
      %p242 = scmp.ne.s32.totalorder %s231, %s232
      %p243 = scmp.eq.s32.totalorder %s35, 0
      %p244 = por %p242, %p243
      %p245 = scmp.ne.s32.totalorder %s231, %s232
      %p246 = scmp.eq.s32.totalorder %s36, 1
      %p247 = por %p245, %p246
      %p249 = scmp.ne.s32.totalorder %s232, %s248
      %p250 = scmp.eq.s32.totalorder %s36, 0
      %p251 = por %p249, %p250
      %s252 = ssub.s32 %s30, %s37
      %p253 = scmp.eq.s32.totalorder %s252, 0
      %s255 = sadd.s32 %s254, 1
      %s256 = scalar_select %p253, %s254, %s255
      %p259 = pneg %p253
      %p260 = scmp.eq.s32.totalorder %s30, 1
      %p261 = por %p259, %p260
      %p262 = scmp.ne.s32.totalorder %s254, %s257
      %p263 = scmp.eq.s32.totalorder %s30, 0
      %p264 = por %p262, %p263
      %p265 = scmp.ne.s32.totalorder %s254, %s257
      %p266 = scmp.eq.s32.totalorder %s35, 1
      %p267 = por %p265, %p266
      %p268 = scmp.ne.s32.totalorder %s257, %s258
      %p269 = scmp.eq.s32.totalorder %s35, 0
      %p270 = por %p268, %p269
      %p271 = scmp.ne.s32.totalorder %s257, %s258
      %p272 = scmp.eq.s32.totalorder %s36, 1
      %p273 = por %p271, %p272
      %p275 = scmp.ne.s32.totalorder %s258, %s274
      %p276 = scmp.eq.s32.totalorder %s36, 0
      %p277 = por %p275, %p276
      %s278 = ssub.s32 %s30, %s37
      %p279 = scmp.eq.s32.totalorder %s278, 0
      %s281 = sadd.s32 %s280, 1
      %s282 = scalar_select %p279, %s280, %s281
      %p285 = pneg %p279
      %p286 = scmp.eq.s32.totalorder %s30, 1
      %p287 = por %p285, %p286
      %p288 = scmp.ne.s32.totalorder %s280, %s283
      %p289 = scmp.eq.s32.totalorder %s30, 0
      %p290 = por %p288, %p289
      %p291 = scmp.ne.s32.totalorder %s280, %s283
      %p292 = scmp.eq.s32.totalorder %s35, 1
      %p293 = por %p291, %p292
      %p294 = scmp.ne.s32.totalorder %s283, %s284
      %p295 = scmp.eq.s32.totalorder %s35, 0
      %p296 = por %p294, %p295
      %p297 = scmp.ne.s32.totalorder %s283, %s284
      %p298 = scmp.eq.s32.totalorder %s36, 1
      %p299 = por %p297, %p298
      %p301 = scmp.ne.s32.totalorder %s284, %s300
      %p302 = scmp.eq.s32.totalorder %s36, 0
      %p303 = por %p301, %p302
      %s304 = ssub.s32 %s30, %s37
      %p305 = scmp.eq.s32.totalorder %s304, 0
      %s307 = sadd.s32 %s306, 1
      %s308 = scalar_select %p305, %s306, %s307
      %p311 = pneg %p305
      %p312 = scmp.eq.s32.totalorder %s30, 1
      %p313 = por %p311, %p312
      %p314 = scmp.ne.s32.totalorder %s306, %s309
      %p315 = scmp.eq.s32.totalorder %s30, 0
      %p316 = por %p314, %p315
      %p317 = scmp.ne.s32.totalorder %s306, %s309
      %p318 = scmp.eq.s32.totalorder %s35, 1
      %p319 = por %p317, %p318
      %p320 = scmp.ne.s32.totalorder %s309, %s310
      %p321 = scmp.eq.s32.totalorder %s35, 0
      %p322 = por %p320, %p321
      %p323 = scmp.ne.s32.totalorder %s309, %s310
      %p324 = scmp.eq.s32.totalorder %s36, 1
      %p325 = por %p323, %p324
      %p327 = scmp.ne.s32.totalorder %s310, %s326
      %p328 = scmp.eq.s32.totalorder %s36, 0
      %p329 = por %p327, %p328
      %s330 = ssub.s32 %s30, %s37
      %p331 = scmp.eq.s32.totalorder %s330, 0
      %s333 = sadd.s32 %s332, 1
      %s334 = scalar_select %p331, %s332, %s333
      %p337 = pneg %p331
      %p338 = scmp.eq.s32.totalorder %s30, 1
      %p339 = por %p337, %p338
      %p340 = scmp.ne.s32.totalorder %s332, %s335
      %p341 = scmp.eq.s32.totalorder %s30, 0
      %p342 = por %p340, %p341
      %p343 = scmp.ne.s32.totalorder %s332, %s335
      %p344 = scmp.eq.s32.totalorder %s35, 1
      %p345 = por %p343, %p344
      %p346 = scmp.ne.s32.totalorder %s335, %s336
      %p347 = scmp.eq.s32.totalorder %s35, 0
      %p348 = por %p346, %p347
      %p349 = scmp.ne.s32.totalorder %s335, %s336
      %p350 = scmp.eq.s32.totalorder %s36, 1
      %p351 = por %p349, %p350
      %p353 = scmp.ne.s32.totalorder %s336, %s352
      %p354 = scmp.eq.s32.totalorder %s36, 0
      %p355 = por %p353, %p354
      %s356 = ssub.s32 %s30, %s37
      %p357 = scmp.eq.s32.totalorder %s356, 0
      %s359 = sadd.s32 %s358, 1
      %s360 = scalar_select %p357, %s358, %s359
      %p363 = pneg %p357
      %p364 = scmp.eq.s32.totalorder %s30, 1
      %p365 = por %p363, %p364
      %p366 = scmp.ne.s32.totalorder %s358, %s361
      %p367 = scmp.eq.s32.totalorder %s30, 0
      %p368 = por %p366, %p367
      %p369 = scmp.ne.s32.totalorder %s358, %s361
      %p370 = scmp.eq.s32.totalorder %s35, 1
      %p371 = por %p369, %p370
      %p372 = scmp.ne.s32.totalorder %s361, %s362
      %p373 = scmp.eq.s32.totalorder %s35, 0
      %p374 = por %p372, %p373
      %p375 = scmp.ne.s32.totalorder %s361, %s362
      %p376 = scmp.eq.s32.totalorder %s36, 1
      %p377 = por %p375, %p376
      %p379 = scmp.ne.s32.totalorder %s362, %s378
      %p380 = scmp.eq.s32.totalorder %s36, 0
      %p381 = por %p379, %p380
      %s382 = ssub.s32 %s30, %s37
      %p383 = scmp.eq.s32.totalorder %s382, 0
      %s385 = sadd.s32 %s384, 1
      %s386 = scalar_select %p383, %s384, %s385
      %p389 = pneg %p383
      %p390 = scmp.eq.s32.totalorder %s30, 1
      %p391 = por %p389, %p390
      %p392 = scmp.ne.s32.totalorder %s384, %s387
      %p393 = scmp.eq.s32.totalorder %s30, 0
      %p394 = por %p392, %p393
      %p395 = scmp.ne.s32.totalorder %s384, %s387
      %p396 = scmp.eq.s32.totalorder %s35, 1
      %p397 = por %p395, %p396
      %p398 = scmp.ne.s32.totalorder %s387, %s388
      %p399 = scmp.eq.s32.totalorder %s35, 0
      %p400 = por %p398, %p399
      %p401 = scmp.ne.s32.totalorder %s387, %s388
      %p402 = scmp.eq.s32.totalorder %s36, 1
      %p403 = por %p401, %p402
      %p405 = scmp.ne.s32.totalorder %s388, %s404
      %p406 = scmp.eq.s32.totalorder %s36, 0
      %p407 = por %p405, %p406
      %s408 = ssub.s32 %s30, %s37
      %p409 = scmp.eq.s32.totalorder %s408, 0
      %s411 = sadd.s32 %s410, 1
      %s412 = scalar_select %p409, %s410, %s411
      %p415 = pneg %p409
      %p416 = scmp.eq.s32.totalorder %s30, 1
      %p417 = por %p415, %p416
      %p418 = scmp.ne.s32.totalorder %s410, %s413
      %p419 = scmp.eq.s32.totalorder %s30, 0
      %p420 = por %p418, %p419
      %p421 = scmp.ne.s32.totalorder %s410, %s413
      %p422 = scmp.eq.s32.totalorder %s35, 1
      %p423 = por %p421, %p422
      %p424 = scmp.ne.s32.totalorder %s413, %s414
      %p425 = scmp.eq.s32.totalorder %s35, 0
      %p426 = por %p424, %p425
      %p427 = scmp.ne.s32.totalorder %s413, %s414
      %p428 = scmp.eq.s32.totalorder %s36, 1
      %p429 = por %p427, %p428
      %p431 = scmp.ne.s32.totalorder %s414, %s430
      %p432 = scmp.eq.s32.totalorder %s36, 0
      %p433 = por %p431, %p432
      %s435 = sadd.s32 %s434, 1
      %p438 = scmp.eq.s32.totalorder %s30, 1
      %p439 = scmp.ne.s32.totalorder %s434, %s436
      %p440 = scmp.eq.s32.totalorder %s30, 0
      %p441 = por %p439, %p440
      %p442 = scmp.ne.s32.totalorder %s434, %s436
      %p443 = scmp.eq.s32.totalorder %s35, 1
      %p444 = por %p442, %p443
      %p445 = scmp.ne.s32.totalorder %s436, %s437
      %p446 = scmp.eq.s32.totalorder %s35, 0
      %p447 = por %p445, %p446
      %p448 = scmp.ne.s32.totalorder %s436, %s437
      %p449 = scmp.eq.s32.totalorder %s36, 1
      %p450 = por %p448, %p449
      %p452 = scmp.ne.s32.totalorder %s437, %s451
      %p453 = scmp.eq.s32.totalorder %s36, 0
      %p454 = por %p452, %p453
      %s456 = sadd.s32 %s455, 1
      %p459 = scmp.eq.s32.totalorder %s30, 1
      %p460 = scmp.ne.s32.totalorder %s455, %s457
      %p461 = scmp.eq.s32.totalorder %s30, 0
      %p462 = por %p460, %p461
      %p463 = scmp.ne.s32.totalorder %s455, %s457
      %p464 = scmp.eq.s32.totalorder %s35, 1
      %p465 = por %p463, %p464
      %p466 = scmp.ne.s32.totalorder %s457, %s458
      %p467 = scmp.eq.s32.totalorder %s35, 0
      %p468 = por %p466, %p467
      %p469 = scmp.ne.s32.totalorder %s457, %s458
      %p470 = scmp.eq.s32.totalorder %s36, 1
      %p471 = por %p469, %p470
      %p473 = scmp.ne.s32.totalorder %s458, %s472
      %p474 = scmp.eq.s32.totalorder %s36, 0
      %p475 = por %p473, %p474
      %s477 = sadd.s32 %s476, 1
      %p480 = scmp.eq.s32.totalorder %s30, 1
      %p481 = scmp.ne.s32.totalorder %s476, %s478
      %p482 = scmp.eq.s32.totalorder %s30, 0
      %p483 = por %p481, %p482
      %p484 = scmp.ne.s32.totalorder %s476, %s478
      %p485 = scmp.eq.s32.totalorder %s35, 1
      %p486 = por %p484, %p485
      %p487 = scmp.ne.s32.totalorder %s478, %s479
      %p488 = scmp.eq.s32.totalorder %s35, 0
      %p489 = por %p487, %p488
      %p490 = scmp.ne.s32.totalorder %s478, %s479
      %p491 = scmp.eq.s32.totalorder %s36, 1
      %p492 = por %p490, %p491
      %p494 = scmp.ne.s32.totalorder %s479, %s493
      %p495 = scmp.eq.s32.totalorder %s36, 0
      %p496 = por %p494, %p495
      %s498 = sadd.s32 %s497, 1
      %p501 = scmp.eq.s32.totalorder %s30, 1
      %p502 = scmp.ne.s32.totalorder %s497, %s499
      %p503 = scmp.eq.s32.totalorder %s30, 0
      %p504 = por %p502, %p503
      %p505 = scmp.ne.s32.totalorder %s497, %s499
      %p506 = scmp.eq.s32.totalorder %s35, 1
      %p507 = por %p505, %p506
      %p508 = scmp.ne.s32.totalorder %s499, %s500
      %p509 = scmp.eq.s32.totalorder %s35, 0
      %p510 = por %p508, %p509
      %p511 = scmp.ne.s32.totalorder %s499, %s500
      %p512 = scmp.eq.s32.totalorder %s36, 1
      %p513 = por %p511, %p512
      %p515 = scmp.ne.s32.totalorder %s500, %s514
      %p516 = scmp.eq.s32.totalorder %s36, 0
      %p517 = por %p515, %p516
      %s519 = sadd.s32 %s518, 1
      %p522 = scmp.eq.s32.totalorder %s30, 1
      %p523 = scmp.ne.s32.totalorder %s518, %s520
      %p524 = scmp.eq.s32.totalorder %s30, 0
      %p525 = por %p523, %p524
      %p526 = scmp.ne.s32.totalorder %s518, %s520
      %p527 = scmp.eq.s32.totalorder %s35, 1
      %p528 = por %p526, %p527
      %p529 = scmp.ne.s32.totalorder %s520, %s521
      %p530 = scmp.eq.s32.totalorder %s35, 0
      %p531 = por %p529, %p530
      %p532 = scmp.ne.s32.totalorder %s520, %s521
      %p533 = scmp.eq.s32.totalorder %s36, 1
      %p534 = por %p532, %p533
      %p536 = scmp.ne.s32.totalorder %s521, %s535
      %p537 = scmp.eq.s32.totalorder %s36, 0
      %p538 = por %p536, %p537
      %p539 = scmp.le.s32.totalorder 1, %s30
      %p540 = scmp.lt.s32.totalorder %s30, 3
      %p541 = pnand %p539, %p540
      %p542 = pneg %p541
      // Predicated region
      $region9: #{lmcls_forward.1} parent=5 // pred_check
        _
      $region10: #{lmcls_forward.1} parent=5 // pred_check_branch
        %544 = sbr.rel (%p541) target = $region12
      $region11: #{lmcls_forward.1} parent=5 // pred_region
        %s545 = ssub.s32 %s30, 1
        // Predicated region
        $region13: #{lmcls_forward.1} parent=11 // pred_check
          %p546 = pneg %p51
        $region14: #{lmcls_forward.1} parent=11 // pred_check_branch
          %548 = sbr.rel (%p546) target = $region16
        $region15: #{lmcls_forward.1} parent=11 // pred_region
          _
        $region16: #{lmcls_forward.1} parent=11 // pred_fallthru
          _
        // Predicated region
        $region17: #{lmcls_forward.1} parent=11 // pred_check
          %p549 = pneg %p72
        $region18: #{lmcls_forward.1} parent=11 // pred_check_branch
          %551 = sbr.rel (%p549) target = $region20
        $region19: #{lmcls_forward.1} parent=11 // pred_region
          _
        $region20: #{lmcls_forward.1} parent=11 // pred_fallthru
          _
        // Predicated region
        $region21: #{lmcls_forward.1} parent=11 // pred_check
          %p552 = pneg %p93
        $region22: #{lmcls_forward.1} parent=11 // pred_check_branch
          %554 = sbr.rel (%p552) target = $region24
        $region23: #{lmcls_forward.1} parent=11 // pred_region
          _
        $region24: #{lmcls_forward.1} parent=11 // pred_fallthru
          _
        // Predicated region
        $region25: #{lmcls_forward.1} parent=11 // pred_check
          %p555 = pneg %p114
        $region26: #{lmcls_forward.1} parent=11 // pred_check_branch
          %557 = sbr.rel (%p555) target = $region28
        $region27: #{lmcls_forward.1} parent=11 // pred_region
          _
        $region28: #{lmcls_forward.1} parent=11 // pred_fallthru
          _
        // Predicated region
        $region29: #{lmcls_forward.1} parent=11 // pred_check
          %p558 = pneg %p447
        $region30: #{lmcls_forward.1} parent=11 // pred_check_branch
          %560 = sbr.rel (%p558) target = $region32
        $region31: #{lmcls_forward.1} parent=11 // pred_region
          _
        $region32: #{lmcls_forward.1} parent=11 // pred_fallthru
          _
        // Predicated region
        $region33: #{lmcls_forward.1} parent=11 // pred_check
          %p561 = pneg %p468
        $region34: #{lmcls_forward.1} parent=11 // pred_check_branch
          %563 = sbr.rel (%p561) target = $region36
        $region35: #{lmcls_forward.1} parent=11 // pred_region
          _
        $region36: #{lmcls_forward.1} parent=11 // pred_fallthru
          _
        // Predicated region
        $region37: #{lmcls_forward.1} parent=11 // pred_check
          %p564 = pneg %p489
        $region38: #{lmcls_forward.1} parent=11 // pred_check_branch
          %566 = sbr.rel (%p564) target = $region40
        $region39: #{lmcls_forward.1} parent=11 // pred_region
          _
        $region40: #{lmcls_forward.1} parent=11 // pred_fallthru
          _
      $region12: #{lmcls_forward.1} parent=5 // pred_fallthru
        _
      %p567 = scmp.lt.s32.totalorder %s30, 2
      // Predicated region
      $region41: #{lmcls_forward.1} parent=5 // pred_check
        %p568 = pneg %p567
      $region42: #{lmcls_forward.1} parent=5 // pred_check_branch
        %570 = sbr.rel (%p568) target = $region44
      $region43: #{lmcls_forward.1} parent=5 // pred_region
        // Predicated region
        $region45: #{lmcls_forward.1} parent=43 // pred_check
          %p571 = pneg %p134
        $region46: #{lmcls_forward.1} parent=43 // pred_check_branch
          %573 = sbr.rel (%p571) target = $region48
        $region47: #{lmcls_forward.1} parent=43 // pred_region
          %p574 = scmp.lt.s32.totalorder %s30, 1
          %s575 = scalar_select %p574, %s30, 1
          %s576 = smul.addr %s575, 4
          %s577 = smul.addr %s576, 8
          %s578 = scalar_lea.vmem %s4, %s577
        $region48: #{lmcls_forward.1} parent=43 // pred_fallthru
          _
        // Predicated region
        $region49: #{lmcls_forward.1} parent=43 // pred_check
          %p579 = pneg %p160
        $region50: #{lmcls_forward.1} parent=43 // pred_check_branch
          %581 = sbr.rel (%p579) target = $region52
        $region51: #{lmcls_forward.1} parent=43 // pred_region
          %p582 = scmp.lt.s32.totalorder %s30, 1
          %s583 = scalar_select %p582, %s30, 1
          %s584 = scalar_lea.vmem %s5, %s583
        $region52: #{lmcls_forward.1} parent=43 // pred_fallthru
          _
        // Predicated region
        $region53: #{lmcls_forward.1} parent=43 // pred_check
          %p585 = pneg %p186
        $region54: #{lmcls_forward.1} parent=43 // pred_check_branch
          %587 = sbr.rel (%p585) target = $region56
        $region55: #{lmcls_forward.1} parent=43 // pred_region
          %p588 = scmp.lt.s32.totalorder %s30, 1
          %s589 = scalar_select %p588, %s30, 1
          %s590 = smul.addr %s589, 4
          %s591 = smul.addr %s590, 8
          %s592 = scalar_lea.vmem %s6, %s591
        $region56: #{lmcls_forward.1} parent=43 // pred_fallthru
          _
        // Predicated region
        $region57: #{lmcls_forward.1} parent=43 // pred_check
          %p593 = pneg %p212
        $region58: #{lmcls_forward.1} parent=43 // pred_check_branch
          %595 = sbr.rel (%p593) target = $region60
        $region59: #{lmcls_forward.1} parent=43 // pred_region
          %p596 = scmp.lt.s32.totalorder %s30, 1
          %s597 = scalar_select %p596, %s30, 1
          %s598 = scalar_lea.vmem %s7, %s597
        $region60: #{lmcls_forward.1} parent=43 // pred_fallthru
          _
        // Predicated region
        $region61: #{lmcls_forward.1} parent=43 // pred_check
          %p599 = pneg %p238
        $region62: #{lmcls_forward.1} parent=43 // pred_check_branch
          %601 = sbr.rel (%p599) target = $region64
        $region63: #{lmcls_forward.1} parent=43 // pred_region
          %p602 = scmp.lt.s32.totalorder %s30, 1
          %s603 = scalar_select %p602, %s30, 1
          %s604 = scalar_lea.vmem %s8, %s603
        $region64: #{lmcls_forward.1} parent=43 // pred_fallthru
          _
        // Predicated region
        $region65: #{lmcls_forward.1} parent=43 // pred_check
          %p605 = pneg %p264
        $region66: #{lmcls_forward.1} parent=43 // pred_check_branch
          %607 = sbr.rel (%p605) target = $region68
        $region67: #{lmcls_forward.1} parent=43 // pred_region
          %p608 = scmp.lt.s32.totalorder %s30, 1
          %s609 = scalar_select %p608, %s30, 1
          %s610 = scalar_lea.vmem %s9, %s609
        $region68: #{lmcls_forward.1} parent=43 // pred_fallthru
          _
        // Predicated region
        $region69: #{lmcls_forward.1} parent=43 // pred_check
          %p611 = pneg %p290
        $region70: #{lmcls_forward.1} parent=43 // pred_check_branch
          %613 = sbr.rel (%p611) target = $region72
        $region71: #{lmcls_forward.1} parent=43 // pred_region
          %p614 = scmp.lt.s32.totalorder %s30, 1
          %s615 = scalar_select %p614, %s30, 1
          %s616 = smul.addr %s615, 4
          %s617 = smul.addr %s616, 8
          %s618 = scalar_lea.vmem %s10, %s617
        $region72: #{lmcls_forward.1} parent=43 // pred_fallthru
          _
        // Predicated region
        $region73: #{lmcls_forward.1} parent=43 // pred_check
          %p619 = pneg %p316
        $region74: #{lmcls_forward.1} parent=43 // pred_check_branch
          %621 = sbr.rel (%p619) target = $region76
        $region75: #{lmcls_forward.1} parent=43 // pred_region
          %p622 = scmp.lt.s32.totalorder %s30, 1
          %s623 = scalar_select %p622, %s30, 1
          %s624 = scalar_lea.vmem %s11, %s623
        $region76: #{lmcls_forward.1} parent=43 // pred_fallthru
          _
        // Predicated region
        $region77: #{lmcls_forward.1} parent=43 // pred_check
          %p625 = pneg %p342
        $region78: #{lmcls_forward.1} parent=43 // pred_check_branch
          %627 = sbr.rel (%p625) target = $region80
        $region79: #{lmcls_forward.1} parent=43 // pred_region
          %p628 = scmp.lt.s32.totalorder %s30, 1
          %s629 = scalar_select %p628, %s30, 1
          %s630 = smul.addr %s629, 8
          %s631 = smul.addr %s630, 8
          %s632 = scalar_lea.vmem %s12, %s631
        $region80: #{lmcls_forward.1} parent=43 // pred_fallthru
          _
        // Predicated region
        $region81: #{lmcls_forward.1} parent=43 // pred_check
          %p633 = pneg %p368
        $region82: #{lmcls_forward.1} parent=43 // pred_check_branch
          %635 = sbr.rel (%p633) target = $region84
        $region83: #{lmcls_forward.1} parent=43 // pred_region
          %p636 = scmp.lt.s32.totalorder %s30, 1
          %s637 = scalar_select %p636, %s30, 1
          %s638 = scalar_lea.vmem %s13, %s637
        $region84: #{lmcls_forward.1} parent=43 // pred_fallthru
          _
        // Predicated region
        $region85: #{lmcls_forward.1} parent=43 // pred_check
          %p639 = pneg %p394
        $region86: #{lmcls_forward.1} parent=43 // pred_check_branch
          %641 = sbr.rel (%p639) target = $region88
        $region87: #{lmcls_forward.1} parent=43 // pred_region
          %p642 = scmp.lt.s32.totalorder %s30, 1
          %s643 = scalar_select %p642, %s30, 1
          %s644 = scalar_lea.vmem %s14, %s643
        $region88: #{lmcls_forward.1} parent=43 // pred_fallthru
          _
        // Predicated region
        $region89: #{lmcls_forward.1} parent=43 // pred_check
          %p645 = pneg %p420
        $region90: #{lmcls_forward.1} parent=43 // pred_check_branch
          %647 = sbr.rel (%p645) target = $region92
        $region91: #{lmcls_forward.1} parent=43 // pred_region
          %p648 = scmp.lt.s32.totalorder %s30, 1
          %s649 = scalar_select %p648, %s30, 1
          %s650 = scalar_lea.vmem %s15, %s649
        $region92: #{lmcls_forward.1} parent=43 // pred_fallthru
          _
      $region44: #{lmcls_forward.1} parent=5 // pred_fallthru
        _
      %p651 = scmp.le.s32.totalorder 1, %s30
      %p652 = scmp.lt.s32.totalorder %s30, 3
      %p653 = pnand %p651, %p652
      %p654 = pneg %p653
      // Predicated region
      $region93: #{lmcls_forward.1} parent=5 // pred_check
        _
      $region94: #{lmcls_forward.1} parent=5 // pred_check_branch
        %656 = sbr.rel (%p653) target = $region96
      $region95: #{lmcls_forward.1} parent=5 // pred_region
        %s657 = ssub.s32 %s30, 1
        %p658 = pneg %p51
        %p659 = pneg %p48
        %p660 = pneg %p72
        %p661 = pneg %p69
        %p662 = pneg %p93
        %p663 = pneg %p90
        %p664 = pneg %p114
        %p665 = pneg %p111
        %p666 = scmp.lt.s32.totalorder %s35, 1
        %s667 = scalar_select %p666, %s35, 1
        %s668 = smul.addr %s667, 4
        %s669 = smul.addr %s668, 8
        %s670 = scalar_lea.vmem %s4, %s669
        %p671 = pneg %p140
        %p672 = pneg %p137
        %p673 = scmp.lt.s32.totalorder %s35, 1
        %s674 = scalar_select %p673, %s35, 1
        %s675 = scalar_lea.vmem %s5, %s674
        %p676 = pneg %p166
        %p677 = pneg %p163
        %p678 = scmp.lt.s32.totalorder %s35, 1
        %s679 = scalar_select %p678, %s35, 1
        %s680 = smul.addr %s679, 4
        %s681 = smul.addr %s680, 8
        %s682 = scalar_lea.vmem %s6, %s681
        %p683 = pneg %p192
        %p684 = pneg %p189
        %p685 = scmp.lt.s32.totalorder %s35, 1
        %s686 = scalar_select %p685, %s35, 1
        %s687 = scalar_lea.vmem %s7, %s686
        %p688 = pneg %p218
        %p689 = pneg %p215
        %p690 = scmp.lt.s32.totalorder %s35, 1
        %s691 = scalar_select %p690, %s35, 1
        %s692 = scalar_lea.vmem %s8, %s691
        %p693 = pneg %p244
        %p694 = pneg %p241
        %p695 = scmp.lt.s32.totalorder %s35, 1
        %s696 = scalar_select %p695, %s35, 1
        %s697 = scalar_lea.vmem %s9, %s696
        %p698 = pneg %p270
        %p699 = pneg %p267
        %p700 = scmp.lt.s32.totalorder %s35, 1
        %s701 = scalar_select %p700, %s35, 1
        %s702 = smul.addr %s701, 4
        %s703 = smul.addr %s702, 8
        %s704 = scalar_lea.vmem %s10, %s703
        %p705 = pneg %p296
        %p706 = pneg %p293
        %p707 = scmp.lt.s32.totalorder %s35, 1
        %s708 = scalar_select %p707, %s35, 1
        %s709 = scalar_lea.vmem %s11, %s708
        %p710 = pneg %p322
        %p711 = pneg %p319
        %p712 = scmp.lt.s32.totalorder %s35, 1
        %s713 = scalar_select %p712, %s35, 1
        %s714 = smul.addr %s713, 8
        %s715 = smul.addr %s714, 8
        %s716 = scalar_lea.vmem %s12, %s715
        %p717 = pneg %p348
        %p718 = pneg %p345
        %p719 = scmp.lt.s32.totalorder %s35, 1
        %s720 = scalar_select %p719, %s35, 1
        %s721 = scalar_lea.vmem %s13, %s720
        %p722 = pneg %p374
        %p723 = pneg %p371
        %p724 = scmp.lt.s32.totalorder %s35, 1
        %s725 = scalar_select %p724, %s35, 1
        %s726 = scalar_lea.vmem %s14, %s725
        %p727 = pneg %p400
        %p728 = pneg %p397
        %p729 = scmp.lt.s32.totalorder %s35, 1
        %s730 = scalar_select %p729, %s35, 1
        %s731 = scalar_lea.vmem %s15, %s730
        %p732 = pneg %p426
        %p733 = pneg %p423
        %p734 = pneg %p447
        %p735 = pneg %p444
        %p736 = pneg %p468
        %p737 = pneg %p465
        %p738 = pneg %p489
        %p739 = pneg %p486
        %p740 = pneg %p510
        %p741 = pneg %p507
        %p742 = pneg %p531
        %p743 = pneg %p528
        %p744 = scmp.lt.s32.totalorder %s35, 1
        %s745 = scalar_select %p744, %s35, 1
        %s746 = smul.addr %s745, 4
        %s747 = smul.addr %s746, 8
        %s748 = scalar_lea.vmem %s4, %s747
        %p749 = scmp.lt.s32.totalorder %s35, 1
        %s750 = scalar_select %p749, %s35, 1
        %s751 = scalar_lea.vmem %s5, %s750
        %p752 = scmp.lt.s32.totalorder %s35, 1
        %s753 = scalar_select %p752, %s35, 1
        %s754 = smul.addr %s753, 4
        %s755 = smul.addr %s754, 8
        %s756 = scalar_lea.vmem %s6, %s755
        %p757 = scmp.lt.s32.totalorder %s35, 1
        %s758 = scalar_select %p757, %s35, 1
        %s759 = scalar_lea.vmem %s7, %s758
        %p760 = scmp.lt.s32.totalorder %s35, 1
        %s761 = scalar_select %p760, %s35, 1
        %s762 = scalar_lea.vmem %s8, %s761
        %p763 = scmp.lt.s32.totalorder %s35, 1
        %s764 = scalar_select %p763, %s35, 1
        %s765 = scalar_lea.vmem %s9, %s764
        %p766 = scmp.lt.s32.totalorder %s35, 1
        %s767 = scalar_select %p766, %s35, 1
        %s768 = smul.addr %s767, 4
        %s769 = smul.addr %s768, 8
        %s770 = scalar_lea.vmem %s10, %s769
        %p771 = scmp.lt.s32.totalorder %s35, 1
        %s772 = scalar_select %p771, %s35, 1
        %s773 = scalar_lea.vmem %s11, %s772
        %p774 = scmp.lt.s32.totalorder %s35, 1
        %s775 = scalar_select %p774, %s35, 1
        %s776 = smul.addr %s775, 8
        %s777 = smul.addr %s776, 8
        %s778 = scalar_lea.vmem %s12, %s777
        %p779 = scmp.lt.s32.totalorder %s35, 1
        %s780 = scalar_select %p779, %s35, 1
        %s781 = scalar_lea.vmem %s13, %s780
        %p782 = scmp.lt.s32.totalorder %s35, 1
        %s783 = scalar_select %p782, %s35, 1
        %s784 = scalar_lea.vmem %s14, %s783
        %p785 = scmp.lt.s32.totalorder %s35, 1
        %s786 = scalar_select %p785, %s35, 1
        %s787 = scalar_lea.vmem %s15, %s786
        %p788 = scmp.eq.s32.totalorder %s35, 0
        // Predicated region
        $region97: #{lmcls_forward.1} parent=95 // pred_check
          %p789 = pneg %p788
        $region98: #{lmcls_forward.1} parent=95 // pred_check_branch
          %791 = sbr.rel (%p789) target = $region100
        $region99: #{lmcls_forward.1} parent=95 // pred_region
          %v792 = vld [vmem:[%s0] sm:$0xff]
          %v793 = vld [vmem:[%s0 + $0x8] sm:$0xff]
          %v794 = vld [vmem:[%s2] sm:$0x1]
          %v795 = vld [vmem:[%s3] sm:$0x1]
          %vm796 = vcmask 261120
          %v797 = vsel %vm796, %v792, 0.0
          %798 = vadd.xlane.f32.xlu0 %v797
          %v799 = vpop.xlane.xlu0 %798
          %v800 = vsel %vm796, %v793, 0.0
          %801 = vadd.xlane.f32.xlu0 %v800
          %v802 = vpop.xlane.xlu0 %801
          %v803 = vrcp.pop 32.0
          %v804 = vmul.f32 %v799, %v803
          %v805 = vmul.f32 %v802, %v803
          %v806 = vsub.f32 %v792, %v804
          %v807 = vsub.f32 %v793, %v805
          %v808 = vmul.f32 %v806, %v806
          %v809 = vmul.f32 %v807, %v807
          %v810 = vsel %vm796, %v808, 0.0
          %811 = vadd.xlane.f32.xlu0 %v810
          %v812 = vpop.xlane.xlu0 %811
          %v813 = vsel %vm796, %v809, 0.0
          %814 = vadd.xlane.f32.xlu0 %v813
          %v815 = vpop.xlane.xlu0 %814
          %v816 = vmul.f32 %v812, %v803
          %v817 = vmul.f32 %v815, %v803
          %v818 = vadd.f32 %v816, 1e-05
          %v819 = vadd.f32 %v817, 1e-05
          %v820 = vrsqrt.pop %v818
          %v821 = vrsqrt.pop %v819
          %v822 = vmul.f32 %v806, %v820
          %v823 = vmul.f32 %v807, %v821
          %v825 = vlaneseq
          %v826 = vshrl.u32 %v825, 7
          %v827 = vsub.s32 0, %v826
          %v828 = vrot.slane %v794, %v827
          %v830 = vmul.f32 %v822, %v828
          %v831 = vmul.f32 %v823, %v828
          %v833 = vlaneseq
          %v834 = vshrl.u32 %v833, 7
          %v835 = vsub.s32 0, %v834
          %v836 = vrot.slane %v795, %v835
          %v838 = vadd.f32 %v830, %v836
          %v839 = vadd.f32 %v831, %v836
          %840 = vst.msk [vmem:[#allocation2] sm:$0xff] %vm796, %v838
          %841 = vst.msk [vmem:[#allocation2 + $0x8] sm:$0xff] %vm796, %v839
        $region100: #{lmcls_forward.1} parent=95 // pred_fallthru
          _
        %v842 = vld [vmem:[#allocation2] sm:$0xff]
        %v843 = vld [vmem:[#allocation2 + $0x8] sm:$0xff]
        %v844 = vld [vmem:[%s748] sm:$0xff]
        %v845 = vld [vmem:[%s748 + $0x8] sm:$0xff]
        %v846 = vld [vmem:[%s748 + $0x10] sm:$0xff]
        %v847 = vld [vmem:[%s748 + $0x18] sm:$0xff]
        %v848 = vld [vmem:[%s751] sm:$0x1]
        %v850 = vlaneseq
        %v851 = vshrl.u32 %v850, 7
        %v852 = vsub.s32 0, %v851
        %v853 = vrot.slane %v848, %v852
        %vm855 = vcmask 261120
        %v857 = vsel %vm855, %v842, 0
        %v860 = vsel %vm855, %v843, 0
        %862 = vmatprep.subr.mxu0 0.0
        %863 = vmatpush1.msra.mxu0 %v844
        %864 = vmatprep.subr.mxu0 0.0
        %865 = vmatpush1.msra.mxu0 %v845
        %866 = vmatprep.subr.mxu0 0.0
        %867 = vmatpush1.msra.mxu0 %v846
        %868 = vmatprep.subr.mxu0 0.0
        %869 = vmatpush1.msra.mxu0 %v847
        %870 = vmatprep.subr.mxu0 0.0
        %871 = vmatpush1.msra.mxu0 0.0
        %872 = vmatprep.subr.mxu0 0.0
        %873 = vmatpush1.msra.mxu0 0.0
        %874 = vmatprep.subr.mxu0 0.0
        %875 = vmatpush1.msra.mxu0 0.0
        %876 = vmatprep.subr.mxu0 0.0
        %877 = vmatpush1.msra.mxu0 0.0
        %878 = vmatprep.subr.mxu0 0.0
        %879 = vmatpush1.msra.mxu0 0.0
        %880 = vmatprep.subr.mxu0 0.0
        %881 = vmatpush1.msra.mxu0 0.0
        %882 = vmatprep.subr.mxu0 0.0
        %883 = vmatpush1.msra.mxu0 0.0
        %884 = vmatprep.subr.mxu0 0.0
        %885 = vmatpush1.msra.mxu0 0.0
        %886 = vmatprep.subr.mxu0 0.0
        %887 = vmatpush1.msra.mxu0 0.0
        %888 = vmatprep.subr.mxu0 0.0
        %889 = vmatpush1.msra.mxu0 0.0
        %890 = vmatprep.subr.mxu0 0.0
        %891 = vmatpush1.msra.mxu0 0.0
        %892 = vmatprep.subr.mxu0 0.0
        %893 = vmatpush1.msra.mxu0 0.0
        %894 = vmatprep.subr.mxu0 0.0
        %895 = vmatpush1.msra.mxu0 0.0
        %896 = vmatprep.subr.mxu0 0.0
        %897 = vmatpush1.msra.mxu0 0.0
        %898 = vmatprep.subr.mxu0 0.0
        %899 = vmatpush1.msra.mxu0 0.0
        %900 = vmatprep.subr.mxu0 0.0
        %901 = vmatpush1.msra.mxu0 0.0
        %902 = vmatprep.subr.mxu0 0.0
        %903 = vmatpush1.msra.mxu0 0.0
        %904 = vmatprep.subr.mxu0 0.0
        %905 = vmatpush1.msra.mxu0 0.0
        %906 = vmatprep.subr.mxu0 0.0
        %907 = vmatpush1.msra.mxu0 0.0
        %908 = vmatprep.subr.mxu0 0.0
        %909 = vmatpush1.msra.mxu0 0.0
        %910 = vmatprep.subr.mxu0 0.0
        %911 = vmatpush1.msra.mxu0 0.0
        %912 = vmatprep.subr.mxu0 0.0
        %913 = vmatpush1.msra.mxu0 0.0
        %914 = vmatprep.subr.mxu0 0.0
        %915 = vmatpush1.msra.mxu0 0.0
        %916 = vmatprep.subr.mxu0 0.0
        %917 = vmatpush1.msra.mxu0 0.0
        %918 = vmatprep.subr.mxu0 0.0
        %919 = vmatpush1.msra.mxu0 0.0
        %920 = vmatprep.subr.mxu0 0.0
        %921 = vmatpush1.msra.mxu0 0.0
        %922 = vmatprep.subr.mxu0 0.0
        %923 = vmatpush1.msra.mxu0 0.0
        %924 = vmatprep.subr.mxu0 0.0
        %925 = vmatpush1.msra.mxu0 0.0
        %926 = vmatprep.mubr.f32.mxu0 0.0
        %927 = vmatmul.mubr.f32.gmra.mrb[0].mxu0 %v857
        %v928 = vpop.f32.mrb[0].mxu0
        %v929 = vadd.f32 %v853, %v928
        %v930 = vpop.f32.mrb[0].mxu0
        %931 = vmatprep.mubr.f32.mxu0 0.0
        %932 = vmatmul.mubr.f32.gmra.mrb[0].mxu0 %v860
        %v933 = vpop.f32.mrb[0].mxu0
        %v934 = vadd.f32 %v853, %v933
        %v935 = vpop.f32.mrb[0].mxu0
        %936 = vdwg.mxu0
        %v937 = vld [vmem:[%s1] sm:$0x1]
        %939 = vrot.lane.b32.xlu0 %v929, 96
        %v940 = vpop.permute.xlu0 %939
        %vm941 = vcmask 64512
        %v942 = vsel %vm941, %v929, 0
        %v944 = vsel %vm941, %v940, 0
        %946 = vmatprep.subr.mxu0 0.0
        %947 = vmatpush1.xpose.msra.mxu0 %v944
        %948 = vmatprep.subr.mxu0 0.0
        %949 = vmatpush1.xpose.msra.mxu0 0.0
        %950 = vmatprep.subr.mxu0 0.0
        %951 = vmatpush1.xpose.msra.mxu0 0.0
        %952 = vmatprep.subr.mxu0 0.0
        %953 = vmatpush1.xpose.msra.mxu0 0.0
        %954 = vmatprep.subr.mxu0 0.0
        %955 = vmatpush1.xpose.msra.mxu0 0.0
        %956 = vmatprep.subr.mxu0 0.0
        %957 = vmatpush1.xpose.msra.mxu0 0.0
        %958 = vmatprep.subr.mxu0 0.0
        %959 = vmatpush1.xpose.msra.mxu0 0.0
        %960 = vmatprep.subr.mxu0 0.0
        %961 = vmatpush1.xpose.msra.mxu0 0.0
        %962 = vmatprep.subr.mxu0 0.0
        %963 = vmatpush1.xpose.msra.mxu0 0.0
        %964 = vmatprep.subr.mxu0 0.0
        %965 = vmatpush1.xpose.msra.mxu0 0.0
        %966 = vmatprep.subr.mxu0 0.0
        %967 = vmatpush1.xpose.msra.mxu0 0.0
        %968 = vmatprep.subr.mxu0 0.0
        %969 = vmatpush1.xpose.msra.mxu0 0.0
        %970 = vmatprep.subr.mxu0 0.0
        %971 = vmatpush1.xpose.msra.mxu0 0.0
        %972 = vmatprep.subr.mxu0 0.0
        %973 = vmatpush1.xpose.msra.mxu0 0.0
        %974 = vmatprep.subr.mxu0 0.0
        %975 = vmatpush1.xpose.msra.mxu0 0.0
        %976 = vmatprep.subr.mxu0 0.0
        %977 = vmatpush1.xpose.msra.mxu0 0.0
        %978 = vmatprep.subr.mxu0 0.0
        %979 = vmatpush1.xpose.msra.mxu0 0.0
        %980 = vmatprep.subr.mxu0 0.0
        %981 = vmatpush1.xpose.msra.mxu0 0.0
        %982 = vmatprep.subr.mxu0 0.0
        %983 = vmatpush1.xpose.msra.mxu0 0.0
        %984 = vmatprep.subr.mxu0 0.0
        %985 = vmatpush1.xpose.msra.mxu0 0.0
        %986 = vmatprep.subr.mxu0 0.0
        %987 = vmatpush1.xpose.msra.mxu0 0.0
        %988 = vmatprep.subr.mxu0 0.0
        %989 = vmatpush1.xpose.msra.mxu0 0.0
        %990 = vmatprep.subr.mxu0 0.0
        %991 = vmatpush1.xpose.msra.mxu0 0.0
        %992 = vmatprep.subr.mxu0 0.0
        %993 = vmatpush1.xpose.msra.mxu0 0.0
        %994 = vmatprep.subr.mxu0 0.0
        %995 = vmatpush1.xpose.msra.mxu0 0.0
        %996 = vmatprep.subr.mxu0 0.0
        %997 = vmatpush1.xpose.msra.mxu0 0.0
        %998 = vmatprep.subr.mxu0 0.0
        %999 = vmatpush1.xpose.msra.mxu0 0.0
        %1000 = vmatprep.subr.mxu0 0.0
        %1001 = vmatpush1.xpose.msra.mxu0 0.0
        %1002 = vmatprep.subr.mxu0 0.0
        %1003 = vmatpush1.xpose.msra.mxu0 0.0
        %1004 = vmatprep.subr.mxu0 0.0
        %1005 = vmatpush1.xpose.msra.mxu0 0.0
        %1006 = vmatprep.subr.mxu0 0.0
        %1007 = vmatpush1.xpose.msra.mxu0 0.0
        %1008 = vmatprep.subr.mxu0 0.0
        %1009 = vmatpush1.xpose.msra.mxu0 0.0
        %1010 = vmatprep.mubr.f32.mxu0 0.0
        %1011 = vmatmul.mubr.f32.gmra.mrb[0].mxu0 %v942
        %v1012 = vpop.f32.mrb[0].mxu0
        %v1013 = vadd.f32 0.0, %v1012
        %v1014 = vpop.f32.mrb[0].mxu0
        %1015 = vdwg.mxu0
        %v1016 = vmul.f32 %v1013, 0.35355338
        %v1017 = vlaneseq
        %v1018 = vshrl.u32 %v1017, 7
        %v1019 = vsub.s32 0, %v1018
        %v1020 = vrot.slane %v937, %v1019
        %v1021 = vadd.f32 %v1016, %v1020
        %v1022 = vsel %vm941, %v1021, -inf
        %1023 = vmax.xlane.f32.xlu0 %v1022
        %v1024 = vpop.xlane.xlu0 %1023
        %v1025 = vsub.f32 %v1021, %v1024
        %v1026 = vmul.f32 %v1025, 1.442695
        %v1027 = vpow.pop %v1026
        %v1028 = vsel %vm941, %v1027, 0.0
        %1029 = vadd.xlane.f32.xlu0 %v1028
        %v1030 = vpop.xlane.xlu0 %1029
        %v1031 = vrcp.pop %v1030
        %v1032 = vmul.f32 %v1027, %v1031
        %1033 = vrot.lane.b32.xlu0 %v929, 64
        %v1034 = vpop.permute.xlu0 %1033
        %v1037 = vsel %vm941, %v1032, 0
        %1039 = vmatprep.subr.mxu0 0.0
        %1040 = vmatpush1.msra.mxu0 %v1034
        %1041 = vmatprep.subr.mxu0 0.0
        %1042 = vmatpush1.msra.mxu0 0.0
        %1043 = vmatprep.subr.mxu0 0.0
        %1044 = vmatpush1.msra.mxu0 0.0
        %1045 = vmatprep.subr.mxu0 0.0
        %1046 = vmatpush1.msra.mxu0 0.0
        %1047 = vmatprep.subr.mxu0 0.0
        %1048 = vmatpush1.msra.mxu0 0.0
        %1049 = vmatprep.subr.mxu0 0.0
        %1050 = vmatpush1.msra.mxu0 0.0
        %1051 = vmatprep.subr.mxu0 0.0
        %1052 = vmatpush1.msra.mxu0 0.0
        %1053 = vmatprep.subr.mxu0 0.0
        %1054 = vmatpush1.msra.mxu0 0.0
        %1055 = vmatprep.subr.mxu0 0.0
        %1056 = vmatpush1.msra.mxu0 0.0
        %1057 = vmatprep.subr.mxu0 0.0
        %1058 = vmatpush1.msra.mxu0 0.0
        %1059 = vmatprep.subr.mxu0 0.0
        %1060 = vmatpush1.msra.mxu0 0.0
        %1061 = vmatprep.subr.mxu0 0.0
        %1062 = vmatpush1.msra.mxu0 0.0
        %1063 = vmatprep.subr.mxu0 0.0
        %1064 = vmatpush1.msra.mxu0 0.0
        %1065 = vmatprep.subr.mxu0 0.0
        %1066 = vmatpush1.msra.mxu0 0.0
        %1067 = vmatprep.subr.mxu0 0.0
        %1068 = vmatpush1.msra.mxu0 0.0
        %1069 = vmatprep.subr.mxu0 0.0
        %1070 = vmatpush1.msra.mxu0 0.0
        %1071 = vmatprep.subr.mxu0 0.0
        %1072 = vmatpush1.msra.mxu0 0.0
        %1073 = vmatprep.subr.mxu0 0.0
        %1074 = vmatpush1.msra.mxu0 0.0
        %1075 = vmatprep.subr.mxu0 0.0
        %1076 = vmatpush1.msra.mxu0 0.0
        %1077 = vmatprep.subr.mxu0 0.0
        %1078 = vmatpush1.msra.mxu0 0.0
        %1079 = vmatprep.subr.mxu0 0.0
        %1080 = vmatpush1.msra.mxu0 0.0
        %1081 = vmatprep.subr.mxu0 0.0
        %1082 = vmatpush1.msra.mxu0 0.0
        %1083 = vmatprep.subr.mxu0 0.0
        %1084 = vmatpush1.msra.mxu0 0.0
        %1085 = vmatprep.subr.mxu0 0.0
        %1086 = vmatpush1.msra.mxu0 0.0
        %1087 = vmatprep.subr.mxu0 0.0
        %1088 = vmatpush1.msra.mxu0 0.0
        %1089 = vmatprep.subr.mxu0 0.0
        %1090 = vmatpush1.msra.mxu0 0.0
        %1091 = vmatprep.subr.mxu0 0.0
        %1092 = vmatpush1.msra.mxu0 0.0
        %1093 = vmatprep.subr.mxu0 0.0
        %1094 = vmatpush1.msra.mxu0 0.0
        %1095 = vmatprep.subr.mxu0 0.0
        %1096 = vmatpush1.msra.mxu0 0.0
        %1097 = vmatprep.subr.mxu0 0.0
        %1098 = vmatpush1.msra.mxu0 0.0
        %1099 = vmatprep.subr.mxu0 0.0
        %1100 = vmatpush1.msra.mxu0 0.0
        %1101 = vmatprep.subr.mxu0 0.0
        %1102 = vmatpush1.msra.mxu0 0.0
        %1103 = vmatprep.mubr.f32.mxu0 0.0
        %1104 = vmatmul.mubr.f32.gmra.mrb[0].mxu0 %v1037
        %v1105 = vpop.f32.mrb[0].mxu0
        %v1106 = vadd.f32 0.0, %v1105
        %v1107 = vpop.f32.mrb[0].mxu0
        %1108 = vdwg.mxu0
        %1109 = vrot.lane.b32.xlu0 %v929, 120
        %v1110 = vpop.permute.xlu0 %1109
        %1111 = vrot.lane.b32.xlu0 %v929, 88
        %v1112 = vpop.permute.xlu0 %1111
        %v1113 = vsel %vm941, %v1110, 0
        %v1115 = vsel %vm941, %v1112, 0
        %1117 = vmatprep.subr.mxu0 0.0
        %1118 = vmatpush1.xpose.msra.mxu0 %v1115
        %1119 = vmatprep.subr.mxu0 0.0
        %1120 = vmatpush1.xpose.msra.mxu0 0.0
        %1121 = vmatprep.subr.mxu0 0.0
        %1122 = vmatpush1.xpose.msra.mxu0 0.0
        %1123 = vmatprep.subr.mxu0 0.0
        %1124 = vmatpush1.xpose.msra.mxu0 0.0
        %1125 = vmatprep.subr.mxu0 0.0
        %1126 = vmatpush1.xpose.msra.mxu0 0.0
        %1127 = vmatprep.subr.mxu0 0.0
        %1128 = vmatpush1.xpose.msra.mxu0 0.0
        %1129 = vmatprep.subr.mxu0 0.0
        %1130 = vmatpush1.xpose.msra.mxu0 0.0
        %1131 = vmatprep.subr.mxu0 0.0
        %1132 = vmatpush1.xpose.msra.mxu0 0.0
        %1133 = vmatprep.subr.mxu0 0.0
        %1134 = vmatpush1.xpose.msra.mxu0 0.0
        %1135 = vmatprep.subr.mxu0 0.0
        %1136 = vmatpush1.xpose.msra.mxu0 0.0
        %1137 = vmatprep.subr.mxu0 0.0
        %1138 = vmatpush1.xpose.msra.mxu0 0.0
        %1139 = vmatprep.subr.mxu0 0.0
        %1140 = vmatpush1.xpose.msra.mxu0 0.0
        %1141 = vmatprep.subr.mxu0 0.0
        %1142 = vmatpush1.xpose.msra.mxu0 0.0
        %1143 = vmatprep.subr.mxu0 0.0
        %1144 = vmatpush1.xpose.msra.mxu0 0.0
        %1145 = vmatprep.subr.mxu0 0.0
        %1146 = vmatpush1.xpose.msra.mxu0 0.0
        %1147 = vmatprep.subr.mxu0 0.0
        %1148 = vmatpush1.xpose.msra.mxu0 0.0
        %1149 = vmatprep.subr.mxu0 0.0
        %1150 = vmatpush1.xpose.msra.mxu0 0.0
        %1151 = vmatprep.subr.mxu0 0.0
        %1152 = vmatpush1.xpose.msra.mxu0 0.0
        %1153 = vmatprep.subr.mxu0 0.0
        %1154 = vmatpush1.xpose.msra.mxu0 0.0
        %1155 = vmatprep.subr.mxu0 0.0
        %1156 = vmatpush1.xpose.msra.mxu0 0.0
        %1157 = vmatprep.subr.mxu0 0.0
        %1158 = vmatpush1.xpose.msra.mxu0 0.0
        %1159 = vmatprep.subr.mxu0 0.0
        %1160 = vmatpush1.xpose.msra.mxu0 0.0
        %1161 = vmatprep.subr.mxu0 0.0
        %1162 = vmatpush1.xpose.msra.mxu0 0.0
        %1163 = vmatprep.subr.mxu0 0.0
        %1164 = vmatpush1.xpose.msra.mxu0 0.0
        %1165 = vmatprep.subr.mxu0 0.0
        %1166 = vmatpush1.xpose.msra.mxu0 0.0
        %1167 = vmatprep.subr.mxu0 0.0
        %1168 = vmatpush1.xpose.msra.mxu0 0.0
        %1169 = vmatprep.subr.mxu0 0.0
        %1170 = vmatpush1.xpose.msra.mxu0 0.0
        %1171 = vmatprep.subr.mxu0 0.0
        %1172 = vmatpush1.xpose.msra.mxu0 0.0
        %1173 = vmatprep.subr.mxu0 0.0
        %1174 = vmatpush1.xpose.msra.mxu0 0.0
        %1175 = vmatprep.subr.mxu0 0.0
        %1176 = vmatpush1.xpose.msra.mxu0 0.0
        %1177 = vmatprep.subr.mxu0 0.0
        %1178 = vmatpush1.xpose.msra.mxu0 0.0
        %1179 = vmatprep.subr.mxu0 0.0
        %1180 = vmatpush1.xpose.msra.mxu0 0.0
        %1181 = vmatprep.mubr.f32.mxu0 0.0
        %1182 = vmatmul.mubr.f32.gmra.mrb[0].mxu0 %v1113
        %v1183 = vpop.f32.mrb[0].mxu0
        %v1184 = vadd.f32 0.0, %v1183
        %v1185 = vpop.f32.mrb[0].mxu0
        %1186 = vdwg.mxu0
        %v1187 = vmul.f32 %v1184, 0.35355338
        %v1188 = vadd.f32 %v1187, %v1020
        %v1189 = vsel %vm941, %v1188, -inf
        %1190 = vmax.xlane.f32.xlu0 %v1189
        %v1191 = vpop.xlane.xlu0 %1190
        %v1192 = vsub.f32 %v1188, %v1191
        %v1193 = vmul.f32 %v1192, 1.442695
        %v1194 = vpow.pop %v1193
        %v1195 = vsel %vm941, %v1194, 0.0
        %1196 = vadd.xlane.f32.xlu0 %v1195
        %v1197 = vpop.xlane.xlu0 %1196
        %v1198 = vrcp.pop %v1197
        %v1199 = vmul.f32 %v1194, %v1198
        %1200 = vrot.lane.b32.xlu0 %v929, 56
        %v1201 = vpop.permute.xlu0 %1200
        %v1204 = vsel %vm941, %v1199, 0
        %1206 = vmatprep.subr.mxu0 0.0
        %1207 = vmatpush1.msra.mxu0 %v1201
        %1208 = vmatprep.subr.mxu0 0.0
        %1209 = vmatpush1.msra.mxu0 0.0
        %1210 = vmatprep.subr.mxu0 0.0
        %1211 = vmatpush1.msra.mxu0 0.0
        %1212 = vmatprep.subr.mxu0 0.0
        %1213 = vmatpush1.msra.mxu0 0.0
        %1214 = vmatprep.subr.mxu0 0.0
        %1215 = vmatpush1.msra.mxu0 0.0
        %1216 = vmatprep.subr.mxu0 0.0
        %1217 = vmatpush1.msra.mxu0 0.0
        %1218 = vmatprep.subr.mxu0 0.0
        %1219 = vmatpush1.msra.mxu0 0.0
        %1220 = vmatprep.subr.mxu0 0.0
        %1221 = vmatpush1.msra.mxu0 0.0
        %1222 = vmatprep.subr.mxu0 0.0
        %1223 = vmatpush1.msra.mxu0 0.0
        %1224 = vmatprep.subr.mxu0 0.0
        %1225 = vmatpush1.msra.mxu0 0.0
        %1226 = vmatprep.subr.mxu0 0.0
        %1227 = vmatpush1.msra.mxu0 0.0
        %1228 = vmatprep.subr.mxu0 0.0
        %1229 = vmatpush1.msra.mxu0 0.0
        %1230 = vmatprep.subr.mxu0 0.0
        %1231 = vmatpush1.msra.mxu0 0.0
        %1232 = vmatprep.subr.mxu0 0.0
        %1233 = vmatpush1.msra.mxu0 0.0
        %1234 = vmatprep.subr.mxu0 0.0
        %1235 = vmatpush1.msra.mxu0 0.0
        %1236 = vmatprep.subr.mxu0 0.0
        %1237 = vmatpush1.msra.mxu0 0.0
        %1238 = vmatprep.subr.mxu0 0.0
        %1239 = vmatpush1.msra.mxu0 0.0
        %1240 = vmatprep.subr.mxu0 0.0
        %1241 = vmatpush1.msra.mxu0 0.0
        %1242 = vmatprep.subr.mxu0 0.0
        %1243 = vmatpush1.msra.mxu0 0.0
        %1244 = vmatprep.subr.mxu0 0.0
        %1245 = vmatpush1.msra.mxu0 0.0
        %1246 = vmatprep.subr.mxu0 0.0
        %1247 = vmatpush1.msra.mxu0 0.0
        %1248 = vmatprep.subr.mxu0 0.0
        %1249 = vmatpush1.msra.mxu0 0.0
        %1250 = vmatprep.subr.mxu0 0.0
        %1251 = vmatpush1.msra.mxu0 0.0
        %1252 = vmatprep.subr.mxu0 0.0
        %1253 = vmatpush1.msra.mxu0 0.0
        %1254 = vmatprep.subr.mxu0 0.0
        %1255 = vmatpush1.msra.mxu0 0.0
        %1256 = vmatprep.subr.mxu0 0.0
        %1257 = vmatpush1.msra.mxu0 0.0
        %1258 = vmatprep.subr.mxu0 0.0
        %1259 = vmatpush1.msra.mxu0 0.0
        %1260 = vmatprep.subr.mxu0 0.0
        %1261 = vmatpush1.msra.mxu0 0.0
        %1262 = vmatprep.subr.mxu0 0.0
        %1263 = vmatpush1.msra.mxu0 0.0
        %1264 = vmatprep.subr.mxu0 0.0
        %1265 = vmatpush1.msra.mxu0 0.0
        %1266 = vmatprep.subr.mxu0 0.0
        %1267 = vmatpush1.msra.mxu0 0.0
        %1268 = vmatprep.subr.mxu0 0.0
        %1269 = vmatpush1.msra.mxu0 0.0
        %1270 = vmatprep.mubr.f32.mxu0 0.0
        %1271 = vmatmul.mubr.f32.gmra.mrb[0].mxu0 %v1204
        %v1272 = vpop.f32.mrb[0].mxu0
        %v1273 = vadd.f32 0.0, %v1272
        %v1274 = vpop.f32.mrb[0].mxu0
        %1275 = vdwg.mxu0
        %1276 = vrot.lane.b32.xlu0 %v929, 112
        %v1277 = vpop.permute.xlu0 %1276
        %1278 = vrot.lane.b32.xlu0 %v929, 80
        %v1279 = vpop.permute.xlu0 %1278
        %v1280 = vsel %vm941, %v1277, 0
        %v1282 = vsel %vm941, %v1279, 0
        %1284 = vmatprep.subr.mxu0 0.0
        %1285 = vmatpush1.xpose.msra.mxu0 %v1282
        %1286 = vmatprep.subr.mxu0 0.0
        %1287 = vmatpush1.xpose.msra.mxu0 0.0
        %1288 = vmatprep.subr.mxu0 0.0
        %1289 = vmatpush1.xpose.msra.mxu0 0.0
        %1290 = vmatprep.subr.mxu0 0.0
        %1291 = vmatpush1.xpose.msra.mxu0 0.0
        %1292 = vmatprep.subr.mxu0 0.0
        %1293 = vmatpush1.xpose.msra.mxu0 0.0
        %1294 = vmatprep.subr.mxu0 0.0
        %1295 = vmatpush1.xpose.msra.mxu0 0.0
        %1296 = vmatprep.subr.mxu0 0.0
        %1297 = vmatpush1.xpose.msra.mxu0 0.0
        %1298 = vmatprep.subr.mxu0 0.0
        %1299 = vmatpush1.xpose.msra.mxu0 0.0
        %1300 = vmatprep.subr.mxu0 0.0
        %1301 = vmatpush1.xpose.msra.mxu0 0.0
        %1302 = vmatprep.subr.mxu0 0.0
        %1303 = vmatpush1.xpose.msra.mxu0 0.0
        %1304 = vmatprep.subr.mxu0 0.0
        %1305 = vmatpush1.xpose.msra.mxu0 0.0
        %1306 = vmatprep.subr.mxu0 0.0
        %1307 = vmatpush1.xpose.msra.mxu0 0.0
        %1308 = vmatprep.subr.mxu0 0.0
        %1309 = vmatpush1.xpose.msra.mxu0 0.0
        %1310 = vmatprep.subr.mxu0 0.0
        %1311 = vmatpush1.xpose.msra.mxu0 0.0
        %1312 = vmatprep.subr.mxu0 0.0
        %1313 = vmatpush1.xpose.msra.mxu0 0.0
        %1314 = vmatprep.subr.mxu0 0.0
        %1315 = vmatpush1.xpose.msra.mxu0 0.0
        %1316 = vmatprep.subr.mxu0 0.0
        %1317 = vmatpush1.xpose.msra.mxu0 0.0
        %1318 = vmatprep.subr.mxu0 0.0
        %1319 = vmatpush1.xpose.msra.mxu0 0.0
        %1320 = vmatprep.subr.mxu0 0.0
        %1321 = vmatpush1.xpose.msra.mxu0 0.0
        %1322 = vmatprep.subr.mxu0 0.0
        %1323 = vmatpush1.xpose.msra.mxu0 0.0
        %1324 = vmatprep.subr.mxu0 0.0
        %1325 = vmatpush1.xpose.msra.mxu0 0.0
        %1326 = vmatprep.subr.mxu0 0.0
        %1327 = vmatpush1.xpose.msra.mxu0 0.0
        %1328 = vmatprep.subr.mxu0 0.0
        %1329 = vmatpush1.xpose.msra.mxu0 0.0
        %1330 = vmatprep.subr.mxu0 0.0
        %1331 = vmatpush1.xpose.msra.mxu0 0.0
        %1332 = vmatprep.subr.mxu0 0.0
        %1333 = vmatpush1.xpose.msra.mxu0 0.0
        %1334 = vmatprep.subr.mxu0 0.0
        %1335 = vmatpush1.xpose.msra.mxu0 0.0
        %1336 = vmatprep.subr.mxu0 0.0
        %1337 = vmatpush1.xpose.msra.mxu0 0.0
        %1338 = vmatprep.subr.mxu0 0.0
        %1339 = vmatpush1.xpose.msra.mxu0 0.0
        %1340 = vmatprep.subr.mxu0 0.0
        %1341 = vmatpush1.xpose.msra.mxu0 0.0
        %1342 = vmatprep.subr.mxu0 0.0
        %1343 = vmatpush1.xpose.msra.mxu0 0.0
        %1344 = vmatprep.subr.mxu0 0.0
        %1345 = vmatpush1.xpose.msra.mxu0 0.0
        %1346 = vmatprep.subr.mxu0 0.0
        %1347 = vmatpush1.xpose.msra.mxu0 0.0
        %1348 = vmatprep.mubr.f32.mxu0 0.0
        %1349 = vmatmul.mubr.f32.gmra.mrb[0].mxu0 %v1280
        %v1350 = vpop.f32.mrb[0].mxu0
        %v1351 = vadd.f32 0.0, %v1350
        %v1352 = vpop.f32.mrb[0].mxu0
        %1353 = vdwg.mxu0
        %v1354 = vmul.f32 %v1351, 0.35355338
        %v1355 = vadd.f32 %v1354, %v1020
        %v1356 = vsel %vm941, %v1355, -inf
        %1357 = vmax.xlane.f32.xlu0 %v1356
        %v1358 = vpop.xlane.xlu0 %1357
        %v1359 = vsub.f32 %v1355, %v1358
        %v1360 = vmul.f32 %v1359, 1.442695
        %v1361 = vpow.pop %v1360
        %v1362 = vsel %vm941, %v1361, 0.0
        %1363 = vadd.xlane.f32.xlu0 %v1362
        %v1364 = vpop.xlane.xlu0 %1363
        %v1365 = vrcp.pop %v1364
        %v1366 = vmul.f32 %v1361, %v1365
        %1367 = vrot.lane.b32.xlu0 %v929, 48
        %v1368 = vpop.permute.xlu0 %1367
        %v1371 = vsel %vm941, %v1366, 0
        %1373 = vmatprep.subr.mxu0 0.0
        %1374 = vmatpush1.msra.mxu0 %v1368
        %1375 = vmatprep.subr.mxu0 0.0
        %1376 = vmatpush1.msra.mxu0 0.0
        %1377 = vmatprep.subr.mxu0 0.0
        %1378 = vmatpush1.msra.mxu0 0.0
        %1379 = vmatprep.subr.mxu0 0.0
        %1380 = vmatpush1.msra.mxu0 0.0
        %1381 = vmatprep.subr.mxu0 0.0
        %1382 = vmatpush1.msra.mxu0 0.0
        %1383 = vmatprep.subr.mxu0 0.0
        %1384 = vmatpush1.msra.mxu0 0.0
        %1385 = vmatprep.subr.mxu0 0.0
        %1386 = vmatpush1.msra.mxu0 0.0
        %1387 = vmatprep.subr.mxu0 0.0
        %1388 = vmatpush1.msra.mxu0 0.0
        %1389 = vmatprep.subr.mxu0 0.0
        %1390 = vmatpush1.msra.mxu0 0.0
        %1391 = vmatprep.subr.mxu0 0.0
        %1392 = vmatpush1.msra.mxu0 0.0
        %1393 = vmatprep.subr.mxu0 0.0
        %1394 = vmatpush1.msra.mxu0 0.0
        %1395 = vmatprep.subr.mxu0 0.0
        %1396 = vmatpush1.msra.mxu0 0.0
        %1397 = vmatprep.subr.mxu0 0.0
        %1398 = vmatpush1.msra.mxu0 0.0
        %1399 = vmatprep.subr.mxu0 0.0
        %1400 = vmatpush1.msra.mxu0 0.0
        %1401 = vmatprep.subr.mxu0 0.0
        %1402 = vmatpush1.msra.mxu0 0.0
        %1403 = vmatprep.subr.mxu0 0.0
        %1404 = vmatpush1.msra.mxu0 0.0
        %1405 = vmatprep.subr.mxu0 0.0
        %1406 = vmatpush1.msra.mxu0 0.0
        %1407 = vmatprep.subr.mxu0 0.0
        %1408 = vmatpush1.msra.mxu0 0.0
        %1409 = vmatprep.subr.mxu0 0.0
        %1410 = vmatpush1.msra.mxu0 0.0
        %1411 = vmatprep.subr.mxu0 0.0
        %1412 = vmatpush1.msra.mxu0 0.0
        %1413 = vmatprep.subr.mxu0 0.0
        %1414 = vmatpush1.msra.mxu0 0.0
        %1415 = vmatprep.subr.mxu0 0.0
        %1416 = vmatpush1.msra.mxu0 0.0
        %1417 = vmatprep.subr.mxu0 0.0
        %1418 = vmatpush1.msra.mxu0 0.0
        %1419 = vmatprep.subr.mxu0 0.0
        %1420 = vmatpush1.msra.mxu0 0.0
        %1421 = vmatprep.subr.mxu0 0.0
        %1422 = vmatpush1.msra.mxu0 0.0
        %1423 = vmatprep.subr.mxu0 0.0
        %1424 = vmatpush1.msra.mxu0 0.0
        %1425 = vmatprep.subr.mxu0 0.0
        %1426 = vmatpush1.msra.mxu0 0.0
        %1427 = vmatprep.subr.mxu0 0.0
        %1428 = vmatpush1.msra.mxu0 0.0
        %1429 = vmatprep.subr.mxu0 0.0
        %1430 = vmatpush1.msra.mxu0 0.0
        %1431 = vmatprep.subr.mxu0 0.0
        %1432 = vmatpush1.msra.mxu0 0.0
        %1433 = vmatprep.subr.mxu0 0.0
        %1434 = vmatpush1.msra.mxu0 0.0
        %1435 = vmatprep.subr.mxu0 0.0
        %1436 = vmatpush1.msra.mxu0 0.0
        %1437 = vmatprep.mubr.f32.mxu0 0.0
        %1438 = vmatmul.mubr.f32.gmra.mrb[0].mxu0 %v1371
        %v1439 = vpop.f32.mrb[0].mxu0
        %v1440 = vadd.f32 0.0, %v1439
        %v1441 = vpop.f32.mrb[0].mxu0
        %1442 = vdwg.mxu0
        %1443 = vrot.lane.b32.xlu0 %v929, 104
        %v1444 = vpop.permute.xlu0 %1443
        %1445 = vrot.lane.b32.xlu0 %v929, 72
        %v1446 = vpop.permute.xlu0 %1445
        %v1447 = vsel %vm941, %v1444, 0
        %v1449 = vsel %vm941, %v1446, 0
        %1451 = vmatprep.subr.mxu0 0.0
        %1452 = vmatpush1.xpose.msra.mxu0 %v1449
        %1453 = vmatprep.subr.mxu0 0.0
        %1454 = vmatpush1.xpose.msra.mxu0 0.0
        %1455 = vmatprep.subr.mxu0 0.0
        %1456 = vmatpush1.xpose.msra.mxu0 0.0
        %1457 = vmatprep.subr.mxu0 0.0
        %1458 = vmatpush1.xpose.msra.mxu0 0.0
        %1459 = vmatprep.subr.mxu0 0.0
        %1460 = vmatpush1.xpose.msra.mxu0 0.0
        %1461 = vmatprep.subr.mxu0 0.0
        %1462 = vmatpush1.xpose.msra.mxu0 0.0
        %1463 = vmatprep.subr.mxu0 0.0
        %1464 = vmatpush1.xpose.msra.mxu0 0.0
        %1465 = vmatprep.subr.mxu0 0.0
        %1466 = vmatpush1.xpose.msra.mxu0 0.0
        %1467 = vmatprep.subr.mxu0 0.0
        %1468 = vmatpush1.xpose.msra.mxu0 0.0
        %1469 = vmatprep.subr.mxu0 0.0
        %1470 = vmatpush1.xpose.msra.mxu0 0.0
        %1471 = vmatprep.subr.mxu0 0.0
        %1472 = vmatpush1.xpose.msra.mxu0 0.0
        %1473 = vmatprep.subr.mxu0 0.0
        %1474 = vmatpush1.xpose.msra.mxu0 0.0
        %1475 = vmatprep.subr.mxu0 0.0
        %1476 = vmatpush1.xpose.msra.mxu0 0.0
        %1477 = vmatprep.subr.mxu0 0.0
        %1478 = vmatpush1.xpose.msra.mxu0 0.0
        %1479 = vmatprep.subr.mxu0 0.0
        %1480 = vmatpush1.xpose.msra.mxu0 0.0
        %1481 = vmatprep.subr.mxu0 0.0
        %1482 = vmatpush1.xpose.msra.mxu0 0.0
        %1483 = vmatprep.subr.mxu0 0.0
        %1484 = vmatpush1.xpose.msra.mxu0 0.0
        %1485 = vmatprep.subr.mxu0 0.0
        %1486 = vmatpush1.xpose.msra.mxu0 0.0
        %1487 = vmatprep.subr.mxu0 0.0
        %1488 = vmatpush1.xpose.msra.mxu0 0.0
        %1489 = vmatprep.subr.mxu0 0.0
        %1490 = vmatpush1.xpose.msra.mxu0 0.0
        %1491 = vmatprep.subr.mxu0 0.0
        %1492 = vmatpush1.xpose.msra.mxu0 0.0
        %1493 = vmatprep.subr.mxu0 0.0
        %1494 = vmatpush1.xpose.msra.mxu0 0.0
        %1495 = vmatprep.subr.mxu0 0.0
        %1496 = vmatpush1.xpose.msra.mxu0 0.0
        %1497 = vmatprep.subr.mxu0 0.0
        %1498 = vmatpush1.xpose.msra.mxu0 0.0
        %1499 = vmatprep.subr.mxu0 0.0
        %1500 = vmatpush1.xpose.msra.mxu0 0.0
        %1501 = vmatprep.subr.mxu0 0.0
        %1502 = vmatpush1.xpose.msra.mxu0 0.0
        %1503 = vmatprep.subr.mxu0 0.0
        %1504 = vmatpush1.xpose.msra.mxu0 0.0
        %1505 = vmatprep.subr.mxu0 0.0
        %1506 = vmatpush1.xpose.msra.mxu0 0.0
        %1507 = vmatprep.subr.mxu0 0.0
        %1508 = vmatpush1.xpose.msra.mxu0 0.0
        %1509 = vmatprep.subr.mxu0 0.0
        %1510 = vmatpush1.xpose.msra.mxu0 0.0
        %1511 = vmatprep.subr.mxu0 0.0
        %1512 = vmatpush1.xpose.msra.mxu0 0.0
        %1513 = vmatprep.subr.mxu0 0.0
        %1514 = vmatpush1.xpose.msra.mxu0 0.0
        %1515 = vmatprep.mubr.f32.mxu0 0.0
        %1516 = vmatmul.mubr.f32.gmra.mrb[0].mxu0 %v1447
        %v1517 = vpop.f32.mrb[0].mxu0
        %v1518 = vadd.f32 0.0, %v1517
        %v1519 = vpop.f32.mrb[0].mxu0
        %1520 = vdwg.mxu0
        %v1521 = vmul.f32 %v1518, 0.35355338
        %v1522 = vadd.f32 %v1521, %v1020
        %v1523 = vsel %vm941, %v1522, -inf
        %1524 = vmax.xlane.f32.xlu0 %v1523
        %v1525 = vpop.xlane.xlu0 %1524
        %v1526 = vsub.f32 %v1522, %v1525
        %v1527 = vmul.f32 %v1526, 1.442695
        %v1528 = vpow.pop %v1527
        %v1529 = vsel %vm941, %v1528, 0.0
        %1530 = vadd.xlane.f32.xlu0 %v1529
        %v1531 = vpop.xlane.xlu0 %1530
        %v1532 = vrcp.pop %v1531
        %v1533 = vmul.f32 %v1528, %v1532
        %1534 = vrot.lane.b32.xlu0 %v929, 40
        %v1535 = vpop.permute.xlu0 %1534
        %v1538 = vsel %vm941, %v1533, 0
        %1540 = vmatprep.subr.mxu0 0.0
        %1541 = vmatpush1.msra.mxu0 %v1535
        %1542 = vmatprep.subr.mxu0 0.0
        %1543 = vmatpush1.msra.mxu0 0.0
        %1544 = vmatprep.subr.mxu0 0.0
        %1545 = vmatpush1.msra.mxu0 0.0
        %1546 = vmatprep.subr.mxu0 0.0
        %1547 = vmatpush1.msra.mxu0 0.0
        %1548 = vmatprep.subr.mxu0 0.0
        %1549 = vmatpush1.msra.mxu0 0.0
        %1550 = vmatprep.subr.mxu0 0.0
        %1551 = vmatpush1.msra.mxu0 0.0
        %1552 = vmatprep.subr.mxu0 0.0
        %1553 = vmatpush1.msra.mxu0 0.0
        %1554 = vmatprep.subr.mxu0 0.0
        %1555 = vmatpush1.msra.mxu0 0.0
        %1556 = vmatprep.subr.mxu0 0.0
        %1557 = vmatpush1.msra.mxu0 0.0
        %1558 = vmatprep.subr.mxu0 0.0
        %1559 = vmatpush1.msra.mxu0 0.0
        %1560 = vmatprep.subr.mxu0 0.0
        %1561 = vmatpush1.msra.mxu0 0.0
        %1562 = vmatprep.subr.mxu0 0.0
        %1563 = vmatpush1.msra.mxu0 0.0
        %1564 = vmatprep.subr.mxu0 0.0
        %1565 = vmatpush1.msra.mxu0 0.0
        %1566 = vmatprep.subr.mxu0 0.0
        %1567 = vmatpush1.msra.mxu0 0.0
        %1568 = vmatprep.subr.mxu0 0.0
        %1569 = vmatpush1.msra.mxu0 0.0
        %1570 = vmatprep.subr.mxu0 0.0
        %1571 = vmatpush1.msra.mxu0 0.0
        %1572 = vmatprep.subr.mxu0 0.0
        %1573 = vmatpush1.msra.mxu0 0.0
        %1574 = vmatprep.subr.mxu0 0.0
        %1575 = vmatpush1.msra.mxu0 0.0
        %1576 = vmatprep.subr.mxu0 0.0
        %1577 = vmatpush1.msra.mxu0 0.0
        %1578 = vmatprep.subr.mxu0 0.0
        %1579 = vmatpush1.msra.mxu0 0.0
        %1580 = vmatprep.subr.mxu0 0.0
        %1581 = vmatpush1.msra.mxu0 0.0
        %1582 = vmatprep.subr.mxu0 0.0
        %1583 = vmatpush1.msra.mxu0 0.0
        %1584 = vmatprep.subr.mxu0 0.0
        %1585 = vmatpush1.msra.mxu0 0.0
        %1586 = vmatprep.subr.mxu0 0.0
        %1587 = vmatpush1.msra.mxu0 0.0
        %1588 = vmatprep.subr.mxu0 0.0
        %1589 = vmatpush1.msra.mxu0 0.0
        %1590 = vmatprep.subr.mxu0 0.0
        %1591 = vmatpush1.msra.mxu0 0.0
        %1592 = vmatprep.subr.mxu0 0.0
        %1593 = vmatpush1.msra.mxu0 0.0
        %1594 = vmatprep.subr.mxu0 0.0
        %1595 = vmatpush1.msra.mxu0 0.0
        %1596 = vmatprep.subr.mxu0 0.0
        %1597 = vmatpush1.msra.mxu0 0.0
        %1598 = vmatprep.subr.mxu0 0.0
        %1599 = vmatpush1.msra.mxu0 0.0
        %1600 = vmatprep.subr.mxu0 0.0
        %1601 = vmatpush1.msra.mxu0 0.0
        %1602 = vmatprep.subr.mxu0 0.0
        %1603 = vmatpush1.msra.mxu0 0.0
        %1604 = vmatprep.mubr.f32.mxu0 0.0
        %1605 = vmatmul.mubr.f32.gmra.mrb[0].mxu0 %v1538
        %v1606 = vpop.f32.mrb[0].mxu0
        %v1607 = vadd.f32 0.0, %v1606
        %v1608 = vpop.f32.mrb[0].mxu0
        %1609 = vdwg.mxu0
        %1611 = vrot.lane.b32.xlu0 %v1273, 8
        %v1612 = vpop.permute.xlu0 %1611
        %1615 = vrot.lane.b32.xlu0 %v1440, 16
        %v1616 = vpop.permute.xlu0 %1615
        %1619 = vrot.lane.b32.xlu0 %v1607, 24
        %v1620 = vpop.permute.xlu0 %1619
        %v1622 = vsel %vm941, %v1106, %v1612
        %vm1623 = vcmask 130048
        %v1624 = vsel %vm1623, %v1622, %v1616
        %vm1625 = vcmask 195584
        %v1626 = vsel %vm1625, %v1624, %v1620
        %v1627 = vld [vmem:[%s1 + $0x1] sm:$0x1]
        %1629 = vrot.lane.b32.xlu0 %v934, 96
        %v1630 = vpop.permute.xlu0 %1629
        %v1631 = vsel %vm941, %v934, 0
        %v1633 = vsel %vm941, %v1630, 0
        %1635 = vmatprep.subr.mxu0 0.0
        %1636 = vmatpush1.xpose.msra.mxu0 %v1633
        %1637 = vmatprep.subr.mxu0 0.0
        %1638 = vmatpush1.xpose.msra.mxu0 0.0
        %1639 = vmatprep.subr.mxu0 0.0
        %1640 = vmatpush1.xpose.msra.mxu0 0.0
        %1641 = vmatprep.subr.mxu0 0.0
        %1642 = vmatpush1.xpose.msra.mxu0 0.0
        %1643 = vmatprep.subr.mxu0 0.0
        %1644 = vmatpush1.xpose.msra.mxu0 0.0
        %1645 = vmatprep.subr.mxu0 0.0
        %1646 = vmatpush1.xpose.msra.mxu0 0.0
        %1647 = vmatprep.subr.mxu0 0.0
        %1648 = vmatpush1.xpose.msra.mxu0 0.0
        %1649 = vmatprep.subr.mxu0 0.0
        %1650 = vmatpush1.xpose.msra.mxu0 0.0
        %1651 = vmatprep.subr.mxu0 0.0
        %1652 = vmatpush1.xpose.msra.mxu0 0.0
        %1653 = vmatprep.subr.mxu0 0.0
        %1654 = vmatpush1.xpose.msra.mxu0 0.0
        %1655 = vmatprep.subr.mxu0 0.0
        %1656 = vmatpush1.xpose.msra.mxu0 0.0
        %1657 = vmatprep.subr.mxu0 0.0
        %1658 = vmatpush1.xpose.msra.mxu0 0.0
        %1659 = vmatprep.subr.mxu0 0.0
        %1660 = vmatpush1.xpose.msra.mxu0 0.0
        %1661 = vmatprep.subr.mxu0 0.0
        %1662 = vmatpush1.xpose.msra.mxu0 0.0
        %1663 = vmatprep.subr.mxu0 0.0
        %1664 = vmatpush1.xpose.msra.mxu0 0.0
        %1665 = vmatprep.subr.mxu0 0.0
        %1666 = vmatpush1.xpose.msra.mxu0 0.0
        %1667 = vmatprep.subr.mxu0 0.0
        %1668 = vmatpush1.xpose.msra.mxu0 0.0
        %1669 = vmatprep.subr.mxu0 0.0
        %1670 = vmatpush1.xpose.msra.mxu0 0.0
        %1671 = vmatprep.subr.mxu0 0.0
        %1672 = vmatpush1.xpose.msra.mxu0 0.0
        %1673 = vmatprep.subr.mxu0 0.0
        %1674 = vmatpush1.xpose.msra.mxu0 0.0
        %1675 = vmatprep.subr.mxu0 0.0
        %1676 = vmatpush1.xpose.msra.mxu0 0.0
        %1677 = vmatprep.subr.mxu0 0.0
        %1678 = vmatpush1.xpose.msra.mxu0 0.0
        %1679 = vmatprep.subr.mxu0 0.0
        %1680 = vmatpush1.xpose.msra.mxu0 0.0
        %1681 = vmatprep.subr.mxu0 0.0
        %1682 = vmatpush1.xpose.msra.mxu0 0.0
        %1683 = vmatprep.subr.mxu0 0.0
        %1684 = vmatpush1.xpose.msra.mxu0 0.0
        %1685 = vmatprep.subr.mxu0 0.0
        %1686 = vmatpush1.xpose.msra.mxu0 0.0
        %1687 = vmatprep.subr.mxu0 0.0
        %1688 = vmatpush1.xpose.msra.mxu0 0.0
        %1689 = vmatprep.subr.mxu0 0.0
        %1690 = vmatpush1.xpose.msra.mxu0 0.0
        %1691 = vmatprep.subr.mxu0 0.0
        %1692 = vmatpush1.xpose.msra.mxu0 0.0
        %1693 = vmatprep.subr.mxu0 0.0
        %1694 = vmatpush1.xpose.msra.mxu0 0.0
        %1695 = vmatprep.subr.mxu0 0.0
        %1696 = vmatpush1.xpose.msra.mxu0 0.0
        %1697 = vmatprep.subr.mxu0 0.0
        %1698 = vmatpush1.xpose.msra.mxu0 0.0
        %1699 = vmatprep.mubr.f32.mxu0 0.0
        %1700 = vmatmul.mubr.f32.gmra.mrb[0].mxu0 %v1631
        %v1701 = vpop.f32.mrb[0].mxu0
        %v1702 = vadd.f32 0.0, %v1701
        %v1703 = vpop.f32.mrb[0].mxu0
        %1704 = vdwg.mxu0
        %v1705 = vmul.f32 %v1702, 0.35355338
        %v1706 = vlaneseq
        %v1707 = vshrl.u32 %v1706, 7
        %v1708 = vsub.s32 0, %v1707
        %v1709 = vrot.slane %v1627, %v1708
        %v1710 = vadd.f32 %v1705, %v1709
        %v1711 = vsel %vm941, %v1710, -inf
        %1712 = vmax.xlane.f32.xlu0 %v1711
        %v1713 = vpop.xlane.xlu0 %1712
        %v1714 = vsub.f32 %v1710, %v1713
        %v1715 = vmul.f32 %v1714, 1.442695
        %v1716 = vpow.pop %v1715
        %v1717 = vsel %vm941, %v1716, 0.0
        %1718 = vadd.xlane.f32.xlu0 %v1717
        %v1719 = vpop.xlane.xlu0 %1718
        %v1720 = vrcp.pop %v1719
        %v1721 = vmul.f32 %v1716, %v1720
        %1722 = vrot.lane.b32.xlu0 %v934, 64
        %v1723 = vpop.permute.xlu0 %1722
        %v1726 = vsel %vm941, %v1721, 0
        %1728 = vmatprep.subr.mxu0 0.0
        %1729 = vmatpush1.msra.mxu0 %v1723
        %1730 = vmatprep.subr.mxu0 0.0
        %1731 = vmatpush1.msra.mxu0 0.0
        %1732 = vmatprep.subr.mxu0 0.0
        %1733 = vmatpush1.msra.mxu0 0.0
        %1734 = vmatprep.subr.mxu0 0.0
        %1735 = vmatpush1.msra.mxu0 0.0
        %1736 = vmatprep.subr.mxu0 0.0
        %1737 = vmatpush1.msra.mxu0 0.0
        %1738 = vmatprep.subr.mxu0 0.0
        %1739 = vmatpush1.msra.mxu0 0.0
        %1740 = vmatprep.subr.mxu0 0.0
        %1741 = vmatpush1.msra.mxu0 0.0
        %1742 = vmatprep.subr.mxu0 0.0
        %1743 = vmatpush1.msra.mxu0 0.0
        %1744 = vmatprep.subr.mxu0 0.0
        %1745 = vmatpush1.msra.mxu0 0.0
        %1746 = vmatprep.subr.mxu0 0.0
        %1747 = vmatpush1.msra.mxu0 0.0
        %1748 = vmatprep.subr.mxu0 0.0
        %1749 = vmatpush1.msra.mxu0 0.0
        %1750 = vmatprep.subr.mxu0 0.0
        %1751 = vmatpush1.msra.mxu0 0.0
        %1752 = vmatprep.subr.mxu0 0.0
        %1753 = vmatpush1.msra.mxu0 0.0
        %1754 = vmatprep.subr.mxu0 0.0
        %1755 = vmatpush1.msra.mxu0 0.0
        %1756 = vmatprep.subr.mxu0 0.0
        %1757 = vmatpush1.msra.mxu0 0.0
        %1758 = vmatprep.subr.mxu0 0.0
        %1759 = vmatpush1.msra.mxu0 0.0
        %1760 = vmatprep.subr.mxu0 0.0
        %1761 = vmatpush1.msra.mxu0 0.0
        %1762 = vmatprep.subr.mxu0 0.0
        %1763 = vmatpush1.msra.mxu0 0.0
        %1764 = vmatprep.subr.mxu0 0.0
        %1765 = vmatpush1.msra.mxu0 0.0
        %1766 = vmatprep.subr.mxu0 0.0
        %1767 = vmatpush1.msra.mxu0 0.0
        %1768 = vmatprep.subr.mxu0 0.0
        %1769 = vmatpush1.msra.mxu0 0.0
        %1770 = vmatprep.subr.mxu0 0.0
        %1771 = vmatpush1.msra.mxu0 0.0
        %1772 = vmatprep.subr.mxu0 0.0
        %1773 = vmatpush1.msra.mxu0 0.0
        %1774 = vmatprep.subr.mxu0 0.0
        %1775 = vmatpush1.msra.mxu0 0.0
        %1776 = vmatprep.subr.mxu0 0.0
        %1777 = vmatpush1.msra.mxu0 0.0
        %1778 = vmatprep.subr.mxu0 0.0
        %1779 = vmatpush1.msra.mxu0 0.0
        %1780 = vmatprep.subr.mxu0 0.0
        %1781 = vmatpush1.msra.mxu0 0.0
        %1782 = vmatprep.subr.mxu0 0.0
        %1783 = vmatpush1.msra.mxu0 0.0
        %1784 = vmatprep.subr.mxu0 0.0
        %1785 = vmatpush1.msra.mxu0 0.0
        %1786 = vmatprep.subr.mxu0 0.0
        %1787 = vmatpush1.msra.mxu0 0.0
        %1788 = vmatprep.subr.mxu0 0.0
        %1789 = vmatpush1.msra.mxu0 0.0
        %1790 = vmatprep.subr.mxu0 0.0
        %1791 = vmatpush1.msra.mxu0 0.0
        %1792 = vmatprep.mubr.f32.mxu0 0.0
        %1793 = vmatmul.mubr.f32.gmra.mrb[0].mxu0 %v1726
        %v1794 = vpop.f32.mrb[0].mxu0
        %v1795 = vadd.f32 0.0, %v1794
        %v1796 = vpop.f32.mrb[0].mxu0
        %1797 = vdwg.mxu0
        %1798 = vrot.lane.b32.xlu0 %v934, 120
        %v1799 = vpop.permute.xlu0 %1798
        %1800 = vrot.lane.b32.xlu0 %v934, 88
        %v1801 = vpop.permute.xlu0 %1800
        %v1802 = vsel %vm941, %v1799, 0
        %v1804 = vsel %vm941, %v1801, 0
        %1806 = vmatprep.subr.mxu0 0.0
        %1807 = vmatpush1.xpose.msra.mxu0 %v1804
        %1808 = vmatprep.subr.mxu0 0.0
        %1809 = vmatpush1.xpose.msra.mxu0 0.0
        %1810 = vmatprep.subr.mxu0 0.0
        %1811 = vmatpush1.xpose.msra.mxu0 0.0
        %1812 = vmatprep.subr.mxu0 0.0
        %1813 = vmatpush1.xpose.msra.mxu0 0.0
        %1814 = vmatprep.subr.mxu0 0.0
        %1815 = vmatpush1.xpose.msra.mxu0 0.0
        %1816 = vmatprep.subr.mxu0 0.0
        %1817 = vmatpush1.xpose.msra.mxu0 0.0
        %1818 = vmatprep.subr.mxu0 0.0
        %1819 = vmatpush1.xpose.msra.mxu0 0.0
        %1820 = vmatprep.subr.mxu0 0.0
        %1821 = vmatpush1.xpose.msra.mxu0 0.0
        %1822 = vmatprep.subr.mxu0 0.0
        %1823 = vmatpush1.xpose.msra.mxu0 0.0
        %1824 = vmatprep.subr.mxu0 0.0
        %1825 = vmatpush1.xpose.msra.mxu0 0.0
        %1826 = vmatprep.subr.mxu0 0.0
        %1827 = vmatpush1.xpose.msra.mxu0 0.0
        %1828 = vmatprep.subr.mxu0 0.0
        %1829 = vmatpush1.xpose.msra.mxu0 0.0
        %1830 = vmatprep.subr.mxu0 0.0
        %1831 = vmatpush1.xpose.msra.mxu0 0.0
        %1832 = vmatprep.subr.mxu0 0.0
        %1833 = vmatpush1.xpose.msra.mxu0 0.0
        %1834 = vmatprep.subr.mxu0 0.0
        %1835 = vmatpush1.xpose.msra.mxu0 0.0
        %1836 = vmatprep.subr.mxu0 0.0
        %1837 = vmatpush1.xpose.msra.mxu0 0.0
        %1838 = vmatprep.subr.mxu0 0.0
        %1839 = vmatpush1.xpose.msra.mxu0 0.0
        %1840 = vmatprep.subr.mxu0 0.0
        %1841 = vmatpush1.xpose.msra.mxu0 0.0
        %1842 = vmatprep.subr.mxu0 0.0
        %1843 = vmatpush1.xpose.msra.mxu0 0.0
        %1844 = vmatprep.subr.mxu0 0.0
        %1845 = vmatpush1.xpose.msra.mxu0 0.0
        %1846 = vmatprep.subr.mxu0 0.0
        %1847 = vmatpush1.xpose.msra.mxu0 0.0
        %1848 = vmatprep.subr.mxu0 0.0
        %1849 = vmatpush1.xpose.msra.mxu0 0.0
        %1850 = vmatprep.subr.mxu0 0.0
        %1851 = vmatpush1.xpose.msra.mxu0 0.0
        %1852 = vmatprep.subr.mxu0 0.0
        %1853 = vmatpush1.xpose.msra.mxu0 0.0
        %1854 = vmatprep.subr.mxu0 0.0
        %1855 = vmatpush1.xpose.msra.mxu0 0.0
        %1856 = vmatprep.subr.mxu0 0.0
        %1857 = vmatpush1.xpose.msra.mxu0 0.0
        %1858 = vmatprep.subr.mxu0 0.0
        %1859 = vmatpush1.xpose.msra.mxu0 0.0
        %1860 = vmatprep.subr.mxu0 0.0
        %1861 = vmatpush1.xpose.msra.mxu0 0.0
        %1862 = vmatprep.subr.mxu0 0.0
        %1863 = vmatpush1.xpose.msra.mxu0 0.0
        %1864 = vmatprep.subr.mxu0 0.0
        %1865 = vmatpush1.xpose.msra.mxu0 0.0
        %1866 = vmatprep.subr.mxu0 0.0
        %1867 = vmatpush1.xpose.msra.mxu0 0.0
        %1868 = vmatprep.subr.mxu0 0.0
        %1869 = vmatpush1.xpose.msra.mxu0 0.0
        %1870 = vmatprep.mubr.f32.mxu0 0.0
        %1871 = vmatmul.mubr.f32.gmra.mrb[0].mxu0 %v1802
        %v1872 = vpop.f32.mrb[0].mxu0
        %v1873 = vadd.f32 0.0, %v1872
        %v1874 = vpop.f32.mrb[0].mxu0
        %1875 = vdwg.mxu0
        %v1876 = vmul.f32 %v1873, 0.35355338
        %v1877 = vadd.f32 %v1876, %v1709
        %v1878 = vsel %vm941, %v1877, -inf
        %1879 = vmax.xlane.f32.xlu0 %v1878
        %v1880 = vpop.xlane.xlu0 %1879
        %v1881 = vsub.f32 %v1877, %v1880
        %v1882 = vmul.f32 %v1881, 1.442695
        %v1883 = vpow.pop %v1882
        %v1884 = vsel %vm941, %v1883, 0.0
        %1885 = vadd.xlane.f32.xlu0 %v1884
        %v1886 = vpop.xlane.xlu0 %1885
        %v1887 = vrcp.pop %v1886
        %v1888 = vmul.f32 %v1883, %v1887
        %1889 = vrot.lane.b32.xlu0 %v934, 56
        %v1890 = vpop.permute.xlu0 %1889
        %v1893 = vsel %vm941, %v1888, 0
        %1895 = vmatprep.subr.mxu0 0.0
        %1896 = vmatpush1.msra.mxu0 %v1890
        %1897 = vmatprep.subr.mxu0 0.0
        %1898 = vmatpush1.msra.mxu0 0.0
        %1899 = vmatprep.subr.mxu0 0.0
        %1900 = vmatpush1.msra.mxu0 0.0
        %1901 = vmatprep.subr.mxu0 0.0
        %1902 = vmatpush1.msra.mxu0 0.0
        %1903 = vmatprep.subr.mxu0 0.0
        %1904 = vmatpush1.msra.mxu0 0.0
        %1905 = vmatprep.subr.mxu0 0.0
        %1906 = vmatpush1.msra.mxu0 0.0
        %1907 = vmatprep.subr.mxu0 0.0
        %1908 = vmatpush1.msra.mxu0 0.0
        %1909 = vmatprep.subr.mxu0 0.0
        %1910 = vmatpush1.msra.mxu0 0.0
        %1911 = vmatprep.subr.mxu0 0.0
        %1912 = vmatpush1.msra.mxu0 0.0
        %1913 = vmatprep.subr.mxu0 0.0
        %1914 = vmatpush1.msra.mxu0 0.0
        %1915 = vmatprep.subr.mxu0 0.0
        %1916 = vmatpush1.msra.mxu0 0.0
        %1917 = vmatprep.subr.mxu0 0.0
        %1918 = vmatpush1.msra.mxu0 0.0
        %1919 = vmatprep.subr.mxu0 0.0
        %1920 = vmatpush1.msra.mxu0 0.0
        %1921 = vmatprep.subr.mxu0 0.0
        %1922 = vmatpush1.msra.mxu0 0.0
        %1923 = vmatprep.subr.mxu0 0.0
        %1924 = vmatpush1.msra.mxu0 0.0
        %1925 = vmatprep.subr.mxu0 0.0
        %1926 = vmatpush1.msra.mxu0 0.0
        %1927 = vmatprep.subr.mxu0 0.0
        %1928 = vmatpush1.msra.mxu0 0.0
        %1929 = vmatprep.subr.mxu0 0.0
        %1930 = vmatpush1.msra.mxu0 0.0
        %1931 = vmatprep.subr.mxu0 0.0
        %1932 = vmatpush1.msra.mxu0 0.0
        %1933 = vmatprep.subr.mxu0 0.0
        %1934 = vmatpush1.msra.mxu0 0.0
        %1935 = vmatprep.subr.mxu0 0.0
        %1936 = vmatpush1.msra.mxu0 0.0
        %1937 = vmatprep.subr.mxu0 0.0
        %1938 = vmatpush1.msra.mxu0 0.0
        %1939 = vmatprep.subr.mxu0 0.0
        %1940 = vmatpush1.msra.mxu0 0.0
        %1941 = vmatprep.subr.mxu0 0.0
        %1942 = vmatpush1.msra.mxu0 0.0
        %1943 = vmatprep.subr.mxu0 0.0
        %1944 = vmatpush1.msra.mxu0 0.0
        %1945 = vmatprep.subr.mxu0 0.0
        %1946 = vmatpush1.msra.mxu0 0.0
        %1947 = vmatprep.subr.mxu0 0.0
        %1948 = vmatpush1.msra.mxu0 0.0
        %1949 = vmatprep.subr.mxu0 0.0
        %1950 = vmatpush1.msra.mxu0 0.0
        %1951 = vmatprep.subr.mxu0 0.0
        %1952 = vmatpush1.msra.mxu0 0.0
        %1953 = vmatprep.subr.mxu0 0.0
        %1954 = vmatpush1.msra.mxu0 0.0
        %1955 = vmatprep.subr.mxu0 0.0
        %1956 = vmatpush1.msra.mxu0 0.0
        %1957 = vmatprep.subr.mxu0 0.0
        %1958 = vmatpush1.msra.mxu0 0.0
        %1959 = vmatprep.mubr.f32.mxu0 0.0
        %1960 = vmatmul.mubr.f32.gmra.mrb[0].mxu0 %v1893
        %v1961 = vpop.f32.mrb[0].mxu0
        %v1962 = vadd.f32 0.0, %v1961
        %v1963 = vpop.f32.mrb[0].mxu0
        %1964 = vdwg.mxu0
        %1965 = vrot.lane.b32.xlu0 %v934, 112
        %v1966 = vpop.permute.xlu0 %1965
        %1967 = vrot.lane.b32.xlu0 %v934, 80
        %v1968 = vpop.permute.xlu0 %1967
        %v1969 = vsel %vm941, %v1966, 0
        %v1971 = vsel %vm941, %v1968, 0
        %1973 = vmatprep.subr.mxu0 0.0
        %1974 = vmatpush1.xpose.msra.mxu0 %v1971
        %1975 = vmatprep.subr.mxu0 0.0
        %1976 = vmatpush1.xpose.msra.mxu0 0.0
        %1977 = vmatprep.subr.mxu0 0.0
        %1978 = vmatpush1.xpose.msra.mxu0 0.0
        %1979 = vmatprep.subr.mxu0 0.0
        %1980 = vmatpush1.xpose.msra.mxu0 0.0
        %1981 = vmatprep.subr.mxu0 0.0
        %1982 = vmatpush1.xpose.msra.mxu0 0.0
        %1983 = vmatprep.subr.mxu0 0.0
        %1984 = vmatpush1.xpose.msra.mxu0 0.0
        %1985 = vmatprep.subr.mxu0 0.0
        %1986 = vmatpush1.xpose.msra.mxu0 0.0
        %1987 = vmatprep.subr.mxu0 0.0
        %1988 = vmatpush1.xpose.msra.mxu0 0.0
        %1989 = vmatprep.subr.mxu0 0.0
        %1990 = vmatpush1.xpose.msra.mxu0 0.0
        %1991 = vmatprep.subr.mxu0 0.0
        %1992 = vmatpush1.xpose.msra.mxu0 0.0
        %1993 = vmatprep.subr.mxu0 0.0
        %1994 = vmatpush1.xpose.msra.mxu0 0.0
        %1995 = vmatprep.subr.mxu0 0.0
        %1996 = vmatpush1.xpose.msra.mxu0 0.0
        %1997 = vmatprep.subr.mxu0 0.0
        %1998 = vmatpush1.xpose.msra.mxu0 0.0
        %1999 = vmatprep.subr.mxu0 0.0
        %2000 = vmatpush1.xpose.msra.mxu0 0.0
        %2001 = vmatprep.subr.mxu0 0.0
        %2002 = vmatpush1.xpose.msra.mxu0 0.0
        %2003 = vmatprep.subr.mxu0 0.0
        %2004 = vmatpush1.xpose.msra.mxu0 0.0
        %2005 = vmatprep.subr.mxu0 0.0
        %2006 = vmatpush1.xpose.msra.mxu0 0.0
        %2007 = vmatprep.subr.mxu0 0.0
        %2008 = vmatpush1.xpose.msra.mxu0 0.0
        %2009 = vmatprep.subr.mxu0 0.0
        %2010 = vmatpush1.xpose.msra.mxu0 0.0
        %2011 = vmatprep.subr.mxu0 0.0
        %2012 = vmatpush1.xpose.msra.mxu0 0.0
        %2013 = vmatprep.subr.mxu0 0.0
        %2014 = vmatpush1.xpose.msra.mxu0 0.0
        %2015 = vmatprep.subr.mxu0 0.0
        %2016 = vmatpush1.xpose.msra.mxu0 0.0
        %2017 = vmatprep.subr.mxu0 0.0
        %2018 = vmatpush1.xpose.msra.mxu0 0.0
        %2019 = vmatprep.subr.mxu0 0.0
        %2020 = vmatpush1.xpose.msra.mxu0 0.0
        %2021 = vmatprep.subr.mxu0 0.0
        %2022 = vmatpush1.xpose.msra.mxu0 0.0
        %2023 = vmatprep.subr.mxu0 0.0
        %2024 = vmatpush1.xpose.msra.mxu0 0.0
        %2025 = vmatprep.subr.mxu0 0.0
        %2026 = vmatpush1.xpose.msra.mxu0 0.0
        %2027 = vmatprep.subr.mxu0 0.0
        %2028 = vmatpush1.xpose.msra.mxu0 0.0
        %2029 = vmatprep.subr.mxu0 0.0
        %2030 = vmatpush1.xpose.msra.mxu0 0.0
        %2031 = vmatprep.subr.mxu0 0.0
        %2032 = vmatpush1.xpose.msra.mxu0 0.0
        %2033 = vmatprep.subr.mxu0 0.0
        %2034 = vmatpush1.xpose.msra.mxu0 0.0
        %2035 = vmatprep.subr.mxu0 0.0
        %2036 = vmatpush1.xpose.msra.mxu0 0.0
        %2037 = vmatprep.mubr.f32.mxu0 0.0
        %2038 = vmatmul.mubr.f32.gmra.mrb[0].mxu0 %v1969
        %v2039 = vpop.f32.mrb[0].mxu0
        %v2040 = vadd.f32 0.0, %v2039
        %v2041 = vpop.f32.mrb[0].mxu0
        %2042 = vdwg.mxu0
        %v2043 = vmul.f32 %v2040, 0.35355338
        %v2044 = vadd.f32 %v2043, %v1709
        %v2045 = vsel %vm941, %v2044, -inf
        %2046 = vmax.xlane.f32.xlu0 %v2045
        %v2047 = vpop.xlane.xlu0 %2046
        %v2048 = vsub.f32 %v2044, %v2047
        %v2049 = vmul.f32 %v2048, 1.442695
        %v2050 = vpow.pop %v2049
        %v2051 = vsel %vm941, %v2050, 0.0
        %2052 = vadd.xlane.f32.xlu0 %v2051
        %v2053 = vpop.xlane.xlu0 %2052
        %v2054 = vrcp.pop %v2053
        %v2055 = vmul.f32 %v2050, %v2054
        %2056 = vrot.lane.b32.xlu0 %v934, 48
        %v2057 = vpop.permute.xlu0 %2056
        %v2060 = vsel %vm941, %v2055, 0
        %2062 = vmatprep.subr.mxu0 0.0
        %2063 = vmatpush1.msra.mxu0 %v2057
        %2064 = vmatprep.subr.mxu0 0.0
        %2065 = vmatpush1.msra.mxu0 0.0
        %2066 = vmatprep.subr.mxu0 0.0
        %2067 = vmatpush1.msra.mxu0 0.0
        %2068 = vmatprep.subr.mxu0 0.0
        %2069 = vmatpush1.msra.mxu0 0.0
        %2070 = vmatprep.subr.mxu0 0.0
        %2071 = vmatpush1.msra.mxu0 0.0
        %2072 = vmatprep.subr.mxu0 0.0
        %2073 = vmatpush1.msra.mxu0 0.0
        %2074 = vmatprep.subr.mxu0 0.0
        %2075 = vmatpush1.msra.mxu0 0.0
        %2076 = vmatprep.subr.mxu0 0.0
        %2077 = vmatpush1.msra.mxu0 0.0
        %2078 = vmatprep.subr.mxu0 0.0
        %2079 = vmatpush1.msra.mxu0 0.0
        %2080 = vmatprep.subr.mxu0 0.0
        %2081 = vmatpush1.msra.mxu0 0.0
        %2082 = vmatprep.subr.mxu0 0.0
        %2083 = vmatpush1.msra.mxu0 0.0
        %2084 = vmatprep.subr.mxu0 0.0
        %2085 = vmatpush1.msra.mxu0 0.0
        %2086 = vmatprep.subr.mxu0 0.0
        %2087 = vmatpush1.msra.mxu0 0.0
        %2088 = vmatprep.subr.mxu0 0.0
        %2089 = vmatpush1.msra.mxu0 0.0
        %2090 = vmatprep.subr.mxu0 0.0
        %2091 = vmatpush1.msra.mxu0 0.0
        %2092 = vmatprep.subr.mxu0 0.0
        %2093 = vmatpush1.msra.mxu0 0.0
        %2094 = vmatprep.subr.mxu0 0.0
        %2095 = vmatpush1.msra.mxu0 0.0
        %2096 = vmatprep.subr.mxu0 0.0
        %2097 = vmatpush1.msra.mxu0 0.0
        %2098 = vmatprep.subr.mxu0 0.0
        %2099 = vmatpush1.msra.mxu0 0.0
        %2100 = vmatprep.subr.mxu0 0.0
        %2101 = vmatpush1.msra.mxu0 0.0
        %2102 = vmatprep.subr.mxu0 0.0
        %2103 = vmatpush1.msra.mxu0 0.0
        %2104 = vmatprep.subr.mxu0 0.0
        %2105 = vmatpush1.msra.mxu0 0.0
        %2106 = vmatprep.subr.mxu0 0.0
        %2107 = vmatpush1.msra.mxu0 0.0
        %2108 = vmatprep.subr.mxu0 0.0
        %2109 = vmatpush1.msra.mxu0 0.0
        %2110 = vmatprep.subr.mxu0 0.0
        %2111 = vmatpush1.msra.mxu0 0.0
        %2112 = vmatprep.subr.mxu0 0.0
        %2113 = vmatpush1.msra.mxu0 0.0
        %2114 = vmatprep.subr.mxu0 0.0
        %2115 = vmatpush1.msra.mxu0 0.0
        %2116 = vmatprep.subr.mxu0 0.0
        %2117 = vmatpush1.msra.mxu0 0.0
        %2118 = vmatprep.subr.mxu0 0.0
        %2119 = vmatpush1.msra.mxu0 0.0
        %2120 = vmatprep.subr.mxu0 0.0
        %2121 = vmatpush1.msra.mxu0 0.0
        %2122 = vmatprep.subr.mxu0 0.0
        %2123 = vmatpush1.msra.mxu0 0.0
        %2124 = vmatprep.subr.mxu0 0.0
        %2125 = vmatpush1.msra.mxu0 0.0
        %2126 = vmatprep.mubr.f32.mxu0 0.0
        %2127 = vmatmul.mubr.f32.gmra.mrb[0].mxu0 %v2060
        %v2128 = vpop.f32.mrb[0].mxu0
        %v2129 = vadd.f32 0.0, %v2128
        %v2130 = vpop.f32.mrb[0].mxu0
        %2131 = vdwg.mxu0
        %2132 = vrot.lane.b32.xlu0 %v934, 104
        %v2133 = vpop.permute.xlu0 %2132
        %2134 = vrot.lane.b32.xlu0 %v934, 72
        %v2135 = vpop.permute.xlu0 %2134
        %v2136 = vsel %vm941, %v2133, 0
        %v2138 = vsel %vm941, %v2135, 0
        %2140 = vmatprep.subr.mxu0 0.0
        %2141 = vmatpush1.xpose.msra.mxu0 %v2138
        %2142 = vmatprep.subr.mxu0 0.0
        %2143 = vmatpush1.xpose.msra.mxu0 0.0
        %2144 = vmatprep.subr.mxu0 0.0
        %2145 = vmatpush1.xpose.msra.mxu0 0.0
        %2146 = vmatprep.subr.mxu0 0.0
        %2147 = vmatpush1.xpose.msra.mxu0 0.0
        %2148 = vmatprep.subr.mxu0 0.0
        %2149 = vmatpush1.xpose.msra.mxu0 0.0
        %2150 = vmatprep.subr.mxu0 0.0
        %2151 = vmatpush1.xpose.msra.mxu0 0.0
        %2152 = vmatprep.subr.mxu0 0.0
        %2153 = vmatpush1.xpose.msra.mxu0 0.0
        %2154 = vmatprep.subr.mxu0 0.0
        %2155 = vmatpush1.xpose.msra.mxu0 0.0
        %2156 = vmatprep.subr.mxu0 0.0
        %2157 = vmatpush1.xpose.msra.mxu0 0.0
        %2158 = vmatprep.subr.mxu0 0.0
        %2159 = vmatpush1.xpose.msra.mxu0 0.0
        %2160 = vmatprep.subr.mxu0 0.0
        %2161 = vmatpush1.xpose.msra.mxu0 0.0
        %2162 = vmatprep.subr.mxu0 0.0
        %2163 = vmatpush1.xpose.msra.mxu0 0.0
        %2164 = vmatprep.subr.mxu0 0.0
        %2165 = vmatpush1.xpose.msra.mxu0 0.0
        %2166 = vmatprep.subr.mxu0 0.0
        %2167 = vmatpush1.xpose.msra.mxu0 0.0
        %2168 = vmatprep.subr.mxu0 0.0
        %2169 = vmatpush1.xpose.msra.mxu0 0.0
        %2170 = vmatprep.subr.mxu0 0.0
        %2171 = vmatpush1.xpose.msra.mxu0 0.0
        %2172 = vmatprep.subr.mxu0 0.0
        %2173 = vmatpush1.xpose.msra.mxu0 0.0
        %2174 = vmatprep.subr.mxu0 0.0
        %2175 = vmatpush1.xpose.msra.mxu0 0.0
        %2176 = vmatprep.subr.mxu0 0.0
        %2177 = vmatpush1.xpose.msra.mxu0 0.0
        %2178 = vmatprep.subr.mxu0 0.0
        %2179 = vmatpush1.xpose.msra.mxu0 0.0
        %2180 = vmatprep.subr.mxu0 0.0
        %2181 = vmatpush1.xpose.msra.mxu0 0.0
        %2182 = vmatprep.subr.mxu0 0.0
        %2183 = vmatpush1.xpose.msra.mxu0 0.0
        %2184 = vmatprep.subr.mxu0 0.0
        %2185 = vmatpush1.xpose.msra.mxu0 0.0
        %2186 = vmatprep.subr.mxu0 0.0
        %2187 = vmatpush1.xpose.msra.mxu0 0.0
        %2188 = vmatprep.subr.mxu0 0.0
        %2189 = vmatpush1.xpose.msra.mxu0 0.0
        %2190 = vmatprep.subr.mxu0 0.0
        %2191 = vmatpush1.xpose.msra.mxu0 0.0
        %2192 = vmatprep.subr.mxu0 0.0
        %2193 = vmatpush1.xpose.msra.mxu0 0.0
        %2194 = vmatprep.subr.mxu0 0.0
        %2195 = vmatpush1.xpose.msra.mxu0 0.0
        %2196 = vmatprep.subr.mxu0 0.0
        %2197 = vmatpush1.xpose.msra.mxu0 0.0
        %2198 = vmatprep.subr.mxu0 0.0
        %2199 = vmatpush1.xpose.msra.mxu0 0.0
        %2200 = vmatprep.subr.mxu0 0.0
        %2201 = vmatpush1.xpose.msra.mxu0 0.0
        %2202 = vmatprep.subr.mxu0 0.0
        %2203 = vmatpush1.xpose.msra.mxu0 0.0
        %2204 = vmatprep.mubr.f32.mxu0 0.0
        %2205 = vmatmul.mubr.f32.gmra.mrb[0].mxu0 %v2136
        %v2206 = vpop.f32.mrb[0].mxu0
        %v2207 = vadd.f32 0.0, %v2206
        %v2208 = vpop.f32.mrb[0].mxu0
        %2209 = vdwg.mxu0
        %v2210 = vmul.f32 %v2207, 0.35355338
        %v2211 = vadd.f32 %v2210, %v1709
        %v2212 = vsel %vm941, %v2211, -inf
        %2213 = vmax.xlane.f32.xlu0 %v2212
        %v2214 = vpop.xlane.xlu0 %2213
        %v2215 = vsub.f32 %v2211, %v2214
        %v2216 = vmul.f32 %v2215, 1.442695
        %v2217 = vpow.pop %v2216
        %v2218 = vsel %vm941, %v2217, 0.0
        %2219 = vadd.xlane.f32.xlu0 %v2218
        %v2220 = vpop.xlane.xlu0 %2219
        %v2221 = vrcp.pop %v2220
        %v2222 = vmul.f32 %v2217, %v2221
        %2223 = vrot.lane.b32.xlu0 %v934, 40
        %v2224 = vpop.permute.xlu0 %2223
        %v2227 = vsel %vm941, %v2222, 0
        %2229 = vmatprep.subr.mxu0 0.0
        %2230 = vmatpush1.msra.mxu0 %v2224
        %2231 = vmatprep.subr.mxu0 0.0
        %2232 = vmatpush1.msra.mxu0 0.0
        %2233 = vmatprep.subr.mxu0 0.0
        %2234 = vmatpush1.msra.mxu0 0.0
        %2235 = vmatprep.subr.mxu0 0.0
        %2236 = vmatpush1.msra.mxu0 0.0
        %2237 = vmatprep.subr.mxu0 0.0
        %2238 = vmatpush1.msra.mxu0 0.0
        %2239 = vmatprep.subr.mxu0 0.0
        %2240 = vmatpush1.msra.mxu0 0.0
        %2241 = vmatprep.subr.mxu0 0.0
        %2242 = vmatpush1.msra.mxu0 0.0
        %2243 = vmatprep.subr.mxu0 0.0
        %2244 = vmatpush1.msra.mxu0 0.0
        %2245 = vmatprep.subr.mxu0 0.0
        %2246 = vmatpush1.msra.mxu0 0.0
        %2247 = vmatprep.subr.mxu0 0.0
        %2248 = vmatpush1.msra.mxu0 0.0
        %2249 = vmatprep.subr.mxu0 0.0
        %2250 = vmatpush1.msra.mxu0 0.0
        %2251 = vmatprep.subr.mxu0 0.0
        %2252 = vmatpush1.msra.mxu0 0.0
        %2253 = vmatprep.subr.mxu0 0.0
        %2254 = vmatpush1.msra.mxu0 0.0
        %2255 = vmatprep.subr.mxu0 0.0
        %2256 = vmatpush1.msra.mxu0 0.0
        %2257 = vmatprep.subr.mxu0 0.0
        %2258 = vmatpush1.msra.mxu0 0.0
        %2259 = vmatprep.subr.mxu0 0.0
        %2260 = vmatpush1.msra.mxu0 0.0
        %2261 = vmatprep.subr.mxu0 0.0
        %2262 = vmatpush1.msra.mxu0 0.0
        %2263 = vmatprep.subr.mxu0 0.0
        %2264 = vmatpush1.msra.mxu0 0.0
        %2265 = vmatprep.subr.mxu0 0.0
        %2266 = vmatpush1.msra.mxu0 0.0
        %2267 = vmatprep.subr.mxu0 0.0
        %2268 = vmatpush1.msra.mxu0 0.0
        %2269 = vmatprep.subr.mxu0 0.0
        %2270 = vmatpush1.msra.mxu0 0.0
        %2271 = vmatprep.subr.mxu0 0.0
        %2272 = vmatpush1.msra.mxu0 0.0
        %2273 = vmatprep.subr.mxu0 0.0
        %2274 = vmatpush1.msra.mxu0 0.0
        %2275 = vmatprep.subr.mxu0 0.0
        %2276 = vmatpush1.msra.mxu0 0.0
        %2277 = vmatprep.subr.mxu0 0.0
        %2278 = vmatpush1.msra.mxu0 0.0
        %2279 = vmatprep.subr.mxu0 0.0
        %2280 = vmatpush1.msra.mxu0 0.0
        %2281 = vmatprep.subr.mxu0 0.0
        %2282 = vmatpush1.msra.mxu0 0.0
        %2283 = vmatprep.subr.mxu0 0.0
        %2284 = vmatpush1.msra.mxu0 0.0
        %2285 = vmatprep.subr.mxu0 0.0
        %2286 = vmatpush1.msra.mxu0 0.0
        %2287 = vmatprep.subr.mxu0 0.0
        %2288 = vmatpush1.msra.mxu0 0.0
        %2289 = vmatprep.subr.mxu0 0.0
        %2290 = vmatpush1.msra.mxu0 0.0
        %2291 = vmatprep.subr.mxu0 0.0
        %2292 = vmatpush1.msra.mxu0 0.0
        %2293 = vmatprep.mubr.f32.mxu0 0.0
        %2294 = vmatmul.mubr.f32.gmra.mrb[0].mxu0 %v2227
        %v2295 = vpop.f32.mrb[0].mxu0
        %v2296 = vadd.f32 0.0, %v2295
        %v2297 = vpop.f32.mrb[0].mxu0
        %2298 = vdwg.mxu0
        %2300 = vrot.lane.b32.xlu0 %v1962, 8
        %v2301 = vpop.permute.xlu0 %2300
        %2304 = vrot.lane.b32.xlu0 %v2129, 16
        %v2305 = vpop.permute.xlu0 %2304
        %2308 = vrot.lane.b32.xlu0 %v2296, 24
        %v2309 = vpop.permute.xlu0 %2308
        %v2311 = vsel %vm941, %v1795, %v2301
        %v2312 = vsel %vm1623, %v2311, %v2305
        %v2313 = vsel %vm1625, %v2312, %v2309
        %v2314 = vld [vmem:[%s756] sm:$0xff]
        %v2315 = vld [vmem:[%s756 + $0x8] sm:$0xff]
        %v2316 = vld [vmem:[%s756 + $0x10] sm:$0xff]
        %v2317 = vld [vmem:[%s756 + $0x18] sm:$0xff]
        %v2318 = vld [vmem:[%s759] sm:$0x1]
        %v2320 = vlaneseq
        %v2321 = vshrl.u32 %v2320, 7
        %v2322 = vsub.s32 0, %v2321
        %v2323 = vrot.slane %v2318, %v2322
        %v2326 = vsel %vm855, %v1626, 0
        %v2329 = vsel %vm855, %v2313, 0
        %2331 = vmatprep.subr.mxu0 0.0
        %2332 = vmatpush1.msra.mxu0 %v2314
        %2333 = vmatprep.subr.mxu0 0.0
        %2334 = vmatpush1.msra.mxu0 %v2315
        %2335 = vmatprep.subr.mxu0 0.0
        %2336 = vmatpush1.msra.mxu0 %v2316
        %2337 = vmatprep.subr.mxu0 0.0
        %2338 = vmatpush1.msra.mxu0 %v2317
        %2339 = vmatprep.subr.mxu0 0.0
        %2340 = vmatpush1.msra.mxu0 0.0
        %2341 = vmatprep.subr.mxu0 0.0
        %2342 = vmatpush1.msra.mxu0 0.0
        %2343 = vmatprep.subr.mxu0 0.0
        %2344 = vmatpush1.msra.mxu0 0.0
        %2345 = vmatprep.subr.mxu0 0.0
        %2346 = vmatpush1.msra.mxu0 0.0
        %2347 = vmatprep.subr.mxu0 0.0
        %2348 = vmatpush1.msra.mxu0 0.0
        %2349 = vmatprep.subr.mxu0 0.0
        %2350 = vmatpush1.msra.mxu0 0.0
        %2351 = vmatprep.subr.mxu0 0.0
        %2352 = vmatpush1.msra.mxu0 0.0
        %2353 = vmatprep.subr.mxu0 0.0
        %2354 = vmatpush1.msra.mxu0 0.0
        %2355 = vmatprep.subr.mxu0 0.0
        %2356 = vmatpush1.msra.mxu0 0.0
        %2357 = vmatprep.subr.mxu0 0.0
        %2358 = vmatpush1.msra.mxu0 0.0
        %2359 = vmatprep.subr.mxu0 0.0
        %2360 = vmatpush1.msra.mxu0 0.0
        %2361 = vmatprep.subr.mxu0 0.0
        %2362 = vmatpush1.msra.mxu0 0.0
        %2363 = vmatprep.subr.mxu0 0.0
        %2364 = vmatpush1.msra.mxu0 0.0
        %2365 = vmatprep.subr.mxu0 0.0
        %2366 = vmatpush1.msra.mxu0 0.0
        %2367 = vmatprep.subr.mxu0 0.0
        %2368 = vmatpush1.msra.mxu0 0.0
        %2369 = vmatprep.subr.mxu0 0.0
        %2370 = vmatpush1.msra.mxu0 0.0
        %2371 = vmatprep.subr.mxu0 0.0
        %2372 = vmatpush1.msra.mxu0 0.0
        %2373 = vmatprep.subr.mxu0 0.0
        %2374 = vmatpush1.msra.mxu0 0.0
        %2375 = vmatprep.subr.mxu0 0.0
        %2376 = vmatpush1.msra.mxu0 0.0
        %2377 = vmatprep.subr.mxu0 0.0
        %2378 = vmatpush1.msra.mxu0 0.0
        %2379 = vmatprep.subr.mxu0 0.0
        %2380 = vmatpush1.msra.mxu0 0.0
        %2381 = vmatprep.subr.mxu0 0.0
        %2382 = vmatpush1.msra.mxu0 0.0
        %2383 = vmatprep.subr.mxu0 0.0
        %2384 = vmatpush1.msra.mxu0 0.0
        %2385 = vmatprep.subr.mxu0 0.0
        %2386 = vmatpush1.msra.mxu0 0.0
        %2387 = vmatprep.subr.mxu0 0.0
        %2388 = vmatpush1.msra.mxu0 0.0
        %2389 = vmatprep.subr.mxu0 0.0
        %2390 = vmatpush1.msra.mxu0 0.0
        %2391 = vmatprep.subr.mxu0 0.0
        %2392 = vmatpush1.msra.mxu0 0.0
        %2393 = vmatprep.subr.mxu0 0.0
        %2394 = vmatpush1.msra.mxu0 0.0
        %2395 = vmatprep.mubr.f32.mxu0 0.0
        %2396 = vmatmul.mubr.f32.gmra.mrb[0].mxu0 %v2326
        %v2397 = vpop.f32.mrb[0].mxu0
        %v2398 = vadd.f32 %v2323, %v2397
        %v2399 = vpop.f32.mrb[0].mxu0
        %2400 = vmatprep.mubr.f32.mxu0 0.0
        %2401 = vmatmul.mubr.f32.gmra.mrb[0].mxu0 %v2329
        %v2402 = vpop.f32.mrb[0].mxu0
        %v2403 = vadd.f32 %v2323, %v2402
        %v2404 = vpop.f32.mrb[0].mxu0
        %2405 = vdwg.mxu0
        %v2406 = vadd.f32 %v2398, %v842
        %v2407 = vadd.f32 %v2403, %v843
        %v2408 = vld [vmem:[%s762] sm:$0x1]
        %v2409 = vld [vmem:[%s765] sm:$0x1]
        %v2410 = vsel %vm855, %v2406, 0.0
        %2411 = vadd.xlane.f32.xlu0 %v2410
        %v2412 = vpop.xlane.xlu0 %2411
        %v2413 = vsel %vm855, %v2407, 0.0
        %2414 = vadd.xlane.f32.xlu0 %v2413
        %v2415 = vpop.xlane.xlu0 %2414
        %v2416 = vrcp.pop 32.0
        %v2417 = vmul.f32 %v2412, %v2416
        %v2418 = vmul.f32 %v2415, %v2416
        %v2419 = vsub.f32 %v2406, %v2417
        %v2420 = vsub.f32 %v2407, %v2418
        %v2421 = vmul.f32 %v2419, %v2419
        %v2422 = vmul.f32 %v2420, %v2420
        %v2423 = vsel %vm855, %v2421, 0.0
        %2424 = vadd.xlane.f32.xlu0 %v2423
        %v2425 = vpop.xlane.xlu0 %2424
        %v2426 = vsel %vm855, %v2422, 0.0
        %2427 = vadd.xlane.f32.xlu0 %v2426
        %v2428 = vpop.xlane.xlu0 %2427
        %v2429 = vmul.f32 %v2425, %v2416
        %v2430 = vmul.f32 %v2428, %v2416
        %v2431 = vadd.f32 %v2429, 1e-05
        %v2432 = vadd.f32 %v2430, 1e-05
        %v2433 = vrsqrt.pop %v2431
        %v2434 = vrsqrt.pop %v2432
        %v2435 = vmul.f32 %v2419, %v2433
        %v2436 = vmul.f32 %v2420, %v2434
        %v2438 = vlaneseq
        %v2439 = vshrl.u32 %v2438, 7
        %v2440 = vsub.s32 0, %v2439
        %v2441 = vrot.slane %v2408, %v2440
        %v2443 = vmul.f32 %v2435, %v2441
        %v2444 = vmul.f32 %v2436, %v2441
        %v2446 = vlaneseq
        %v2447 = vshrl.u32 %v2446, 7
        %v2448 = vsub.s32 0, %v2447
        %v2449 = vrot.slane %v2409, %v2448
        %v2451 = vadd.f32 %v2443, %v2449
        %v2452 = vadd.f32 %v2444, %v2449
        %v2453 = vld [vmem:[%s770] sm:$0xff]
        %v2454 = vld [vmem:[%s770 + $0x8] sm:$0xff]
        %v2455 = vld [vmem:[%s770 + $0x10] sm:$0xff]
        %v2456 = vld [vmem:[%s770 + $0x18] sm:$0xff]
        %v2457 = vld [vmem:[%s773] sm:$0x1]
        %v2459 = vlaneseq
        %v2460 = vshrl.u32 %v2459, 7
        %v2461 = vsub.s32 0, %v2460
        %v2462 = vrot.slane %v2457, %v2461
        %v2465 = vsel %vm855, %v2451, 0
        %v2468 = vsel %vm855, %v2452, 0
        %2470 = vmatprep.subr.mxu0 0.0
        %2471 = vmatpush1.msra.mxu0 %v2453
        %2472 = vmatprep.subr.mxu0 0.0
        %2473 = vmatpush1.msra.mxu0 %v2454
        %2474 = vmatprep.subr.mxu0 0.0
        %2475 = vmatpush1.msra.mxu0 %v2455
        %2476 = vmatprep.subr.mxu0 0.0
        %2477 = vmatpush1.msra.mxu0 %v2456
        %2478 = vmatprep.subr.mxu0 0.0
        %2479 = vmatpush1.msra.mxu0 0.0
        %2480 = vmatprep.subr.mxu0 0.0
        %2481 = vmatpush1.msra.mxu0 0.0
        %2482 = vmatprep.subr.mxu0 0.0
        %2483 = vmatpush1.msra.mxu0 0.0
        %2484 = vmatprep.subr.mxu0 0.0
        %2485 = vmatpush1.msra.mxu0 0.0
        %2486 = vmatprep.subr.mxu0 0.0
        %2487 = vmatpush1.msra.mxu0 0.0
        %2488 = vmatprep.subr.mxu0 0.0
        %2489 = vmatpush1.msra.mxu0 0.0
        %2490 = vmatprep.subr.mxu0 0.0
        %2491 = vmatpush1.msra.mxu0 0.0
        %2492 = vmatprep.subr.mxu0 0.0
        %2493 = vmatpush1.msra.mxu0 0.0
        %2494 = vmatprep.subr.mxu0 0.0
        %2495 = vmatpush1.msra.mxu0 0.0
        %2496 = vmatprep.subr.mxu0 0.0
        %2497 = vmatpush1.msra.mxu0 0.0
        %2498 = vmatprep.subr.mxu0 0.0
        %2499 = vmatpush1.msra.mxu0 0.0
        %2500 = vmatprep.subr.mxu0 0.0
        %2501 = vmatpush1.msra.mxu0 0.0
        %2502 = vmatprep.subr.mxu0 0.0
        %2503 = vmatpush1.msra.mxu0 0.0
        %2504 = vmatprep.subr.mxu0 0.0
        %2505 = vmatpush1.msra.mxu0 0.0
        %2506 = vmatprep.subr.mxu0 0.0
        %2507 = vmatpush1.msra.mxu0 0.0
        %2508 = vmatprep.subr.mxu0 0.0
        %2509 = vmatpush1.msra.mxu0 0.0
        %2510 = vmatprep.subr.mxu0 0.0
        %2511 = vmatpush1.msra.mxu0 0.0
        %2512 = vmatprep.subr.mxu0 0.0
        %2513 = vmatpush1.msra.mxu0 0.0
        %2514 = vmatprep.subr.mxu0 0.0
        %2515 = vmatpush1.msra.mxu0 0.0
        %2516 = vmatprep.subr.mxu0 0.0
        %2517 = vmatpush1.msra.mxu0 0.0
        %2518 = vmatprep.subr.mxu0 0.0
        %2519 = vmatpush1.msra.mxu0 0.0
        %2520 = vmatprep.subr.mxu0 0.0
        %2521 = vmatpush1.msra.mxu0 0.0
        %2522 = vmatprep.subr.mxu0 0.0
        %2523 = vmatpush1.msra.mxu0 0.0
        %2524 = vmatprep.subr.mxu0 0.0
        %2525 = vmatpush1.msra.mxu0 0.0
        %2526 = vmatprep.subr.mxu0 0.0
        %2527 = vmatpush1.msra.mxu0 0.0
        %2528 = vmatprep.subr.mxu0 0.0
        %2529 = vmatpush1.msra.mxu0 0.0
        %2530 = vmatprep.subr.mxu0 0.0
        %2531 = vmatpush1.msra.mxu0 0.0
        %2532 = vmatprep.subr.mxu0 0.0
        %2533 = vmatpush1.msra.mxu0 0.0
        %2534 = vmatprep.mubr.f32.mxu0 0.0
        %2535 = vmatmul.mubr.f32.gmra.mrb[0].mxu0 %v2465
        %v2536 = vpop.f32.mrb[0].mxu0
        %v2537 = vadd.f32 %v2462, %v2536
        %v2538 = vpop.f32.mrb[0].mxu0
        %2539 = vmatprep.mubr.f32.mxu0 0.0
        %2540 = vmatmul.mubr.f32.gmra.mrb[0].mxu0 %v2468
        %v2541 = vpop.f32.mrb[0].mxu0
        %v2542 = vadd.f32 %v2462, %v2541
        %v2543 = vpop.f32.mrb[0].mxu0
        %2544 = vdwg.mxu0
        %v2545 = vmul.f32 %v2537, 0.5
        %v2546 = vmul.f32 %v2542, 0.5
        %v2547 = vmul.f32 %v2537, 0.044715
        %v2548 = vmul.f32 %v2542, 0.044715
        %v2549 = vmul.f32 %v2547, %v2537
        %v2550 = vmul.f32 %v2548, %v2542
        %v2551 = vmul.f32 %v2549, %v2537
        %v2552 = vmul.f32 %v2550, %v2542
        %v2553 = vadd.f32 %v2537, %v2551
        %v2554 = vadd.f32 %v2542, %v2552
        %v2555 = vmul.f32 %v2553, 0.7978846
        %v2556 = vmul.f32 %v2554, 0.7978846
        %v2557 = vtanh.pop %v2555
        %v2558 = vtanh.pop %v2556
        %v2559 = vadd.f32 %v2557, 1.0
        %v2560 = vadd.f32 %v2558, 1.0
        %v2561 = vmul.f32 %v2545, %v2559
        %v2562 = vmul.f32 %v2546, %v2560
        %v2563 = vld [vmem:[%s778] sm:$0xff]
        %v2564 = vld [vmem:[%s778 + $0x8] sm:$0xff]
        %v2565 = vld [vmem:[%s778 + $0x10] sm:$0xff]
        %v2566 = vld [vmem:[%s778 + $0x18] sm:$0xff]
        %v2567 = vld [vmem:[%s778 + $0x20] sm:$0xff]
        %v2568 = vld [vmem:[%s778 + $0x28] sm:$0xff]
        %v2569 = vld [vmem:[%s778 + $0x30] sm:$0xff]
        %v2570 = vld [vmem:[%s778 + $0x38] sm:$0xff]
        %v2571 = vld [vmem:[%s781] sm:$0x1]
        %v2573 = vlaneseq
        %v2574 = vshrl.u32 %v2573, 7
        %v2575 = vsub.s32 0, %v2574
        %v2576 = vrot.slane %v2571, %v2575
        %vm2578 = vcmask 523264
        %v2580 = vsel %vm2578, %v2561, 0
        %v2583 = vsel %vm2578, %v2562, 0
        %2585 = vmatprep.subr.mxu0 0.0
        %2586 = vmatpush1.msra.mxu0 %v2563
        %2587 = vmatprep.subr.mxu0 0.0
        %2588 = vmatpush1.msra.mxu0 %v2564
        %2589 = vmatprep.subr.mxu0 0.0
        %2590 = vmatpush1.msra.mxu0 %v2565
        %2591 = vmatprep.subr.mxu0 0.0
        %2592 = vmatpush1.msra.mxu0 %v2566
        %2593 = vmatprep.subr.mxu0 0.0
        %2594 = vmatpush1.msra.mxu0 %v2567
        %2595 = vmatprep.subr.mxu0 0.0
        %2596 = vmatpush1.msra.mxu0 %v2568
        %2597 = vmatprep.subr.mxu0 0.0
        %2598 = vmatpush1.msra.mxu0 %v2569
        %2599 = vmatprep.subr.mxu0 0.0
        %2600 = vmatpush1.msra.mxu0 %v2570
        %2601 = vmatprep.subr.mxu0 0.0
        %2602 = vmatpush1.msra.mxu0 0.0
        %2603 = vmatprep.subr.mxu0 0.0
        %2604 = vmatpush1.msra.mxu0 0.0
        %2605 = vmatprep.subr.mxu0 0.0
        %2606 = vmatpush1.msra.mxu0 0.0
        %2607 = vmatprep.subr.mxu0 0.0
        %2608 = vmatpush1.msra.mxu0 0.0
        %2609 = vmatprep.subr.mxu0 0.0
        %2610 = vmatpush1.msra.mxu0 0.0
        %2611 = vmatprep.subr.mxu0 0.0
        %2612 = vmatpush1.msra.mxu0 0.0
        %2613 = vmatprep.subr.mxu0 0.0
        %2614 = vmatpush1.msra.mxu0 0.0
        %2615 = vmatprep.subr.mxu0 0.0
        %2616 = vmatpush1.msra.mxu0 0.0
        %2617 = vmatprep.subr.mxu0 0.0
        %2618 = vmatpush1.msra.mxu0 0.0
        %2619 = vmatprep.subr.mxu0 0.0
        %2620 = vmatpush1.msra.mxu0 0.0
        %2621 = vmatprep.subr.mxu0 0.0
        %2622 = vmatpush1.msra.mxu0 0.0
        %2623 = vmatprep.subr.mxu0 0.0
        %2624 = vmatpush1.msra.mxu0 0.0
        %2625 = vmatprep.subr.mxu0 0.0
        %2626 = vmatpush1.msra.mxu0 0.0
        %2627 = vmatprep.subr.mxu0 0.0
        %2628 = vmatpush1.msra.mxu0 0.0
        %2629 = vmatprep.subr.mxu0 0.0
        %2630 = vmatpush1.msra.mxu0 0.0
        %2631 = vmatprep.subr.mxu0 0.0
        %2632 = vmatpush1.msra.mxu0 0.0
        %2633 = vmatprep.subr.mxu0 0.0
        %2634 = vmatpush1.msra.mxu0 0.0
        %2635 = vmatprep.subr.mxu0 0.0
        %2636 = vmatpush1.msra.mxu0 0.0
        %2637 = vmatprep.subr.mxu0 0.0
        %2638 = vmatpush1.msra.mxu0 0.0
        %2639 = vmatprep.subr.mxu0 0.0
        %2640 = vmatpush1.msra.mxu0 0.0
        %2641 = vmatprep.subr.mxu0 0.0
        %2642 = vmatpush1.msra.mxu0 0.0
        %2643 = vmatprep.subr.mxu0 0.0
        %2644 = vmatpush1.msra.mxu0 0.0
        %2645 = vmatprep.subr.mxu0 0.0
        %2646 = vmatpush1.msra.mxu0 0.0
        %2647 = vmatprep.subr.mxu0 0.0
        %2648 = vmatpush1.msra.mxu0 0.0
        %2649 = vmatprep.mubr.f32.mxu0 0.0
        %2650 = vmatmul.mubr.f32.gmra.mrb[0].mxu0 %v2580
        %v2651 = vpop.f32.mrb[0].mxu0
        %v2652 = vadd.f32 %v2576, %v2651
        %v2653 = vpop.f32.mrb[0].mxu0
        %2654 = vmatprep.mubr.f32.mxu0 0.0
        %2655 = vmatmul.mubr.f32.gmra.mrb[0].mxu0 %v2583
        %v2656 = vpop.f32.mrb[0].mxu0
        %v2657 = vadd.f32 %v2576, %v2656
        %v2658 = vpop.f32.mrb[0].mxu0
        %2659 = vdwg.mxu0
        %v2660 = vadd.f32 %v2652, %v2451
        %v2661 = vadd.f32 %v2657, %v2452
        %v2662 = vld [vmem:[%s784] sm:$0x1]
        %v2663 = vld [vmem:[%s787] sm:$0x1]
        %v2664 = vsel %vm855, %v2660, 0.0
        %2665 = vadd.xlane.f32.xlu0 %v2664
        %v2666 = vpop.xlane.xlu0 %2665
        %v2667 = vsel %vm855, %v2661, 0.0
        %2668 = vadd.xlane.f32.xlu0 %v2667
        %v2669 = vpop.xlane.xlu0 %2668
        %v2670 = vmul.f32 %v2666, %v2416
        %v2671 = vmul.f32 %v2669, %v2416
        %v2672 = vsub.f32 %v2660, %v2670
        %v2673 = vsub.f32 %v2661, %v2671
        %v2674 = vmul.f32 %v2672, %v2672
        %v2675 = vmul.f32 %v2673, %v2673
        %v2676 = vsel %vm855, %v2674, 0.0
        %2677 = vadd.xlane.f32.xlu0 %v2676
        %v2678 = vpop.xlane.xlu0 %2677
        %v2679 = vsel %vm855, %v2675, 0.0
        %2680 = vadd.xlane.f32.xlu0 %v2679
        %v2681 = vpop.xlane.xlu0 %2680
        %v2682 = vmul.f32 %v2678, %v2416
        %v2683 = vmul.f32 %v2681, %v2416
        %v2684 = vadd.f32 %v2682, 1e-05
        %v2685 = vadd.f32 %v2683, 1e-05
        %v2686 = vrsqrt.pop %v2684
        %v2687 = vrsqrt.pop %v2685
        %v2688 = vmul.f32 %v2672, %v2686
        %v2689 = vmul.f32 %v2673, %v2687
        %v2691 = vlaneseq
        %v2692 = vshrl.u32 %v2691, 7
        %v2693 = vsub.s32 0, %v2692
        %v2694 = vrot.slane %v2662, %v2693
        %v2696 = vmul.f32 %v2688, %v2694
        %v2697 = vmul.f32 %v2689, %v2694
        %v2699 = vlaneseq
        %v2700 = vshrl.u32 %v2699, 7
        %v2701 = vsub.s32 0, %v2700
        %v2702 = vrot.slane %v2663, %v2701
        %v2704 = vadd.f32 %v2696, %v2702
        %v2705 = vadd.f32 %v2697, %v2702
        %2706 = vst.msk [vmem:[#allocation2] sm:$0xff] %vm855, %v2704
        %2707 = vst.msk [vmem:[#allocation2 + $0x8] sm:$0xff] %vm855, %v2705
        %p2708 = scmp.eq.s32.totalorder %s35, 1
        // Predicated region
        $region101: #{lmcls_forward.1} parent=95 // pred_check
          %p2709 = pneg %p2708
        $region102: #{lmcls_forward.1} parent=95 // pred_check_branch
          %2711 = sbr.rel (%p2709) target = $region104
        $region103: #{lmcls_forward.1} parent=95 // pred_region
          %v2713 = vrot.slane %v2705, 7
          %vm2715 = vcmask 1040384
          %v2716 = vsel %vm2715, %v2704, %v2713
          %v2717 = vld [vmem:[%s16] sm:$0xff]
          %v2718 = vld [vmem:[%s16 + $0x8] sm:$0xff]
          %v2719 = vld [vmem:[%s16 + $0x10] sm:$0xff]
          %v2720 = vld [vmem:[%s16 + $0x18] sm:$0xff]
          %v2721 = vld [vmem:[#allocation3] sm:$0x1]
          %v2723 = vlaneseq
          %v2724 = vshrl.u32 %v2723, 7
          %v2725 = vsub.s32 0, %v2724
          %v2726 = vrot.slane %v2721, %v2725
          %v2729 = vsel %vm855, %v2716, 0
          %2731 = vmatprep.subr.mxu0 0.0
          %2732 = vmatpush1.msra.mxu0 %v2717
          %2733 = vmatprep.subr.mxu0 0.0
          %2734 = vmatpush1.msra.mxu0 %v2718
          %2735 = vmatprep.subr.mxu0 0.0
          %2736 = vmatpush1.msra.mxu0 %v2719
          %2737 = vmatprep.subr.mxu0 0.0
          %2738 = vmatpush1.msra.mxu0 %v2720
          %2739 = vmatprep.subr.mxu0 0.0
          %2740 = vmatpush1.msra.mxu0 0.0
          %2741 = vmatprep.subr.mxu0 0.0
          %2742 = vmatpush1.msra.mxu0 0.0
          %2743 = vmatprep.subr.mxu0 0.0
          %2744 = vmatpush1.msra.mxu0 0.0
          %2745 = vmatprep.subr.mxu0 0.0
          %2746 = vmatpush1.msra.mxu0 0.0
          %2747 = vmatprep.subr.mxu0 0.0
          %2748 = vmatpush1.msra.mxu0 0.0
          %2749 = vmatprep.subr.mxu0 0.0
          %2750 = vmatpush1.msra.mxu0 0.0
          %2751 = vmatprep.subr.mxu0 0.0
          %2752 = vmatpush1.msra.mxu0 0.0
          %2753 = vmatprep.subr.mxu0 0.0
          %2754 = vmatpush1.msra.mxu0 0.0
          %2755 = vmatprep.subr.mxu0 0.0
          %2756 = vmatpush1.msra.mxu0 0.0
          %2757 = vmatprep.subr.mxu0 0.0
          %2758 = vmatpush1.msra.mxu0 0.0
          %2759 = vmatprep.subr.mxu0 0.0
          %2760 = vmatpush1.msra.mxu0 0.0
          %2761 = vmatprep.subr.mxu0 0.0
          %2762 = vmatpush1.msra.mxu0 0.0
          %2763 = vmatprep.subr.mxu0 0.0
          %2764 = vmatpush1.msra.mxu0 0.0
          %2765 = vmatprep.subr.mxu0 0.0
          %2766 = vmatpush1.msra.mxu0 0.0
          %2767 = vmatprep.subr.mxu0 0.0
          %2768 = vmatpush1.msra.mxu0 0.0
          %2769 = vmatprep.subr.mxu0 0.0
          %2770 = vmatpush1.msra.mxu0 0.0
          %2771 = vmatprep.subr.mxu0 0.0
          %2772 = vmatpush1.msra.mxu0 0.0
          %2773 = vmatprep.subr.mxu0 0.0
          %2774 = vmatpush1.msra.mxu0 0.0
          %2775 = vmatprep.subr.mxu0 0.0
          %2776 = vmatpush1.msra.mxu0 0.0
          %2777 = vmatprep.subr.mxu0 0.0
          %2778 = vmatpush1.msra.mxu0 0.0
          %2779 = vmatprep.subr.mxu0 0.0
          %2780 = vmatpush1.msra.mxu0 0.0
          %2781 = vmatprep.subr.mxu0 0.0
          %2782 = vmatpush1.msra.mxu0 0.0
          %2783 = vmatprep.subr.mxu0 0.0
          %2784 = vmatpush1.msra.mxu0 0.0
          %2785 = vmatprep.subr.mxu0 0.0
          %2786 = vmatpush1.msra.mxu0 0.0
          %2787 = vmatprep.subr.mxu0 0.0
          %2788 = vmatpush1.msra.mxu0 0.0
          %2789 = vmatprep.subr.mxu0 0.0
          %2790 = vmatpush1.msra.mxu0 0.0
          %2791 = vmatprep.subr.mxu0 0.0
          %2792 = vmatpush1.msra.mxu0 0.0
          %2793 = vmatprep.subr.mxu0 0.0
          %2794 = vmatpush1.msra.mxu0 0.0
          %2795 = vmatprep.mubr.f32.mxu0 0.0
          %2796 = vmatmul.mubr.f32.gmra.mrb[0].mxu0 %v2729
          %v2797 = vpop.f32.mrb[0].mxu0
          %v2798 = vadd.f32 %v2726, %v2797
          %v2799 = vpop.f32.mrb[0].mxu0
          %2800 = vdwg.mxu0
          %v2801 = vld [vmem:[%s18] sm:$0x3]
          %v2802 = vmax.f32 %v2798, 0.0
          %v2803 = vmul.f32 %v2798, %v2801
          %v2804 = vsub.f32 %v2802, %v2803
          %v2805 = vand.u32 2147483647, %v2798
          %v2806 = vsub.f32 0.0, %v2805
          %v2807 = vmul.f32 %v2806, 1.442695
          %v2808 = vpow.pop %v2807
          %v2809 = vadd.f32 %v2808, 1.0
          %v2810 = vlog2.pop %v2809
          %v2811 = vmul.f32 %v2810, 0.6931472
          %v2812 = vadd.f32 %v2804, %v2811
          %vm2813 = vcmask 1024
          %2814 = vst.msk [vmem:[%s19] sm:$0x3] %vm2813, %v2798
          %v2815 = vsel %vm2813, %v2812, 0.0
          %2816 = vadd.xlane.f32.xlu0 %v2815
          %v2817 = vpop.xlane.xlu0 %2816
          %v2818 = vrot.slane %v2817, 4
          %v2819 = vadd.f32 %v2817, %v2818
          %v2820 = vrot.slane %v2819, 2
          %v2821 = vadd.f32 %v2819, %v2820
          %v2822 = vrot.slane %v2821, 1
          %v2823 = vadd.f32 %v2821, %v2822
          %s2824 = vtos %v2823
          %v2825 = vstv %s2824
          %v2826 = vrcp.pop 2.0
          %v2827 = vmul.f32 %v2825, %v2826
          %vm2828 = vcmask 0
          %2829 = vst.msk [vmem:[#allocation4] sm:$0x1] %vm2828, %v2827
        $region104: #{lmcls_forward.1} parent=95 // pred_fallthru
          _
        // Predicated region
        $region105: #{lmcls_forward.1} parent=95 // pred_check
          %p2830 = pneg %p507
        $region106: #{lmcls_forward.1} parent=95 // pred_check_branch
          %2832 = sbr.rel (%p2830) target = $region108
        $region107: #{lmcls_forward.1} parent=95 // pred_region
          _
        $region108: #{lmcls_forward.1} parent=95 // pred_fallthru
          _
        // Predicated region
        $region109: #{lmcls_forward.1} parent=95 // pred_check
          %p2833 = pneg %p528
        $region110: #{lmcls_forward.1} parent=95 // pred_check_branch
          %2835 = sbr.rel (%p2833) target = $region112
        $region111: #{lmcls_forward.1} parent=95 // pred_region
          %s2837 = ssub.s32 16, 16
          %2838 = vsyncadd [#allocation5], %s2837
          %s2840 = sshll.u32 [#allocation4], 4
          %s2841 = int_to_ptr.vmem [resolvable:$true] %s2840
          %2843 = dma.vmem_to_hbm [thread:$0]  %s2841, 16, %s20, [#allocation5]
        $region112: #{lmcls_forward.1} parent=95 // pred_fallthru
          _
        // Predicated region
        $region113: #{lmcls_forward.1} parent=95 // pred_check
          %p2844 = pneg %p507
        $region114: #{lmcls_forward.1} parent=95 // pred_check_branch
          %2846 = sbr.rel (%p2844) target = $region116
        $region115: #{lmcls_forward.1} parent=95 // pred_region
          _
        $region116: #{lmcls_forward.1} parent=95 // pred_fallthru
          _
        // Predicated region
        $region117: #{lmcls_forward.1} parent=95 // pred_check
          %p2847 = pneg %p528
        $region118: #{lmcls_forward.1} parent=95 // pred_check_branch
          %2849 = sbr.rel (%p2847) target = $region120
        $region119: #{lmcls_forward.1} parent=95 // pred_region
          %2850 = dma.done [#allocation5], 16
        $region120: #{lmcls_forward.1} parent=95 // pred_fallthru
          _
      $region96: #{lmcls_forward.1} parent=5 // pred_fallthru
        _
      %p2851 = scmp.le.s32.totalorder 2, %s30
      // Predicated region
      $region121: #{lmcls_forward.1} parent=5 // pred_check
        %p2852 = pneg %p2851
      $region122: #{lmcls_forward.1} parent=5 // pred_check_branch
        %2854 = sbr.rel (%p2852) target = $region124
      $region123: #{lmcls_forward.1} parent=5 // pred_region
        %s2855 = ssub.s32 %s30, 2
      $region124: #{lmcls_forward.1} parent=5 // pred_fallthru
        _
    $region6: #{lmcls_forward.1} parent=1 // loop_footer
      %s34 = sadd.s32 1, %s30
    $region7: #{lmcls_forward.1} parent=1 // loop_footer_branch
      %29 = sbr.rel target = $region3
    $region8: #{lmcls_forward.1} parent=1 // loop_exit
      _
    %2856 = vsyncpa [#allocation5], 1
    %s2857 = scalar_lea.sflag [#allocation5], 1
    %2858 = vsyncpa %s2857, 1

</llo_original>
